<compile_context>
chip_gen: v7x
topology: tpu7x:2x2x1
jax: 0.10.0
libtpu: 0.0.40
codegen_flags: <defaults>
</compile_context>

<pallas_src>
import jax
import jax.numpy as jnp
from jax.experimental import pallas as pl
from jax.experimental.pallas import tpu as pltpu


# ----------------------------------------------------------------------------
# Pallas kernels
# ----------------------------------------------------------------------------
def _conv_relu_pool_kernel(x_ref, w_ref, b_ref, o_ref):
    """Fused 3x3 conv (4 pooling-phase matmuls) + bias + ReLU + 2x2 maxpool.

    x_ref : (4, TM, pK)  bf16  stacked phase im2col rows, `pack` positions/row
    w_ref : (pK, 128)    bf16  block-diagonal conv weight (pack copies of (K,C))
    b_ref : (1, 128)     f32   bias tiled `pack` times
    o_ref : (TM, 128)    bf16  pooled activation, lane-dense
    """
    w = w_ref[...]
    acc = jnp.dot(x_ref[0], w, preferred_element_type=jnp.float32)
    acc = jnp.maximum(acc, jnp.dot(x_ref[1], w, preferred_element_type=jnp.float32))
    acc = jnp.maximum(acc, jnp.dot(x_ref[2], w, preferred_element_type=jnp.float32))
    acc = jnp.maximum(acc, jnp.dot(x_ref[3], w, preferred_element_type=jnp.float32))
    # bias shared by all phases; ReLU(max(.)+b) == max over phases of ReLU(.+b)
    o_ref[...] = jnp.maximum(acc + b_ref[...], 0.0).astype(o_ref.dtype)


def _fc_fused_kernel(x_ref, w1_ref, b1_ref, w2_ref, b2_ref, o_ref):
    """Fused Linear(3136,128) + ReLU + Linear(128,10 -> padded 128)."""
    h = jnp.dot(x_ref[...], w1_ref[...], preferred_element_type=jnp.float32)
    h = jnp.maximum(h + b1_ref[...], 0.0)
    out = jnp.dot(h.astype(w2_ref.dtype), w2_ref[...],
                  preferred_element_type=jnp.float32)
    o_ref[...] = (out + b2_ref[...]).astype(o_ref.dtype)


_COMPILER_PARAMS = pltpu.CompilerParams(
    dimension_semantics=("parallel",),          # shard row tiles across TCs (v7x)
    vmem_limit_bytes=48 * 1024 * 1024,          # < v7x's 64 MiB; > v5e's 16 MiB default
)


def _pick_tile_m(m, tile_m, align=8):
    """Row tile: <= tile_m, multiple of `align`, and small enough that the grid
    has >= 2 steps (so both v7x TensorCores get work) whenever m allows it."""
    if m <= 2 * align:
        return m                                   # single tile == full dim (valid block)
    half = -(-m // 2)                              # ceil(m / 2)
    half = -(-half // align) * align               # round up to multiple of align
    return max(align, min(tile_m, m, half))


def conv_relu_pool_pallas(x_phases, w_big, b_big, *, tile_m=1024):
    """x_phases: (4, Mp, pK) bf16; w_big: (pK, 128) bf16; b_big: (1, 128) f32
    -> (Mp, 128) bf16 pooled activation (pack positions per row)."""
    _, mp, pk = x_phases.shape
    co = w_big.shape[1]
    tm = _pick_tile_m(mp, tile_m)
    flops = 2 * 4 * mp * pk * co
    bytes_accessed = (4 * mp * pk + pk * co + mp * co) * 2 + co * 4
    return pl.pallas_call(
        _conv_relu_pool_kernel,
        out_shape=jax.ShapeDtypeStruct((mp, co), jnp.bfloat16),
        grid=(pl.cdiv(mp, tm),),
        in_specs=[pl.BlockSpec((4, tm, pk), lambda i: (0, i, 0)),
                  pl.BlockSpec((pk, co), lambda i: (0, 0)),
                  pl.BlockSpec((1, co), lambda i: (0, 0))],
        out_specs=pl.BlockSpec((tm, co), lambda i: (i, 0)),
        compiler_params=_COMPILER_PARAMS,
        cost_estimate=pl.CostEstimate(flops=flops, transcendentals=0,
                                      bytes_accessed=bytes_accessed),
    )(x_phases, w_big, b_big)


def fc_fused_pallas(x, w1, b1, w2p, b2p, *, tile_m=512):
    """x: (M, 3136) bf16 -> (M, 128) f32 (cols >= 10 are zero-padded logits)."""
    m, k = x.shape
    _, h = w1.shape
    _, no = w2p.shape
    tm = _pick_tile_m(m, tile_m)
    flops = 2 * m * (k * h + h * no)
    bytes_accessed = (m * k + k * h + h * no) * 2 + m * no * 4 + (h + no) * 4
    return pl.pallas_call(
        _fc_fused_kernel,
        out_shape=jax.ShapeDtypeStruct((m, no), jnp.float32),
        grid=(pl.cdiv(m, tm),),
        in_specs=[pl.BlockSpec((tm, k), lambda i: (i, 0)),
                  pl.BlockSpec((k, h), lambda i: (0, 0)),
                  pl.BlockSpec((1, h), lambda i: (0, 0)),
                  pl.BlockSpec((h, no), lambda i: (0, 0)),
                  pl.BlockSpec((1, no), lambda i: (0, 0))],
        out_specs=pl.BlockSpec((tm, no), lambda i: (i, 0)),
        compiler_params=_COMPILER_PARAMS,
        cost_estimate=pl.CostEstimate(flops=flops, transcendentals=0,
                                      bytes_accessed=bytes_accessed),
    )(x, w1, b1, w2p, b2p)


# ----------------------------------------------------------------------------
# Host-side glue: pooling-phase im2col + one-time parameter layout conversion
# ----------------------------------------------------------------------------
def _im2col_pool_phases_packed(x_nhwc, pack):
    """3x3 / stride-1 / pad-1 conv patches, grouped by 2x2 pooling phase and
    packed `pack` pooled positions per row.

    Returns ((4, ceil(M/pack), pack*9*C) bf16, M) with M = N*Ho*Wo; within a
    phase, packed row r holds positions pack*r .. pack*r+pack-1 (row-major
    (n, i, j) order), each with features ordered (dy, dx, cin).
    """
    # TODO(synk): patch formation stays in XLA (in-kernel halo-tile tap
    # formation needs stride-2 sublane slices that Mosaic does not lower
    # cleanly for these shapes); the packing/stacking below is layout-free.
    n, h, w, c = x_nhwc.shape
    ho, wo = h // 2, w // 2
    m = n * ho * wo
    mp = -(-m // pack)
    xp = jnp.pad(x_nhwc, ((0, 0), (1, 1), (1, 1), (0, 0)))
    phases = []
    for ph in range(2):
        for pw in range(2):
            taps = [xp[:, ph + dy:ph + dy + 2 * ho:2, pw + dx:pw + dx + 2 * wo:2, :]
                    for dy in range(3) for dx in range(3)]
            mat = jnp.concatenate(taps, axis=-1).reshape(m, 9 * c)
            if mp * pack != m:
                mat = jnp.pad(mat, ((0, mp * pack - m), (0, 0)))
            phases.append(mat.reshape(mp, pack * 9 * c))
    return jnp.stack(phases, axis=0), m


def _conv_w_to_matrix(w_oihw):
    """(Cout, Cin, 3, 3) -> (9*Cin, Cout), rows ordered (dy, dx, cin)."""
    co, ci, kh, kw = w_oihw.shape
    return jnp.transpose(w_oihw, (2, 3, 1, 0)).reshape(kh * kw * ci, co)


def _block_diag(w, n):
    """(K, C) -> (n*K, n*C) block-diagonal with n copies of w."""
    k, c = w.shape
    out = jnp.zeros((n * k, n * c), w.dtype)
    for p in range(n):
        out = out.at[p * k:(p + 1) * k, p * c:(p + 1) * c].set(w)
    return out


def prepare_params(params):
    """One-time conversion of PyTorch-layout params to kernel-friendly layout."""
    c1 = _conv_w_to_matrix(params["conv1_w"])                  # (9, 32)
    c2 = _conv_w_to_matrix(params["conv2_w"])                  # (288, 64)
    # fc1: torch (128, 3136) with column index c*49 + h*7 + w (NCHW flatten).
    # Our activation is NHWC-flat ((h*7+w)*64 + c), so permute rows accordingly.
    fc1 = params["fc1_w"].reshape(128, 64, 7, 7).transpose(2, 3, 1, 0)
    fc1 = fc1.reshape(64 * 7 * 7, 128)
    # fc2: (10, 128) -> (128, 10), zero-pad output dim to 128 lanes.
    fc2p = jnp.zeros((128, 128), jnp.float32).at[:, :10].set(params["fc2_w"].T)
    b2p = jnp.zeros((128,), jnp.float32).at[:10].set(params["fc2_b"])
    return {
        # pack = 128 // Cout pooled positions per output row (4 for conv1, 2 for conv2)
        "c1w": _block_diag(c1, 4).astype(jnp.bfloat16),        # (36, 128)
        "c1b": jnp.tile(params["conv1_b"], 4).reshape(1, 128).astype(jnp.float32),
        "c2w": _block_diag(c2, 2).astype(jnp.bfloat16),        # (576, 128)
        "c2b": jnp.tile(params["conv2_b"], 2).reshape(1, 128).astype(jnp.float32),
        "fc1w": fc1.astype(jnp.bfloat16),
        "fc1b": params["fc1_b"].reshape(1, 128).astype(jnp.float32),
        "fc2w": fc2p.astype(jnp.bfloat16),
        "fc2b": b2p.reshape(1, 128).astype(jnp.float32),
    }


def init_params(key):
    """PyTorch-default-style init: U(-1/sqrt(fan_in), 1/sqrt(fan_in))."""
    ks = jax.random.split(key, 8)

    def uniform(k, shape, fan_in):
        bound = 1.0 / float(fan_in) ** 0.5
        return jax.random.uniform(k, shape, jnp.float32, -bound, bound)

    return {
        "conv1_w": uniform(ks[0], (32, 1, 3, 3), 9),
        "conv1_b": uniform(ks[1], (32,), 9),
        "conv2_w": uniform(ks[2], (64, 32, 3, 3), 32 * 9),
        "conv2_b": uniform(ks[3], (64,), 32 * 9),
        "fc1_w": uniform(ks[4], (128, 64 * 7 * 7), 64 * 7 * 7),
        "fc1_b": uniform(ks[5], (128,), 64 * 7 * 7),
        "fc2_w": uniform(ks[6], (10, 128), 128),
        "fc2_b": uniform(ks[7], (10,), 128),
    }


# ----------------------------------------------------------------------------
# Forward pass
# ----------------------------------------------------------------------------
def cnn_forward(x_nchw, kp):
    N = x_nchw.shape[0]
    x = jnp.transpose(x_nchw, (0, 2, 3, 1)).astype(jnp.bfloat16)   # NHWC (N,28,28,1)

    # conv1 + ReLU + maxpool2: 4 positions x 32 ch per 128-lane output row.
    xph1, _ = _im2col_pool_phases_packed(x, pack=4)        # (4, N*49, 36) bf16
    h1 = conv_relu_pool_pallas(xph1, kp["c1w"], kp["c1b"])  # (N*49, 128) bf16
    h1 = h1.reshape(N, 14, 14, 32)                          # row-major == NHWC

    # conv2 + ReLU + maxpool2: 2 positions x 64 ch per 128-lane output row.
    xph2, m2 = _im2col_pool_phases_packed(h1, pack=2)       # (4, ceil(N*49/2), 576)
    h2 = conv_relu_pool_pallas(xph2, kp["c2w"], kp["c2b"])  # (rows, 128) bf16
    # NHWC flatten per image; PyTorch's NCHW view(-1, 3136) perm is folded into fc1w.
    h2 = h2.reshape(-1)[: m2 * 64].reshape(N, 64 * 7 * 7)

    # fc1 + ReLU + fc2 (fused; 128-lane padded output)
    out = fc_fused_pallas(h2, kp["fc1w"], kp["fc1b"], kp["fc2w"], kp["fc2b"])
    return out[:, :10]                                      # (N, 10) f32


# ----------------------------------------------------------------------------
# Pure-JAX f32 reference (PyTorch semantics) for a tolerance check
# ----------------------------------------------------------------------------
def cnn_reference(x_nchw, params):
    dn = ("NCHW", "OIHW", "NCHW")
    x = jax.lax.conv_general_dilated(x_nchw, params["conv1_w"], (1, 1),
                                     ((1, 1), (1, 1)), dimension_numbers=dn)
    x = jnp.maximum(x + params["conv1_b"][None, :, None, None], 0.0)
    x = jax.lax.reduce_window(x, -jnp.inf, jax.lax.max,
                              (1, 1, 2, 2), (1, 1, 2, 2), "VALID")
    x = jax.lax.conv_general_dilated(x, params["conv2_w"], (1, 1),
                                     ((1, 1), (1, 1)), dimension_numbers=dn)
    x = jnp.maximum(x + params["conv2_b"][None, :, None, None], 0.0)
    x = jax.lax.reduce_window(x, -jnp.inf, jax.lax.max,
                              (1, 1, 2, 2), (1, 1, 2, 2), "VALID")
    x = x.reshape(x.shape[0], -1)                            # NCHW flatten
    x = jnp.maximum(x @ params["fc1_w"].T + params["fc1_b"], 0.0)
    return x @ params["fc2_w"].T + params["fc2_b"]


if __name__ == "__main__":
    key = jax.random.PRNGKey(0)
    k_param, k_x = jax.random.split(key)
    params = init_params(k_param)
    kparams = prepare_params(params)        # one-time layout / dtype conversion

    # 28x28 input is required by Linear(64*7*7, 128); small batch = 2.
    x = jax.random.normal(k_x, (2, 1, 28, 28), jnp.float32)

    fwd = jax.jit(cnn_forward)
    logits = fwd(x, kparams)
    jax.block_until_ready(logits)
    assert logits.shape == (2, 10)
    assert bool(jnp.all(jnp.isfinite(logits)))

    # bf16 kernel path vs f32 reference (loose tolerance for bf16 drift).
    ref = jax.jit(cnn_reference)(x, params)
    err = float(jnp.max(jnp.abs(logits - ref)))
    assert err < 5e-2, f"mismatch vs f32 reference: max |diff| = {err}"
    print("KERNEL_OK")
</pallas_src>

<mosaic_0001>
module attributes {stable_mosaic.version = 11 : i64} {
  func.func @_conv_relu_pool_kernel(%arg0: i32, %arg1: memref<4x56x36xbf16, #tpu.memory_space<vmem>>, %arg2: memref<36x128xbf16, #tpu.memory_space<vmem>>, %arg3: memref<1x128xf32, #tpu.memory_space<vmem>>, %arg4: memref<56x128xbf16, #tpu.memory_space<vmem>>) attributes {dimension_semantics = [#tpu.dimension_semantics<parallel>], iteration_bounds = array<i64: 2>, scalar_prefetch = 0 : i64, scratch_operands = 0 : i64, tpu.core_type = #tpu.core_type<tc>, window_params = [{transform_indices = @transform_0, window_bounds = array<i64: 4, 56, 36>}, {pipeline_mode = #tpu.pipeline_mode<synchronous>, transform_indices = @transform_1, window_bounds = array<i64: 36, 128>}, {pipeline_mode = #tpu.pipeline_mode<synchronous>, transform_indices = @transform_2, window_bounds = array<i64: 1, 128>}, {transform_indices = @transform_3, window_bounds = array<i64: 56, 128>}]} {
    %c0 = arith.constant 0 : index
    %c0_0 = arith.constant 0 : index
    %0 = vector.load %arg2[%c0, %c0_0] : memref<36x128xbf16, #tpu.memory_space<vmem>>, vector<36x128xbf16>
    %c0_1 = arith.constant 0 : index
    %c0_2 = arith.constant 0 : index
    %c0_3 = arith.constant 0 : index
    %1 = vector.load %arg1[%c0_1, %c0_2, %c0_3] : memref<4x56x36xbf16, #tpu.memory_space<vmem>>, vector<1x56x36xbf16>
    %2 = vector.shape_cast %1 : vector<1x56x36xbf16> to vector<56x36xbf16>
    %cst = arith.constant dense<0.000000e+00> : vector<56x128xf32>
    %3 = tpu.matmul %2, %0, %cst {dimension_numbers = #tpu.dot_dimension_numbers<[1], [0], [0], [1], [0, 0, 1, 1], [], []>} : vector<56x36xbf16>, vector<36x128xbf16>, vector<56x128xf32> -> vector<56x128xf32>
    %c1 = arith.constant 1 : index
    %c0_4 = arith.constant 0 : index
    %c0_5 = arith.constant 0 : index
    %4 = vector.load %arg1[%c1, %c0_4, %c0_5] : memref<4x56x36xbf16, #tpu.memory_space<vmem>>, vector<1x56x36xbf16>
    %5 = vector.shape_cast %4 : vector<1x56x36xbf16> to vector<56x36xbf16>
    %cst_6 = arith.constant dense<0.000000e+00> : vector<56x128xf32>
    %6 = tpu.matmul %5, %0, %cst_6 {dimension_numbers = #tpu.dot_dimension_numbers<[1], [0], [0], [1], [0, 0, 1, 1], [], []>} : vector<56x36xbf16>, vector<36x128xbf16>, vector<56x128xf32> -> vector<56x128xf32>
    %7 = arith.maximumf %3, %6 : vector<56x128xf32>
    %c2 = arith.constant 2 : index
    %c0_7 = arith.constant 0 : index
    %c0_8 = arith.constant 0 : index
    %8 = vector.load %arg1[%c2, %c0_7, %c0_8] : memref<4x56x36xbf16, #tpu.memory_space<vmem>>, vector<1x56x36xbf16>
    %9 = vector.shape_cast %8 : vector<1x56x36xbf16> to vector<56x36xbf16>
    %cst_9 = arith.constant dense<0.000000e+00> : vector<56x128xf32>
    %10 = tpu.matmul %9, %0, %cst_9 {dimension_numbers = #tpu.dot_dimension_numbers<[1], [0], [0], [1], [0, 0, 1, 1], [], []>} : vector<56x36xbf16>, vector<36x128xbf16>, vector<56x128xf32> -> vector<56x128xf32>
    %11 = arith.maximumf %7, %10 : vector<56x128xf32>
    %c3 = arith.constant 3 : index
    %c0_10 = arith.constant 0 : index
    %c0_11 = arith.constant 0 : index
    %12 = vector.load %arg1[%c3, %c0_10, %c0_11] : memref<4x56x36xbf16, #tpu.memory_space<vmem>>, vector<1x56x36xbf16>
    %13 = vector.shape_cast %12 : vector<1x56x36xbf16> to vector<56x36xbf16>
    %cst_12 = arith.constant dense<0.000000e+00> : vector<56x128xf32>
    %14 = tpu.matmul %13, %0, %cst_12 {dimension_numbers = #tpu.dot_dimension_numbers<[1], [0], [0], [1], [0, 0, 1, 1], [], []>} : vector<56x36xbf16>, vector<36x128xbf16>, vector<56x128xf32> -> vector<56x128xf32>
    %15 = arith.maximumf %11, %14 : vector<56x128xf32>
    %c0_13 = arith.constant 0 : index
    %c0_14 = arith.constant 0 : index
    %16 = vector.load %arg3[%c0_13, %c0_14] : memref<1x128xf32, #tpu.memory_space<vmem>>, vector<1x128xf32>
    %17 = vector.broadcast %16 : vector<1x128xf32> to vector<56x128xf32>
    %18 = arith.addf %15, %17 : vector<56x128xf32>
    %cst_15 = arith.constant 0.000000e+00 : f32
    %19 = vector.broadcast %cst_15 : f32 to vector<56x128xf32>
    %20 = arith.maximumf %18, %19 : vector<56x128xf32>
    %21 = arith.truncf %20 : vector<56x128xf32> to vector<56x128xbf16>
    %c0_16 = arith.constant 0 : index
    %c0_17 = arith.constant 0 : index
    %22 = vector.load %arg4[%c0_16, %c0_17] : memref<56x128xbf16, #tpu.memory_space<vmem>>, vector<56x128xbf16>
    tpu.vector_store %arg4[%c0_16, %c0_17], %21 {strides = array<i32>} : memref<56x128xbf16, #tpu.memory_space<vmem>>, vector<56x128xbf16>,
    return
  }
  func.func @transform_0(%arg0: i32) -> (i32, i32, i32) {
    %c0_i32 = arith.constant 0 : i32
    %c0_i32_0 = arith.constant 0 : i32
    %c0_i32_1 = arith.constant 0 : i32
    return %c0_i32, %arg0, %c0_i32_0 : i32, i32, i32
  }
  func.func @transform_1(%arg0: i32) -> (i32, i32) {
    %c0_i32 = arith.constant 0 : i32
    %c0_i32_0 = arith.constant 0 : i32
    %c0_i32_1 = arith.constant 0 : i32
    return %c0_i32, %c0_i32_0 : i32, i32
  }
  func.func @transform_2(%arg0: i32) -> (i32, i32) {
    %c0_i32 = arith.constant 0 : i32
    %c0_i32_0 = arith.constant 0 : i32
    %c0_i32_1 = arith.constant 0 : i32
    return %c0_i32, %c0_i32_0 : i32, i32
  }
  func.func @transform_3(%arg0: i32) -> (i32, i32) {
    %c0_i32 = arith.constant 0 : i32
    %c0_i32_0 = arith.constant 0 : i32
    return %arg0, %c0_i32 : i32, i32
  }
}

module attributes {stable_mosaic.version = 11 : i64} {
  func.func @_conv_relu_pool_kernel(%arg0: i32, %arg1: memref<4x32x576xbf16, #tpu.memory_space<vmem>>, %arg2: memref<576x128xbf16, #tpu.memory_space<vmem>>, %arg3: memref<1x128xf32, #tpu.memory_space<vmem>>, %arg4: memref<32x128xbf16, #tpu.memory_space<vmem>>) attributes {dimension_semantics = [#tpu.dimension_semantics<parallel>], iteration_bounds = array<i64: 2>, scalar_prefetch = 0 : i64, scratch_operands = 0 : i64, tpu.core_type = #tpu.core_type<tc>, window_params = [{transform_indices = @transform_0, window_bounds = array<i64: 4, 32, 576>}, {pipeline_mode = #tpu.pipeline_mode<synchronous>, transform_indices = @transform_1, window_bounds = array<i64: 576, 128>}, {pipeline_mode = #tpu.pipeline_mode<synchronous>, transform_indices = @transform_2, window_bounds = array<i64: 1, 128>}, {transform_indices = @transform_3, window_bounds = array<i64: 32, 128>}]} {
    %c0 = arith.constant 0 : index
    %c0_0 = arith.constant 0 : index
    %0 = vector.load %arg2[%c0, %c0_0] : memref<576x128xbf16, #tpu.memory_space<vmem>>, vector<576x128xbf16>
    %c0_1 = arith.constant 0 : index
    %c0_2 = arith.constant 0 : index
    %c0_3 = arith.constant 0 : index
    %1 = vector.load %arg1[%c0_1, %c0_2, %c0_3] : memref<4x32x576xbf16, #tpu.memory_space<vmem>>, vector<1x32x576xbf16>
    %2 = vector.shape_cast %1 : vector<1x32x576xbf16> to vector<32x576xbf16>
    %cst = arith.constant dense<0.000000e+00> : vector<32x128xf32>
    %3 = tpu.matmul %2, %0, %cst {dimension_numbers = #tpu.dot_dimension_numbers<[1], [0], [0], [1], [0, 0, 1, 1], [], []>} : vector<32x576xbf16>, vector<576x128xbf16>, vector<32x128xf32> -> vector<32x128xf32>
    %c1 = arith.constant 1 : index
    %c0_4 = arith.constant 0 : index
    %c0_5 = arith.constant 0 : index
    %4 = vector.load %arg1[%c1, %c0_4, %c0_5] : memref<4x32x576xbf16, #tpu.memory_space<vmem>>, vector<1x32x576xbf16>
    %5 = vector.shape_cast %4 : vector<1x32x576xbf16> to vector<32x576xbf16>
    %cst_6 = arith.constant dense<0.000000e+00> : vector<32x128xf32>
    %6 = tpu.matmul %5, %0, %cst_6 {dimension_numbers = #tpu.dot_dimension_numbers<[1], [0], [0], [1], [0, 0, 1, 1], [], []>} : vector<32x576xbf16>, vector<576x128xbf16>, vector<32x128xf32> -> vector<32x128xf32>
    %7 = arith.maximumf %3, %6 : vector<32x128xf32>
    %c2 = arith.constant 2 : index
    %c0_7 = arith.constant 0 : index
    %c0_8 = arith.constant 0 : index
    %8 = vector.load %arg1[%c2, %c0_7, %c0_8] : memref<4x32x576xbf16, #tpu.memory_space<vmem>>, vector<1x32x576xbf16>
    %9 = vector.shape_cast %8 : vector<1x32x576xbf16> to vector<32x576xbf16>
    %cst_9 = arith.constant dense<0.000000e+00> : vector<32x128xf32>
    %10 = tpu.matmul %9, %0, %cst_9 {dimension_numbers = #tpu.dot_dimension_numbers<[1], [0], [0], [1], [0, 0, 1, 1], [], []>} : vector<32x576xbf16>, vector<576x128xbf16>, vector<32x128xf32> -> vector<32x128xf32>
    %11 = arith.maximumf %7, %10 : vector<32x128xf32>
    %c3 = arith.constant 3 : index
    %c0_10 = arith.constant 0 : index
    %c0_11 = arith.constant 0 : index
    %12 = vector.load %arg1[%c3, %c0_10, %c0_11] : memref<4x32x576xbf16, #tpu.memory_space<vmem>>, vector<1x32x576xbf16>
    %13 = vector.shape_cast %12 : vector<1x32x576xbf16> to vector<32x576xbf16>
    %cst_12 = arith.constant dense<0.000000e+00> : vector<32x128xf32>
    %14 = tpu.matmul %13, %0, %cst_12 {dimension_numbers = #tpu.dot_dimension_numbers<[1], [0], [0], [1], [0, 0, 1, 1], [], []>} : vector<32x576xbf16>, vector<576x128xbf16>, vector<32x128xf32> -> vector<32x128xf32>
    %15 = arith.maximumf %11, %14 : vector<32x128xf32>
    %c0_13 = arith.constant 0 : index
    %c0_14 = arith.constant 0 : index
    %16 = vector.load %arg3[%c0_13, %c0_14] : memref<1x128xf32, #tpu.memory_space<vmem>>, vector<1x128xf32>
    %17 = vector.broadcast %16 : vector<1x128xf32> to vector<32x128xf32>
    %18 = arith.addf %15, %17 : vector<32x128xf32>
    %cst_15 = arith.constant 0.000000e+00 : f32
    %19 = vector.broadcast %cst_15 : f32 to vector<32x128xf32>
    %20 = arith.maximumf %18, %19 : vector<32x128xf32>
    %21 = arith.truncf %20 : vector<32x128xf32> to vector<32x128xbf16>
    %c0_16 = arith.constant 0 : index
    %c0_17 = arith.constant 0 : index
    %22 = vector.load %arg4[%c0_16, %c0_17] : memref<32x128xbf16, #tpu.memory_space<vmem>>, vector<32x128xbf16>
    tpu.vector_store %arg4[%c0_16, %c0_17], %21 {strides = array<i32>} : memref<32x128xbf16, #tpu.memory_space<vmem>>, vector<32x128xbf16>,
    return
  }
  func.func @transform_0(%arg0: i32) -> (i32, i32, i32) {
    %c0_i32 = arith.constant 0 : i32
    %c0_i32_0 = arith.constant 0 : i32
    %c0_i32_1 = arith.constant 0 : i32
    return %c0_i32, %arg0, %c0_i32_0 : i32, i32, i32
  }
  func.func @transform_1(%arg0: i32) -> (i32, i32) {
    %c0_i32 = arith.constant 0 : i32
    %c0_i32_0 = arith.constant 0 : i32
    %c0_i32_1 = arith.constant 0 : i32
    return %c0_i32, %c0_i32_0 : i32, i32
  }
  func.func @transform_2(%arg0: i32) -> (i32, i32) {
    %c0_i32 = arith.constant 0 : i32
    %c0_i32_0 = arith.constant 0 : i32
    %c0_i32_1 = arith.constant 0 : i32
    return %c0_i32, %c0_i32_0 : i32, i32
  }
  func.func @transform_3(%arg0: i32) -> (i32, i32) {
    %c0_i32 = arith.constant 0 : i32
    %c0_i32_0 = arith.constant 0 : i32
    return %arg0, %c0_i32 : i32, i32
  }
}

module attributes {stable_mosaic.version = 11 : i64} {
  func.func @_fc_fused_kernel(%arg0: i32, %arg1: memref<2x3136xbf16, #tpu.memory_space<vmem>>, %arg2: memref<3136x128xbf16, #tpu.memory_space<vmem>>, %arg3: memref<1x128xf32, #tpu.memory_space<vmem>>, %arg4: memref<128x128xbf16, #tpu.memory_space<vmem>>, %arg5: memref<1x128xf32, #tpu.memory_space<vmem>>, %arg6: memref<2x128xf32, #tpu.memory_space<vmem>>) attributes {dimension_semantics = [#tpu.dimension_semantics<parallel>], iteration_bounds = array<i64: 1>, scalar_prefetch = 0 : i64, scratch_operands = 0 : i64, tpu.core_type = #tpu.core_type<tc>, window_params = [{transform_indices = @transform_0, window_bounds = array<i64: 2, 3136>}, {pipeline_mode = #tpu.pipeline_mode<synchronous>, transform_indices = @transform_1, window_bounds = array<i64: 3136, 128>}, {pipeline_mode = #tpu.pipeline_mode<synchronous>, transform_indices = @transform_2, window_bounds = array<i64: 1, 128>}, {pipeline_mode = #tpu.pipeline_mode<synchronous>, transform_indices = @transform_3, window_bounds = array<i64: 128, 128>}, {pipeline_mode = #tpu.pipeline_mode<synchronous>, transform_indices = @transform_4, window_bounds = array<i64: 1, 128>}, {transform_indices = @transform_5, window_bounds = array<i64: 2, 128>}]} {
    %c0 = arith.constant 0 : index
    %c0_0 = arith.constant 0 : index
    %0 = vector.load %arg1[%c0, %c0_0] : memref<2x3136xbf16, #tpu.memory_space<vmem>>, vector<2x3136xbf16>
    %c0_1 = arith.constant 0 : index
    %c0_2 = arith.constant 0 : index
    %1 = vector.load %arg2[%c0_1, %c0_2] : memref<3136x128xbf16, #tpu.memory_space<vmem>>, vector<3136x128xbf16>
    %cst = arith.constant dense<0.000000e+00> : vector<2x128xf32>
    %2 = tpu.matmul %0, %1, %cst {dimension_numbers = #tpu.dot_dimension_numbers<[1], [0], [0], [1], [0, 0, 1, 1], [], []>} : vector<2x3136xbf16>, vector<3136x128xbf16>, vector<2x128xf32> -> vector<2x128xf32>
    %c0_3 = arith.constant 0 : index
    %c0_4 = arith.constant 0 : index
    %3 = vector.load %arg3[%c0_3, %c0_4] : memref<1x128xf32, #tpu.memory_space<vmem>>, vector<1x128xf32>
    %4 = vector.broadcast %3 : vector<1x128xf32> to vector<2x128xf32>
    %5 = arith.addf %2, %4 : vector<2x128xf32>
    %cst_5 = arith.constant 0.000000e+00 : f32
    %6 = vector.broadcast %cst_5 : f32 to vector<2x128xf32>
    %7 = arith.maximumf %5, %6 : vector<2x128xf32>
    %8 = arith.truncf %7 : vector<2x128xf32> to vector<2x128xbf16>
    %c0_6 = arith.constant 0 : index
    %c0_7 = arith.constant 0 : index
    %9 = vector.load %arg4[%c0_6, %c0_7] : memref<128x128xbf16, #tpu.memory_space<vmem>>, vector<128x128xbf16>
    %cst_8 = arith.constant dense<0.000000e+00> : vector<2x128xf32>
    %10 = tpu.matmul %8, %9, %cst_8 {dimension_numbers = #tpu.dot_dimension_numbers<[1], [0], [0], [1], [0, 0, 1, 1], [], []>} : vector<2x128xbf16>, vector<128x128xbf16>, vector<2x128xf32> -> vector<2x128xf32>
    %c0_9 = arith.constant 0 : index
    %c0_10 = arith.constant 0 : index
    %11 = vector.load %arg5[%c0_9, %c0_10] : memref<1x128xf32, #tpu.memory_space<vmem>>, vector<1x128xf32>
    %12 = vector.broadcast %11 : vector<1x128xf32> to vector<2x128xf32>
    %13 = arith.addf %10, %12 : vector<2x128xf32>
    %c0_11 = arith.constant 0 : index
    %c0_12 = arith.constant 0 : index
    %14 = vector.load %arg6[%c0_11, %c0_12] : memref<2x128xf32, #tpu.memory_space<vmem>>, vector<2x128xf32>
    tpu.vector_store %arg6[%c0_11, %c0_12], %13 {strides = array<i32>} : memref<2x128xf32, #tpu.memory_space<vmem>>, vector<2x128xf32>,
    return
  }
  func.func @transform_0(%arg0: i32) -> (i32, i32) {
    %c0_i32 = arith.constant 0 : i32
    %c0_i32_0 = arith.constant 0 : i32
    return %arg0, %c0_i32 : i32, i32
  }
  func.func @transform_1(%arg0: i32) -> (i32, i32) {
    %c0_i32 = arith.constant 0 : i32
    %c0_i32_0 = arith.constant 0 : i32
    %c0_i32_1 = arith.constant 0 : i32
    return %c0_i32, %c0_i32_0 : i32, i32
  }
  func.func @transform_2(%arg0: i32) -> (i32, i32) {
    %c0_i32 = arith.constant 0 : i32
    %c0_i32_0 = arith.constant 0 : i32
    %c0_i32_1 = arith.constant 0 : i32
    return %c0_i32, %c0_i32_0 : i32, i32
  }
  func.func @transform_3(%arg0: i32) -> (i32, i32) {
    %c0_i32 = arith.constant 0 : i32
    %c0_i32_0 = arith.constant 0 : i32
    %c0_i32_1 = arith.constant 0 : i32
    return %c0_i32, %c0_i32_0 : i32, i32
  }
  func.func @transform_4(%arg0: i32) -> (i32, i32) {
    %c0_i32 = arith.constant 0 : i32
    %c0_i32_0 = arith.constant 0 : i32
    %c0_i32_1 = arith.constant 0 : i32
    return %c0_i32, %c0_i32_0 : i32, i32
  }
  func.func @transform_5(%arg0: i32) -> (i32, i32) {
    %c0_i32 = arith.constant 0 : i32
    %c0_i32_0 = arith.constant 0 : i32
    return %arg0, %c0_i32 : i32, i32
  }
}

</mosaic_0001>

<llo_original>
// kernel: cnn_forward.3
$region0: #{cnn_forward.3}
  #allocation0 [shape = 'u32[]', space=smem, size = 0x4, offset = 0x4, fixed_abs, tag = 'smem constant byte address 0x4 - core index']
  #allocation1 [shape = 'u32[144,128]{1,0:T(1,128)}', space=vmem, size = 0x12000, scoped, tag = 'internal scratch']
  %s0 = inlined_call_operand.vmem [shape: bf16[4,98,36], index: 0, kind: input, shape index: {}]
  %s1 = inlined_call_operand.vmem [shape: bf16[36,128], index: 1, kind: input, shape index: {}]
  %s2 = inlined_call_operand.vmem [shape: f32[1,128], index: 2, kind: input, shape index: {}]
  %s3 = inlined_call_operand.vmem [shape: bf16[98,128], index: 3, kind: output, shape index: {}]
  %s4 = sld [smem:[#allocation0]]
  $region151: #{cnn_forward.3} parent=0
    _
  %s6 = ssub.s32 1, %s4
  %s7 = scalar_select 0, %s6, %s4
  $region1: #{cnn_forward.3} parent=0
    #allocation2 [shape = 'u8[114688]{0}', space=vmem, size = 0x1c000, scoped, tag = 'input window, operand 0']
    #allocation3 [shape = 'u8[28672]{0}', space=vmem, size = 0x7000, scoped, tag = 'output window, operand 0']
    loop: start=0, step=1, limit=4
    $region2: #{cnn_forward.3} parent=1 // loop_pre_header
      _
    $region3: #{cnn_forward.3} parent=1 // loop_header
      %s9 = sphi 0, %s13
      %p10 = scmp.ge.s32.totalorder %s9, 4
      %s19 = sphi 0, %s21
      %s22 = sphi 0, %s19
      %s23 = sphi 0, %s22
      %s39 = sphi 0, %s23
      %s43 = sphi 0, %s43
      %s45 = sphi 0, %s43
      %s46 = sphi 0, %s45
      %s60 = sphi 0, %s46
      %s64 = sphi 0, %s64
      %s66 = sphi 0, %s64
      %s67 = sphi 0, %s66
      %s81 = sphi 0, %s67
      %s87 = sphi 0, %s89
      %s90 = sphi 0, %s87
      %s91 = sphi 0, %s90
      %s107 = sphi 0, %s91
    $region4: #{cnn_forward.3} parent=1 // loop_header_branch
      %12 = sbr.rel (%p10) target = $region8
    $region5: #{cnn_forward.3} parent=1 // loop_body
      %s14 = ssub.s32 %s9, 1
      %s15 = ssub.s32 %s9, 2
      %s16 = sadd.s32 %s9, 1
      %s17 = ssub.s32 %s9, %s16
      %p18 = scmp.eq.s32.totalorder %s17, 0
      %s20 = sadd.s32 %s19, 1
      %s21 = scalar_select %p18, %s19, %s20
      %p24 = pneg %p18
      %p25 = scmp.eq.s32.totalorder %s9, 1
      %p26 = por %p24, %p25
      %p27 = scmp.ne.s32.totalorder %s19, %s22
      %p28 = scmp.eq.s32.totalorder %s9, 0
      %p29 = por %p27, %p28
      %p30 = scmp.ne.s32.totalorder %s19, %s22
      %p31 = scmp.eq.s32.totalorder %s14, 1
      %p32 = por %p30, %p31
      %p33 = scmp.ne.s32.totalorder %s22, %s23
      %p34 = scmp.eq.s32.totalorder %s14, 0
      %p35 = por %p33, %p34
      %p36 = scmp.ne.s32.totalorder %s22, %s23
      %p37 = scmp.eq.s32.totalorder %s15, 1
      %p38 = por %p36, %p37
      %p40 = scmp.ne.s32.totalorder %s23, %s39
      %p41 = scmp.eq.s32.totalorder %s15, 0
      %p42 = por %p40, %p41
      %s44 = sadd.s32 %s43, 1
      %p47 = scmp.eq.s32.totalorder %s9, 1
      %p48 = scmp.ne.s32.totalorder %s43, %s45
      %p49 = scmp.eq.s32.totalorder %s9, 0
      %p50 = por %p48, %p49
      %p51 = scmp.ne.s32.totalorder %s43, %s45
      %p52 = scmp.eq.s32.totalorder %s14, 1
      %p53 = por %p51, %p52
      %p54 = scmp.ne.s32.totalorder %s45, %s46
      %p55 = scmp.eq.s32.totalorder %s14, 0
      %p56 = por %p54, %p55
      %p57 = scmp.ne.s32.totalorder %s45, %s46
      %p58 = scmp.eq.s32.totalorder %s15, 1
      %p59 = por %p57, %p58
      %p61 = scmp.ne.s32.totalorder %s46, %s60
      %p62 = scmp.eq.s32.totalorder %s15, 0
      %p63 = por %p61, %p62
      %s65 = sadd.s32 %s64, 1
      %p68 = scmp.eq.s32.totalorder %s9, 1
      %p69 = scmp.ne.s32.totalorder %s64, %s66
      %p70 = scmp.eq.s32.totalorder %s9, 0
      %p71 = por %p69, %p70
      %p72 = scmp.ne.s32.totalorder %s64, %s66
      %p73 = scmp.eq.s32.totalorder %s14, 1
      %p74 = por %p72, %p73
      %p75 = scmp.ne.s32.totalorder %s66, %s67
      %p76 = scmp.eq.s32.totalorder %s14, 0
      %p77 = por %p75, %p76
      %p78 = scmp.ne.s32.totalorder %s66, %s67
      %p79 = scmp.eq.s32.totalorder %s15, 1
      %p80 = por %p78, %p79
      %p82 = scmp.ne.s32.totalorder %s67, %s81
      %p83 = scmp.eq.s32.totalorder %s15, 0
      %p84 = por %p82, %p83
      %s85 = ssub.s32 %s9, %s16
      %p86 = scmp.eq.s32.totalorder %s85, 0
      %s88 = sadd.s32 %s87, 1
      %s89 = scalar_select %p86, %s87, %s88
      %p92 = pneg %p86
      %p93 = scmp.eq.s32.totalorder %s9, 1
      %p94 = por %p92, %p93
      %p95 = scmp.ne.s32.totalorder %s87, %s90
      %p96 = scmp.eq.s32.totalorder %s9, 0
      %p97 = por %p95, %p96
      %p98 = scmp.ne.s32.totalorder %s87, %s90
      %p99 = scmp.eq.s32.totalorder %s14, 1
      %p100 = por %p98, %p99
      %p101 = scmp.ne.s32.totalorder %s90, %s91
      %p102 = scmp.eq.s32.totalorder %s14, 0
      %p103 = por %p101, %p102
      %p104 = scmp.ne.s32.totalorder %s90, %s91
      %p105 = scmp.eq.s32.totalorder %s15, 1
      %p106 = por %p104, %p105
      %p108 = scmp.ne.s32.totalorder %s91, %s107
      %p109 = scmp.eq.s32.totalorder %s15, 0
      %p110 = por %p108, %p109
      %p111 = scmp.le.s32.totalorder 1, %s9
      %p112 = scmp.lt.s32.totalorder %s9, 3
      %p113 = pnand %p111, %p112
      %p114 = pneg %p113
      // Predicated region
      $region9: #{cnn_forward.3} parent=5 // pred_check
        _
      $region10: #{cnn_forward.3} parent=5 // pred_check_branch
        %116 = sbr.rel (%p113) target = $region12
      $region11: #{cnn_forward.3} parent=5 // pred_region
        %s117 = ssub.s32 %s9, 1
        // Predicated region
        $region13: #{cnn_forward.3} parent=11 // pred_check
          %p118 = pneg %p56
        $region14: #{cnn_forward.3} parent=11 // pred_check_branch
          %120 = sbr.rel (%p118) target = $region16
        $region15: #{cnn_forward.3} parent=11 // pred_region
          _
        $region16: #{cnn_forward.3} parent=11 // pred_fallthru
          _
        // Predicated region
        $region17: #{cnn_forward.3} parent=11 // pred_check
          %p121 = pneg %p77
        $region18: #{cnn_forward.3} parent=11 // pred_check_branch
          %123 = sbr.rel (%p121) target = $region20
        $region19: #{cnn_forward.3} parent=11 // pred_region
          _
        $region20: #{cnn_forward.3} parent=11 // pred_fallthru
          _
      $region12: #{cnn_forward.3} parent=5 // pred_fallthru
        _
      %p124 = scmp.lt.s32.totalorder %s9, 2
      // Predicated region
      $region21: #{cnn_forward.3} parent=5 // pred_check
        %p125 = pneg %p124
      $region22: #{cnn_forward.3} parent=5 // pred_check_branch
        %127 = sbr.rel (%p125) target = $region24
      $region23: #{cnn_forward.3} parent=5 // pred_region
        // Predicated region
        $region25: #{cnn_forward.3} parent=23 // pred_check
          %p128 = pneg %p29
        $region26: #{cnn_forward.3} parent=23 // pred_check_branch
          %130 = sbr.rel (%p128) target = $region28
        $region27: #{cnn_forward.3} parent=23 // pred_region
          %s131 = sand.u32 %s19, 1
          %s132 = sand.u32 %s19, 1
          %s133 = smul.addr %s132, 112
          %s134 = scalar_lea.vmem [#allocation2], %s133
          %s135 = smul.u32 7, %s9
          %s136 = ssub.s32 13, %s135
          %p137 = scmp.lt.s32.totalorder %s136, 7
          %s138 = scalar_select %p137, %s136, 7
          %s139 = smul.u32 256, %s138
          %p140 = scmp.ne.s32.totalorder 0, %s139
          %s141 = smul.addr %s135, 4
          %s142 = scalar_lea.vmem %s0, %s141
          // Predicated region
          $region29: #{cnn_forward.3} parent=27 // pred_check
            %p143 = pneg %p140
          $region30: #{cnn_forward.3} parent=27 // pred_check_branch
            %145 = sbr.rel (%p143) target = $region32
          $region31: #{cnn_forward.3} parent=27 // pred_region
            // Predicated region
            $region33: #{cnn_forward.3} parent=31 // pred_check
              _
            $region34: #{cnn_forward.3} parent=31 // pred_check_branch
              %147 = sbr.rel target = $region36
            $region35: #{cnn_forward.3} parent=31 // pred_region
              // Predicated region
              $region55: #{cnn_forward.3} parent=35 // pred_check
                _
              $region56: #{cnn_forward.3} parent=35 // pred_check_branch
                %257 = sbr.rel (0) target = $region58
              $region57: #{cnn_forward.3} parent=35 // pred_region
                %s258 = sdiv.u32.pop %s138, 7
                %s259 = srem.u32.pop %s138, 7
                // While loop
                $region59: #{cnn_forward.3} parent=57 // loop_pre_header
                  _
                $region60: #{cnn_forward.3} parent=57 // loop_header
                  %s261 = sphi 0, %s263
                  %p262 = scmp.ge.s32.totalorder %s261, %s258
                  %s266 = sphi 0, %s271
                  %s267 = sphi %s142, %s274
                  %s268 = sphi %s134, %s275
                $region61: #{cnn_forward.3} parent=57 // loop_header_branch
                  %265 = sbr.rel (%p262) target = $region65
                $region62: #{cnn_forward.3} parent=57 // loop_body
                  %s269 = sadd.s32 1, %s266
                  %p270 = scmp.ge.s32.totalorder %s269, %s258
                  %s271 = scalar_select %p270, 0, %s269
                  %s272 = smul.u32 %s271, 28
                  %s273 = smul.u32 %s271, 28
                  %s274 = scalar_lea.vmem %s142, %s272
                  %s275 = scalar_lea.vmem %s134, %s273 [#allocation2]
                $region63: #{cnn_forward.3} parent=57 // loop_footer
                  %s263 = sadd.s32 %s261, 1
                $region64: #{cnn_forward.3} parent=57 // loop_footer_branch
                  %260 = sbr.rel target = $region60
                $region65: #{cnn_forward.3} parent=57 // loop_exit
                  _
                %s276 = sdiv.u32.pop %s138, 7
                %s277 = srem.u32.pop %s138, 7
                %s278 = smul.u32 %s276, 7
                %s279 = smul.u32 4, %s278
                %s280 = scalar_lea.vmem %s142, %s279
                %s281 = smul.u32 4, %s278
                %s282 = scalar_lea.vmem %s134, %s281 [#allocation2]
                // While loop
                $region66: #{cnn_forward.3} parent=57 // loop_pre_header
                  _
                $region67: #{cnn_forward.3} parent=57 // loop_header
                  %s284 = sphi 0, %s286
                  %p285 = scmp.ge.s32.totalorder %s284, %s277
                  %s289 = sphi 0, %s294
                  %s290 = sphi %s280, %s297
                  %s291 = sphi %s282, %s298
                $region68: #{cnn_forward.3} parent=57 // loop_header_branch
                  %288 = sbr.rel (%p285) target = $region72
                $region69: #{cnn_forward.3} parent=57 // loop_body
                  %s292 = sadd.s32 1, %s289
                  %p293 = scmp.ge.s32.totalorder %s292, %s277
                  %s294 = scalar_select %p293, 0, %s292
                  %s295 = smul.u32 %s294, 4
                  %s296 = smul.u32 %s294, 4
                  %s297 = scalar_lea.vmem %s280, %s295
                  %s298 = scalar_lea.vmem %s282, %s296 [#allocation2]
                $region70: #{cnn_forward.3} parent=57 // loop_footer
                  %s286 = sadd.s32 %s284, 1
                $region71: #{cnn_forward.3} parent=57 // loop_footer_branch
                  %283 = sbr.rel target = $region67
                $region72: #{cnn_forward.3} parent=57 // loop_exit
                  _
                %s300 = sdiv.u32.pop %s138, 7
                %s301 = srem.u32.pop %s138, 7
                // While loop
                $region73: #{cnn_forward.3} parent=57 // loop_pre_header
                  _
                $region74: #{cnn_forward.3} parent=57 // loop_header
                  %s303 = sphi 0, %s305
                  %p304 = scmp.ge.s32.totalorder %s303, %s300
                  %s308 = sphi 0, %s369
                  %s309 = sphi %s142, %s372
                  %s310 = sphi %s134, %s373
                $region75: #{cnn_forward.3} parent=57 // loop_header_branch
                  %307 = sbr.rel (%p304) target = $region79
                $region76: #{cnn_forward.3} parent=57 // loop_body
                  %v311 = vld [vmem:[%s309] sm:$0xf]
                  %312 = vst [vmem:[%s310] sm:$0xf] %v311
                  %v313 = vld [vmem:[%s309 + $0x4] sm:$0xf]
                  %314 = vst [vmem:[%s310 + $0x4] sm:$0xf] %v313
                  %v315 = vld [vmem:[%s309 + $0x8] sm:$0xf]
                  %316 = vst [vmem:[%s310 + $0x8] sm:$0xf] %v315
                  %v317 = vld [vmem:[%s309 + $0xc] sm:$0xf]
                  %318 = vst [vmem:[%s310 + $0xc] sm:$0xf] %v317
                  %v319 = vld [vmem:[%s309 + $0x10] sm:$0xf]
                  %320 = vst [vmem:[%s310 + $0x10] sm:$0xf] %v319
                  %v321 = vld [vmem:[%s309 + $0x14] sm:$0xf]
                  %322 = vst [vmem:[%s310 + $0x14] sm:$0xf] %v321
                  %v323 = vld [vmem:[%s309 + $0x18] sm:$0xf]
                  %324 = vst [vmem:[%s310 + $0x18] sm:$0xf] %v323
                  %v325 = vld [vmem:[%s309 + $0x34] sm:$0xf]
                  %326 = vst [vmem:[%s310 + $0x1c] sm:$0xf] %v325
                  %v327 = vld [vmem:[%s309 + $0x38] sm:$0xf]
                  %328 = vst [vmem:[%s310 + $0x20] sm:$0xf] %v327
                  %v329 = vld [vmem:[%s309 + $0x3c] sm:$0xf]
                  %330 = vst [vmem:[%s310 + $0x24] sm:$0xf] %v329
                  %v331 = vld [vmem:[%s309 + $0x40] sm:$0xf]
                  %332 = vst [vmem:[%s310 + $0x28] sm:$0xf] %v331
                  %v333 = vld [vmem:[%s309 + $0x44] sm:$0xf]
                  %334 = vst [vmem:[%s310 + $0x2c] sm:$0xf] %v333
                  %v335 = vld [vmem:[%s309 + $0x48] sm:$0xf]
                  %336 = vst [vmem:[%s310 + $0x30] sm:$0xf] %v335
                  %v337 = vld [vmem:[%s309 + $0x4c] sm:$0xf]
                  %338 = vst [vmem:[%s310 + $0x34] sm:$0xf] %v337
                  %v339 = vld [vmem:[%s309 + $0x68] sm:$0xf]
                  %340 = vst [vmem:[%s310 + $0x38] sm:$0xf] %v339
                  %v341 = vld [vmem:[%s309 + $0x6c] sm:$0xf]
                  %342 = vst [vmem:[%s310 + $0x3c] sm:$0xf] %v341
                  %v343 = vld [vmem:[%s309 + $0x70] sm:$0xf]
                  %344 = vst [vmem:[%s310 + $0x40] sm:$0xf] %v343
                  %v345 = vld [vmem:[%s309 + $0x74] sm:$0xf]
                  %346 = vst [vmem:[%s310 + $0x44] sm:$0xf] %v345
                  %v347 = vld [vmem:[%s309 + $0x78] sm:$0xf]
                  %348 = vst [vmem:[%s310 + $0x48] sm:$0xf] %v347
                  %v349 = vld [vmem:[%s309 + $0x7c] sm:$0xf]
                  %350 = vst [vmem:[%s310 + $0x4c] sm:$0xf] %v349
                  %v351 = vld [vmem:[%s309 + $0x80] sm:$0xf]
                  %352 = vst [vmem:[%s310 + $0x50] sm:$0xf] %v351
                  %v353 = vld [vmem:[%s309 + $0x9c] sm:$0xf]
                  %354 = vst [vmem:[%s310 + $0x54] sm:$0xf] %v353
                  %v355 = vld [vmem:[%s309 + $0xa0] sm:$0xf]
                  %356 = vst [vmem:[%s310 + $0x58] sm:$0xf] %v355
                  %v357 = vld [vmem:[%s309 + $0xa4] sm:$0xf]
                  %358 = vst [vmem:[%s310 + $0x5c] sm:$0xf] %v357
                  %v359 = vld [vmem:[%s309 + $0xa8] sm:$0xf]
                  %360 = vst [vmem:[%s310 + $0x60] sm:$0xf] %v359
                  %v361 = vld [vmem:[%s309 + $0xac] sm:$0xf]
                  %362 = vst [vmem:[%s310 + $0x64] sm:$0xf] %v361
                  %v363 = vld [vmem:[%s309 + $0xb0] sm:$0xf]
                  %364 = vst [vmem:[%s310 + $0x68] sm:$0xf] %v363
                  %v365 = vld [vmem:[%s309 + $0xb4] sm:$0xf]
                  %366 = vst [vmem:[%s310 + $0x6c] sm:$0xf] %v365
                  %s367 = sadd.s32 1, %s308
                  %p368 = scmp.ge.s32.totalorder %s367, %s300
                  %s369 = scalar_select %p368, 0, %s367
                  %s370 = smul.u32 %s369, 28
                  %s371 = smul.u32 %s369, 28
                  %s372 = scalar_lea.vmem %s142, %s370
                  %s373 = scalar_lea.vmem %s134, %s371 [#allocation2]
                $region77: #{cnn_forward.3} parent=57 // loop_footer
                  %s305 = sadd.s32 %s303, 1
                $region78: #{cnn_forward.3} parent=57 // loop_footer_branch
                  %302 = sbr.rel target = $region74
                $region79: #{cnn_forward.3} parent=57 // loop_exit
                  _
                %s374 = sdiv.u32.pop %s138, 7
                %s375 = srem.u32.pop %s138, 7
                %s376 = smul.u32 %s374, 7
                %s377 = smul.u32 4, %s376
                %s378 = scalar_lea.vmem %s142, %s377
                %s379 = smul.u32 4, %s376
                %s380 = scalar_lea.vmem %s134, %s379 [#allocation2]
                // While loop
                $region80: #{cnn_forward.3} parent=57 // loop_pre_header
                  _
                $region81: #{cnn_forward.3} parent=57 // loop_header
                  %s382 = sphi 0, %s384
                  %p383 = scmp.ge.s32.totalorder %s382, %s375
                  %s387 = sphi 0, %s400
                  %s388 = sphi %s378, %s403
                  %s389 = sphi %s380, %s404
                $region82: #{cnn_forward.3} parent=57 // loop_header_branch
                  %386 = sbr.rel (%p383) target = $region86
                $region83: #{cnn_forward.3} parent=57 // loop_body
                  %v390 = vld [vmem:[%s388] sm:$0xf]
                  %391 = vst [vmem:[%s389] sm:$0xf] %v390
                  %v392 = vld [vmem:[%s388 + $0x34] sm:$0xf]
                  %393 = vst [vmem:[%s389 + $0x1c] sm:$0xf] %v392
                  %v394 = vld [vmem:[%s388 + $0x68] sm:$0xf]
                  %395 = vst [vmem:[%s389 + $0x38] sm:$0xf] %v394
                  %v396 = vld [vmem:[%s388 + $0x9c] sm:$0xf]
                  %397 = vst [vmem:[%s389 + $0x54] sm:$0xf] %v396
                  %s398 = sadd.s32 1, %s387
                  %p399 = scmp.ge.s32.totalorder %s398, %s375
                  %s400 = scalar_select %p399, 0, %s398
                  %s401 = smul.u32 %s400, 4
                  %s402 = smul.u32 %s400, 4
                  %s403 = scalar_lea.vmem %s378, %s401
                  %s404 = scalar_lea.vmem %s380, %s402 [#allocation2]
                $region84: #{cnn_forward.3} parent=57 // loop_footer
                  %s384 = sadd.s32 %s382, 1
                $region85: #{cnn_forward.3} parent=57 // loop_footer_branch
                  %381 = sbr.rel target = $region81
                $region86: #{cnn_forward.3} parent=57 // loop_exit
                  _
              $region58: #{cnn_forward.3} parent=35 // pred_fallthru
                _
            $region36: #{cnn_forward.3} parent=31 // pred_fallthru
              _
            // Predicated region
            $region37: #{cnn_forward.3} parent=31 // pred_check
              _
            $region38: #{cnn_forward.3} parent=31 // pred_check_branch
              %149 = sbr.rel (0) target = $region40
            $region39: #{cnn_forward.3} parent=31 // pred_region
              %s151 = sdiv.u32.pop %s138, 7
              %s152 = srem.u32.pop %s138, 7
              // While loop
              $region41: #{cnn_forward.3} parent=39 // loop_pre_header
                _
              $region42: #{cnn_forward.3} parent=39 // loop_header
                %s154 = sphi 0, %s156
                %p155 = scmp.ge.s32.totalorder %s154, %s151
                %s159 = sphi 0, %s220
                %s160 = sphi %s142, %s223
                %s161 = sphi %s134, %s224
              $region43: #{cnn_forward.3} parent=39 // loop_header_branch
                %158 = sbr.rel (%p155) target = $region47
              $region44: #{cnn_forward.3} parent=39 // loop_body
                %v162 = vld [vmem:[%s160] sm:$0xf]
                %163 = vst [vmem:[%s161] sm:$0xf] %v162
                %v164 = vld [vmem:[%s160 + $0x4] sm:$0xf]
                %165 = vst [vmem:[%s161 + $0x4] sm:$0xf] %v164
                %v166 = vld [vmem:[%s160 + $0x8] sm:$0xf]
                %167 = vst [vmem:[%s161 + $0x8] sm:$0xf] %v166
                %v168 = vld [vmem:[%s160 + $0xc] sm:$0xf]
                %169 = vst [vmem:[%s161 + $0xc] sm:$0xf] %v168
                %v170 = vld [vmem:[%s160 + $0x10] sm:$0xf]
                %171 = vst [vmem:[%s161 + $0x10] sm:$0xf] %v170
                %v172 = vld [vmem:[%s160 + $0x14] sm:$0xf]
                %173 = vst [vmem:[%s161 + $0x14] sm:$0xf] %v172
                %v174 = vld [vmem:[%s160 + $0x18] sm:$0xf]
                %175 = vst [vmem:[%s161 + $0x18] sm:$0xf] %v174
                %v176 = vld [vmem:[%s160 + $0x34] sm:$0xf]
                %177 = vst [vmem:[%s161 + $0x1c] sm:$0xf] %v176
                %v178 = vld [vmem:[%s160 + $0x38] sm:$0xf]
                %179 = vst [vmem:[%s161 + $0x20] sm:$0xf] %v178
                %v180 = vld [vmem:[%s160 + $0x3c] sm:$0xf]
                %181 = vst [vmem:[%s161 + $0x24] sm:$0xf] %v180
                %v182 = vld [vmem:[%s160 + $0x40] sm:$0xf]
                %183 = vst [vmem:[%s161 + $0x28] sm:$0xf] %v182
                %v184 = vld [vmem:[%s160 + $0x44] sm:$0xf]
                %185 = vst [vmem:[%s161 + $0x2c] sm:$0xf] %v184
                %v186 = vld [vmem:[%s160 + $0x48] sm:$0xf]
                %187 = vst [vmem:[%s161 + $0x30] sm:$0xf] %v186
                %v188 = vld [vmem:[%s160 + $0x4c] sm:$0xf]
                %189 = vst [vmem:[%s161 + $0x34] sm:$0xf] %v188
                %v190 = vld [vmem:[%s160 + $0x68] sm:$0xf]
                %191 = vst [vmem:[%s161 + $0x38] sm:$0xf] %v190
                %v192 = vld [vmem:[%s160 + $0x6c] sm:$0xf]
                %193 = vst [vmem:[%s161 + $0x3c] sm:$0xf] %v192
                %v194 = vld [vmem:[%s160 + $0x70] sm:$0xf]
                %195 = vst [vmem:[%s161 + $0x40] sm:$0xf] %v194
                %v196 = vld [vmem:[%s160 + $0x74] sm:$0xf]
                %197 = vst [vmem:[%s161 + $0x44] sm:$0xf] %v196
                %v198 = vld [vmem:[%s160 + $0x78] sm:$0xf]
                %199 = vst [vmem:[%s161 + $0x48] sm:$0xf] %v198
                %v200 = vld [vmem:[%s160 + $0x7c] sm:$0xf]
                %201 = vst [vmem:[%s161 + $0x4c] sm:$0xf] %v200
                %v202 = vld [vmem:[%s160 + $0x80] sm:$0xf]
                %203 = vst [vmem:[%s161 + $0x50] sm:$0xf] %v202
                %v204 = vld [vmem:[%s160 + $0x9c] sm:$0xf]
                %205 = vst [vmem:[%s161 + $0x54] sm:$0xf] %v204
                %v206 = vld [vmem:[%s160 + $0xa0] sm:$0xf]
                %207 = vst [vmem:[%s161 + $0x58] sm:$0xf] %v206
                %v208 = vld [vmem:[%s160 + $0xa4] sm:$0xf]
                %209 = vst [vmem:[%s161 + $0x5c] sm:$0xf] %v208
                %v210 = vld [vmem:[%s160 + $0xa8] sm:$0xf]
                %211 = vst [vmem:[%s161 + $0x60] sm:$0xf] %v210
                %v212 = vld [vmem:[%s160 + $0xac] sm:$0xf]
                %213 = vst [vmem:[%s161 + $0x64] sm:$0xf] %v212
                %v214 = vld [vmem:[%s160 + $0xb0] sm:$0xf]
                %215 = vst [vmem:[%s161 + $0x68] sm:$0xf] %v214
                %v216 = vld [vmem:[%s160 + $0xb4] sm:$0xf]
                %217 = vst [vmem:[%s161 + $0x6c] sm:$0xf] %v216
                %s218 = sadd.s32 1, %s159
                %p219 = scmp.ge.s32.totalorder %s218, %s151
                %s220 = scalar_select %p219, 0, %s218
                %s221 = smul.u32 %s220, 28
                %s222 = smul.u32 %s220, 28
                %s223 = scalar_lea.vmem %s142, %s221
                %s224 = scalar_lea.vmem %s134, %s222 [#allocation2]
              $region45: #{cnn_forward.3} parent=39 // loop_footer
                %s156 = sadd.s32 %s154, 1
              $region46: #{cnn_forward.3} parent=39 // loop_footer_branch
                %153 = sbr.rel target = $region42
              $region47: #{cnn_forward.3} parent=39 // loop_exit
                _
              %s225 = sdiv.u32.pop %s138, 7
              %s226 = srem.u32.pop %s138, 7
              %s227 = smul.u32 %s225, 7
              %s228 = smul.u32 4, %s227
              %s229 = scalar_lea.vmem %s142, %s228
              %s230 = smul.u32 4, %s227
              %s231 = scalar_lea.vmem %s134, %s230 [#allocation2]
              // While loop
              $region48: #{cnn_forward.3} parent=39 // loop_pre_header
                _
              $region49: #{cnn_forward.3} parent=39 // loop_header
                %s233 = sphi 0, %s235
                %p234 = scmp.ge.s32.totalorder %s233, %s226
                %s238 = sphi 0, %s251
                %s239 = sphi %s229, %s254
                %s240 = sphi %s231, %s255
              $region50: #{cnn_forward.3} parent=39 // loop_header_branch
                %237 = sbr.rel (%p234) target = $region54
              $region51: #{cnn_forward.3} parent=39 // loop_body
                %v241 = vld [vmem:[%s239] sm:$0xf]
                %242 = vst [vmem:[%s240] sm:$0xf] %v241
                %v243 = vld [vmem:[%s239 + $0x34] sm:$0xf]
                %244 = vst [vmem:[%s240 + $0x1c] sm:$0xf] %v243
                %v245 = vld [vmem:[%s239 + $0x68] sm:$0xf]
                %246 = vst [vmem:[%s240 + $0x38] sm:$0xf] %v245
                %v247 = vld [vmem:[%s239 + $0x9c] sm:$0xf]
                %248 = vst [vmem:[%s240 + $0x54] sm:$0xf] %v247
                %s249 = sadd.s32 1, %s238
                %p250 = scmp.ge.s32.totalorder %s249, %s226
                %s251 = scalar_select %p250, 0, %s249
                %s252 = smul.u32 %s251, 4
                %s253 = smul.u32 %s251, 4
                %s254 = scalar_lea.vmem %s229, %s252
                %s255 = scalar_lea.vmem %s231, %s253 [#allocation2]
              $region52: #{cnn_forward.3} parent=39 // loop_footer
                %s235 = sadd.s32 %s233, 1
              $region53: #{cnn_forward.3} parent=39 // loop_footer_branch
                %232 = sbr.rel target = $region49
              $region54: #{cnn_forward.3} parent=39 // loop_exit
                _
            $region40: #{cnn_forward.3} parent=31 // pred_fallthru
              _
          $region32: #{cnn_forward.3} parent=27 // pred_fallthru
            _
          %405 = vnop
        $region28: #{cnn_forward.3} parent=23 // pred_fallthru
          _
      $region24: #{cnn_forward.3} parent=5 // pred_fallthru
        _
      %p406 = scmp.le.s32.totalorder 1, %s9
      %p407 = scmp.lt.s32.totalorder %s9, 3
      %p408 = pnand %p406, %p407
      %p409 = pneg %p408
      // Predicated region
      $region87: #{cnn_forward.3} parent=5 // pred_check
        _
      $region88: #{cnn_forward.3} parent=5 // pred_check_branch
        %411 = sbr.rel (%p408) target = $region90
      $region89: #{cnn_forward.3} parent=5 // pred_region
        %s412 = ssub.s32 %s9, 1
        %s413 = sand.u32 %s22, 1
        %s414 = sand.u32 %s22, 1
        %s415 = smul.addr %s414, 112
        %s416 = scalar_lea.vmem [#allocation2], %s415
        // Predicated region
        $region91: #{cnn_forward.3} parent=89 // pred_check
          %p417 = pneg %p35
        $region92: #{cnn_forward.3} parent=89 // pred_check_branch
          %419 = sbr.rel (%p417) target = $region94
        $region93: #{cnn_forward.3} parent=89 // pred_region
          _
        $region94: #{cnn_forward.3} parent=89 // pred_fallthru
          _
        %s420 = sand.u32 %s22, 1
        %s421 = sand.u32 %s22, 1
        %s422 = smul.addr %s421, 112
        %s423 = scalar_lea.vmem [#allocation2], %s422
        %p424 = pneg %p35
        %p425 = pneg %p32
        %p426 = pneg %p56
        %p427 = pneg %p53
        %p428 = pneg %p77
        %p429 = pneg %p74
        %p430 = pneg %p103
        %p431 = pneg %p100
        %s432 = sand.u32 %s90, 1
        %s433 = sand.u32 %s90, 1
        %s434 = smul.addr %s433, 28
        %s435 = scalar_lea.vmem [#allocation3], %s434
        %s436 = smul.u32 7, %s14
        %s437 = ssub.s32 13, %s436
        %p438 = scmp.lt.s32.totalorder %s437, 7
        %s439 = scalar_select %p438, %s437, 7
        %s440 = smul.u32 256, %s439
        %s441 = smul.u32 7, %s14
        %s442 = ssub.s32 13, %s441
        %p443 = scmp.lt.s32.totalorder %s442, 7
        %s444 = scalar_select %p443, %s442, 7
        %s445 = smul.u32 64, %s444
        %v447 = vld [vmem:[%s1] sm:$0xf]
        %v448 = vld [vmem:[%s1 + $0x4] sm:$0xf]
        %v449 = vld [vmem:[%s1 + $0x8] sm:$0xf]
        %v450 = vld [vmem:[%s1 + $0xc] sm:$0xf]
        %v451 = vld [vmem:[%s1 + $0x10] sm:$0x3]
        %v452 = vld [vmem:[%s416] sm:$0xf]
        %v453 = vld [vmem:[%s416 + $0x4] sm:$0xf]
        %v454 = vld [vmem:[%s416 + $0x8] sm:$0xf]
        %v455 = vld [vmem:[%s416 + $0xc] sm:$0xf]
        %v456 = vld [vmem:[%s416 + $0x10] sm:$0xf]
        %v457 = vld [vmem:[%s416 + $0x14] sm:$0xf]
        %v458 = vld [vmem:[%s416 + $0x18] sm:$0xf]
        %v466 = vunpack.c.l.b16 %v452
        %v467 = vunpack.c.l.b16 %v453
        %v468 = vunpack.c.l.b16 %v454
        %v469 = vunpack.c.l.b16 %v455
        %v470 = vunpack.c.l.b16 %v456
        %v471 = vunpack.c.l.b16 %v457
        %v472 = vunpack.c.l.b16 %v458
        %v473 = vpack.c.b16 %v467, %v466
        %v474 = vpack.c.b16 %v469, %v468
        %v475 = vpack.c.b16 %v471, %v470
        %v476 = vpack.c.b16 %v472, %v472
        %v482 = vunpack.c.l.b16 %v447
        %v483 = vunpack.c.l.b16 %v448
        %v484 = vunpack.c.l.b16 %v449
        %v485 = vunpack.c.l.b16 %v450
        %v486 = vunpack.c.l.b16 %v451
        %v487 = vpack.c.b16 %v483, %v482
        %v488 = vpack.c.b16 %v485, %v484
        %v489 = vpack.c.b16 %v486, %v486
        %vm492 = vcmask 293888
        %v494 = vsel %vm492, %v473, 0
        %v497 = vsel %vm492, %v474, 0
        %v500 = vsel %vm492, %v475, 0
        %v503 = vsel %vm492, %v476, 0
        %vm505 = vcmask 1041408
        %v507 = vsel %vm505, %v489, 0
        %509 = vmatprep.subr.bf16.mxu0 0
        %510 = vmatpush1.bf16.msra.mxu0 %v487
        %511 = vmatprep.subr.bf16.mxu0 0
        %512 = vmatpush1.bf16.msra.mxu0 %v488
        %513 = vmatprep.subr.bf16.mxu0 0
        %514 = vmatpush1.bf16.msra.mxu0 %v507
        %515 = vmatprep.subr.bf16.mxu0 0
        %516 = vmatpush1.bf16.msra.mxu0 0
        %517 = vmatprep.subr.bf16.mxu0 0
        %518 = vmatpush1.bf16.msra.mxu0 0
        %519 = vmatprep.subr.bf16.mxu0 0
        %520 = vmatpush1.bf16.msra.mxu0 0
        %521 = vmatprep.subr.bf16.mxu0 0
        %522 = vmatpush1.bf16.msra.mxu0 0
        %523 = vmatprep.subr.bf16.mxu0 0
        %524 = vmatpush1.bf16.msra.mxu0 0
        %525 = vmatprep.subr.bf16.mxu0 0
        %526 = vmatpush1.bf16.msra.mxu0 0
        %527 = vmatprep.subr.bf16.mxu0 0
        %528 = vmatpush1.bf16.msra.mxu0 0
        %529 = vmatprep.subr.bf16.mxu0 0
        %530 = vmatpush1.bf16.msra.mxu0 0
        %531 = vmatprep.subr.bf16.mxu0 0
        %532 = vmatpush1.bf16.msra.mxu0 0
        %533 = vmatprep.subr.bf16.mxu0 0
        %534 = vmatpush1.bf16.msra.mxu0 0
        %535 = vmatprep.subr.bf16.mxu0 0
        %536 = vmatpush1.bf16.msra.mxu0 0
        %537 = vmatprep.subr.bf16.mxu0 0
        %538 = vmatpush1.bf16.msra.mxu0 0
        %539 = vmatprep.subr.bf16.mxu0 0
        %540 = vmatpush1.bf16.msra.mxu0 0
        %541 = vmatprep.mubr.bf16.mxu0 0
        %542 = vmatmul.mubr.bf16.gmra.mrb[0].mxu0 %v494
        %v543 = vpop.f32.mrb[0].mxu0
        %v544 = vadd.f32 0.0, %v543
        %v545 = vpop.f32.mrb[0].mxu0
        %v546 = vpop.f32.mrb[0].mxu0
        %v547 = vadd.f32 0.0, %v546
        %v548 = vpop.f32.mrb[0].mxu0
        %549 = vmatprep.mubr.bf16.mxu0 0
        %550 = vmatmul.mubr.bf16.gmra.mrb[0].mxu0 %v497
        %v551 = vpop.f32.mrb[0].mxu0
        %v552 = vadd.f32 0.0, %v551
        %v553 = vpop.f32.mrb[0].mxu0
        %v554 = vpop.f32.mrb[0].mxu0
        %v555 = vadd.f32 0.0, %v554
        %v556 = vpop.f32.mrb[0].mxu0
        %557 = vmatprep.mubr.bf16.mxu0 0
        %558 = vmatmul.mubr.bf16.gmra.mrb[0].mxu0 %v500
        %v559 = vpop.f32.mrb[0].mxu0
        %v560 = vadd.f32 0.0, %v559
        %v561 = vpop.f32.mrb[0].mxu0
        %v562 = vpop.f32.mrb[0].mxu0
        %v563 = vadd.f32 0.0, %v562
        %v564 = vpop.f32.mrb[0].mxu0
        %565 = vmatprep.mubr.bf16.mxu0 0
        %566 = vmatmul.mubr.bf16.gmra.mrb[0].mxu0 %v503
        %v567 = vpop.f32.mrb[0].mxu0
        %v568 = vadd.f32 0.0, %v567
        %v569 = vpop.f32.mrb[0].mxu0
        %v570 = vpop.f32.mrb[0].mxu0
        %v571 = vpop.f32.mrb[0].mxu0
        %572 = vdwg.mxu0
        %s573 = scalar_lea.vmem %s416, 28 [#allocation2]
        %v574 = vld [vmem:[%s573] sm:$0xf]
        %v575 = vld [vmem:[%s573 + $0x4] sm:$0xf]
        %v576 = vld [vmem:[%s573 + $0x8] sm:$0xf]
        %v577 = vld [vmem:[%s573 + $0xc] sm:$0xf]
        %v578 = vld [vmem:[%s573 + $0x10] sm:$0xf]
        %v579 = vld [vmem:[%s573 + $0x14] sm:$0xf]
        %v580 = vld [vmem:[%s573 + $0x18] sm:$0xf]
        %v588 = vunpack.c.l.b16 %v574
        %v589 = vunpack.c.l.b16 %v575
        %v590 = vunpack.c.l.b16 %v576
        %v591 = vunpack.c.l.b16 %v577
        %v592 = vunpack.c.l.b16 %v578
        %v593 = vunpack.c.l.b16 %v579
        %v594 = vunpack.c.l.b16 %v580
        %v595 = vpack.c.b16 %v589, %v588
        %v596 = vpack.c.b16 %v591, %v590
        %v597 = vpack.c.b16 %v593, %v592
        %v598 = vpack.c.b16 %v594, %v594
        %v600 = vsel %vm492, %v595, 0
        %v603 = vsel %vm492, %v596, 0
        %v606 = vsel %vm492, %v597, 0
        %v609 = vsel %vm492, %v598, 0
        %611 = vmatprep.subr.bf16.mxu0 0
        %612 = vmatpush1.bf16.msra.mxu0 %v487
        %613 = vmatprep.subr.bf16.mxu0 0
        %614 = vmatpush1.bf16.msra.mxu0 %v488
        %615 = vmatprep.subr.bf16.mxu0 0
        %616 = vmatpush1.bf16.msra.mxu0 %v507
        %617 = vmatprep.subr.bf16.mxu0 0
        %618 = vmatpush1.bf16.msra.mxu0 0
        %619 = vmatprep.subr.bf16.mxu0 0
        %620 = vmatpush1.bf16.msra.mxu0 0
        %621 = vmatprep.subr.bf16.mxu0 0
        %622 = vmatpush1.bf16.msra.mxu0 0
        %623 = vmatprep.subr.bf16.mxu0 0
        %624 = vmatpush1.bf16.msra.mxu0 0
        %625 = vmatprep.subr.bf16.mxu0 0
        %626 = vmatpush1.bf16.msra.mxu0 0
        %627 = vmatprep.subr.bf16.mxu0 0
        %628 = vmatpush1.bf16.msra.mxu0 0
        %629 = vmatprep.subr.bf16.mxu0 0
        %630 = vmatpush1.bf16.msra.mxu0 0
        %631 = vmatprep.subr.bf16.mxu0 0
        %632 = vmatpush1.bf16.msra.mxu0 0
        %633 = vmatprep.subr.bf16.mxu0 0
        %634 = vmatpush1.bf16.msra.mxu0 0
        %635 = vmatprep.subr.bf16.mxu0 0
        %636 = vmatpush1.bf16.msra.mxu0 0
        %637 = vmatprep.subr.bf16.mxu0 0
        %638 = vmatpush1.bf16.msra.mxu0 0
        %639 = vmatprep.subr.bf16.mxu0 0
        %640 = vmatpush1.bf16.msra.mxu0 0
        %641 = vmatprep.subr.bf16.mxu0 0
        %642 = vmatpush1.bf16.msra.mxu0 0
        %643 = vmatprep.mubr.bf16.mxu0 0
        %644 = vmatmul.mubr.bf16.gmra.mrb[0].mxu0 %v600
        %v645 = vpop.f32.mrb[0].mxu0
        %v646 = vadd.f32 0.0, %v645
        %v647 = vpop.f32.mrb[0].mxu0
        %v648 = vpop.f32.mrb[0].mxu0
        %v649 = vadd.f32 0.0, %v648
        %v650 = vpop.f32.mrb[0].mxu0
        %651 = vmatprep.mubr.bf16.mxu0 0
        %652 = vmatmul.mubr.bf16.gmra.mrb[0].mxu0 %v603
        %v653 = vpop.f32.mrb[0].mxu0
        %v654 = vadd.f32 0.0, %v653
        %v655 = vpop.f32.mrb[0].mxu0
        %v656 = vpop.f32.mrb[0].mxu0
        %v657 = vadd.f32 0.0, %v656
        %v658 = vpop.f32.mrb[0].mxu0
        %659 = vmatprep.mubr.bf16.mxu0 0
        %660 = vmatmul.mubr.bf16.gmra.mrb[0].mxu0 %v606
        %v661 = vpop.f32.mrb[0].mxu0
        %v662 = vadd.f32 0.0, %v661
        %v663 = vpop.f32.mrb[0].mxu0
        %v664 = vpop.f32.mrb[0].mxu0
        %v665 = vadd.f32 0.0, %v664
        %v666 = vpop.f32.mrb[0].mxu0
        %667 = vmatprep.mubr.bf16.mxu0 0
        %668 = vmatmul.mubr.bf16.gmra.mrb[0].mxu0 %v609
        %v669 = vpop.f32.mrb[0].mxu0
        %v670 = vadd.f32 0.0, %v669
        %v671 = vpop.f32.mrb[0].mxu0
        %v672 = vpop.f32.mrb[0].mxu0
        %v673 = vpop.f32.mrb[0].mxu0
        %674 = vdwg.mxu0
        %v675 = vmax.f32 %v544, %v646
        %v676 = vmax.f32 %v547, %v649
        %v677 = vmax.f32 %v552, %v654
        %v678 = vmax.f32 %v555, %v657
        %v679 = vmax.f32 %v560, %v662
        %v680 = vmax.f32 %v563, %v665
        %v681 = vmax.f32 %v568, %v670
        %s682 = scalar_lea.vmem %s416, 56 [#allocation2]
        %v683 = vld [vmem:[%s682] sm:$0xf]
        %v684 = vld [vmem:[%s682 + $0x4] sm:$0xf]
        %v685 = vld [vmem:[%s682 + $0x8] sm:$0xf]
        %v686 = vld [vmem:[%s682 + $0xc] sm:$0xf]
        %v687 = vld [vmem:[%s682 + $0x10] sm:$0xf]
        %v688 = vld [vmem:[%s682 + $0x14] sm:$0xf]
        %v689 = vld [vmem:[%s682 + $0x18] sm:$0xf]
        %v697 = vunpack.c.l.b16 %v683
        %v698 = vunpack.c.l.b16 %v684
        %v699 = vunpack.c.l.b16 %v685
        %v700 = vunpack.c.l.b16 %v686
        %v701 = vunpack.c.l.b16 %v687
        %v702 = vunpack.c.l.b16 %v688
        %v703 = vunpack.c.l.b16 %v689
        %v704 = vpack.c.b16 %v698, %v697
        %v705 = vpack.c.b16 %v700, %v699
        %v706 = vpack.c.b16 %v702, %v701
        %v707 = vpack.c.b16 %v703, %v703
        %v709 = vsel %vm492, %v704, 0
        %v712 = vsel %vm492, %v705, 0
        %v715 = vsel %vm492, %v706, 0
        %v718 = vsel %vm492, %v707, 0
        %720 = vmatprep.subr.bf16.mxu0 0
        %721 = vmatpush1.bf16.msra.mxu0 %v487
        %722 = vmatprep.subr.bf16.mxu0 0
        %723 = vmatpush1.bf16.msra.mxu0 %v488
        %724 = vmatprep.subr.bf16.mxu0 0
        %725 = vmatpush1.bf16.msra.mxu0 %v507
        %726 = vmatprep.subr.bf16.mxu0 0
        %727 = vmatpush1.bf16.msra.mxu0 0
        %728 = vmatprep.subr.bf16.mxu0 0
        %729 = vmatpush1.bf16.msra.mxu0 0
        %730 = vmatprep.subr.bf16.mxu0 0
        %731 = vmatpush1.bf16.msra.mxu0 0
        %732 = vmatprep.subr.bf16.mxu0 0
        %733 = vmatpush1.bf16.msra.mxu0 0
        %734 = vmatprep.subr.bf16.mxu0 0
        %735 = vmatpush1.bf16.msra.mxu0 0
        %736 = vmatprep.subr.bf16.mxu0 0
        %737 = vmatpush1.bf16.msra.mxu0 0
        %738 = vmatprep.subr.bf16.mxu0 0
        %739 = vmatpush1.bf16.msra.mxu0 0
        %740 = vmatprep.subr.bf16.mxu0 0
        %741 = vmatpush1.bf16.msra.mxu0 0
        %742 = vmatprep.subr.bf16.mxu0 0
        %743 = vmatpush1.bf16.msra.mxu0 0
        %744 = vmatprep.subr.bf16.mxu0 0
        %745 = vmatpush1.bf16.msra.mxu0 0
        %746 = vmatprep.subr.bf16.mxu0 0
        %747 = vmatpush1.bf16.msra.mxu0 0
        %748 = vmatprep.subr.bf16.mxu0 0
        %749 = vmatpush1.bf16.msra.mxu0 0
        %750 = vmatprep.subr.bf16.mxu0 0
        %751 = vmatpush1.bf16.msra.mxu0 0
        %752 = vmatprep.mubr.bf16.mxu0 0
        %753 = vmatmul.mubr.bf16.gmra.mrb[0].mxu0 %v709
        %v754 = vpop.f32.mrb[0].mxu0
        %v755 = vadd.f32 0.0, %v754
        %v756 = vpop.f32.mrb[0].mxu0
        %v757 = vpop.f32.mrb[0].mxu0
        %v758 = vadd.f32 0.0, %v757
        %v759 = vpop.f32.mrb[0].mxu0
        %760 = vmatprep.mubr.bf16.mxu0 0
        %761 = vmatmul.mubr.bf16.gmra.mrb[0].mxu0 %v712
        %v762 = vpop.f32.mrb[0].mxu0
        %v763 = vadd.f32 0.0, %v762
        %v764 = vpop.f32.mrb[0].mxu0
        %v765 = vpop.f32.mrb[0].mxu0
        %v766 = vadd.f32 0.0, %v765
        %v767 = vpop.f32.mrb[0].mxu0
        %768 = vmatprep.mubr.bf16.mxu0 0
        %769 = vmatmul.mubr.bf16.gmra.mrb[0].mxu0 %v715
        %v770 = vpop.f32.mrb[0].mxu0
        %v771 = vadd.f32 0.0, %v770
        %v772 = vpop.f32.mrb[0].mxu0
        %v773 = vpop.f32.mrb[0].mxu0
        %v774 = vadd.f32 0.0, %v773
        %v775 = vpop.f32.mrb[0].mxu0
        %776 = vmatprep.mubr.bf16.mxu0 0
        %777 = vmatmul.mubr.bf16.gmra.mrb[0].mxu0 %v718
        %v778 = vpop.f32.mrb[0].mxu0
        %v779 = vadd.f32 0.0, %v778
        %v780 = vpop.f32.mrb[0].mxu0
        %v781 = vpop.f32.mrb[0].mxu0
        %v782 = vpop.f32.mrb[0].mxu0
        %783 = vdwg.mxu0
        %v784 = vmax.f32 %v675, %v755
        %v785 = vmax.f32 %v676, %v758
        %v786 = vmax.f32 %v677, %v763
        %v787 = vmax.f32 %v678, %v766
        %v788 = vmax.f32 %v679, %v771
        %v789 = vmax.f32 %v680, %v774
        %v790 = vmax.f32 %v681, %v779
        %s791 = scalar_lea.vmem %s416, 84 [#allocation2]
        %v792 = vld [vmem:[%s791] sm:$0xf]
        %v793 = vld [vmem:[%s791 + $0x4] sm:$0xf]
        %v794 = vld [vmem:[%s791 + $0x8] sm:$0xf]
        %v795 = vld [vmem:[%s791 + $0xc] sm:$0xf]
        %v796 = vld [vmem:[%s791 + $0x10] sm:$0xf]
        %v797 = vld [vmem:[%s791 + $0x14] sm:$0xf]
        %v798 = vld [vmem:[%s791 + $0x18] sm:$0xf]
        %v806 = vunpack.c.l.b16 %v792
        %v807 = vunpack.c.l.b16 %v793
        %v808 = vunpack.c.l.b16 %v794
        %v809 = vunpack.c.l.b16 %v795
        %v810 = vunpack.c.l.b16 %v796
        %v811 = vunpack.c.l.b16 %v797
        %v812 = vunpack.c.l.b16 %v798
        %v813 = vpack.c.b16 %v807, %v806
        %v814 = vpack.c.b16 %v809, %v808
        %v815 = vpack.c.b16 %v811, %v810
        %v816 = vpack.c.b16 %v812, %v812
        %v818 = vsel %vm492, %v813, 0
        %v821 = vsel %vm492, %v814, 0
        %v824 = vsel %vm492, %v815, 0
        %v827 = vsel %vm492, %v816, 0
        %829 = vmatprep.subr.bf16.mxu0 0
        %830 = vmatpush1.bf16.msra.mxu0 %v487
        %831 = vmatprep.subr.bf16.mxu0 0
        %832 = vmatpush1.bf16.msra.mxu0 %v488
        %833 = vmatprep.subr.bf16.mxu0 0
        %834 = vmatpush1.bf16.msra.mxu0 %v507
        %835 = vmatprep.subr.bf16.mxu0 0
        %836 = vmatpush1.bf16.msra.mxu0 0
        %837 = vmatprep.subr.bf16.mxu0 0
        %838 = vmatpush1.bf16.msra.mxu0 0
        %839 = vmatprep.subr.bf16.mxu0 0
        %840 = vmatpush1.bf16.msra.mxu0 0
        %841 = vmatprep.subr.bf16.mxu0 0
        %842 = vmatpush1.bf16.msra.mxu0 0
        %843 = vmatprep.subr.bf16.mxu0 0
        %844 = vmatpush1.bf16.msra.mxu0 0
        %845 = vmatprep.subr.bf16.mxu0 0
        %846 = vmatpush1.bf16.msra.mxu0 0
        %847 = vmatprep.subr.bf16.mxu0 0
        %848 = vmatpush1.bf16.msra.mxu0 0
        %849 = vmatprep.subr.bf16.mxu0 0
        %850 = vmatpush1.bf16.msra.mxu0 0
        %851 = vmatprep.subr.bf16.mxu0 0
        %852 = vmatpush1.bf16.msra.mxu0 0
        %853 = vmatprep.subr.bf16.mxu0 0
        %854 = vmatpush1.bf16.msra.mxu0 0
        %855 = vmatprep.subr.bf16.mxu0 0
        %856 = vmatpush1.bf16.msra.mxu0 0
        %857 = vmatprep.subr.bf16.mxu0 0
        %858 = vmatpush1.bf16.msra.mxu0 0
        %859 = vmatprep.subr.bf16.mxu0 0
        %860 = vmatpush1.bf16.msra.mxu0 0
        %861 = vmatprep.mubr.bf16.mxu0 0
        %862 = vmatmul.mubr.bf16.gmra.mrb[0].mxu0 %v818
        %v863 = vpop.f32.mrb[0].mxu0
        %v864 = vadd.f32 0.0, %v863
        %v865 = vpop.f32.mrb[0].mxu0
        %v866 = vpop.f32.mrb[0].mxu0
        %v867 = vadd.f32 0.0, %v866
        %v868 = vpop.f32.mrb[0].mxu0
        %869 = vmatprep.mubr.bf16.mxu0 0
        %870 = vmatmul.mubr.bf16.gmra.mrb[0].mxu0 %v821
        %v871 = vpop.f32.mrb[0].mxu0
        %v872 = vadd.f32 0.0, %v871
        %v873 = vpop.f32.mrb[0].mxu0
        %v874 = vpop.f32.mrb[0].mxu0
        %v875 = vadd.f32 0.0, %v874
        %v876 = vpop.f32.mrb[0].mxu0
        %877 = vmatprep.mubr.bf16.mxu0 0
        %878 = vmatmul.mubr.bf16.gmra.mrb[0].mxu0 %v824
        %v879 = vpop.f32.mrb[0].mxu0
        %v880 = vadd.f32 0.0, %v879
        %v881 = vpop.f32.mrb[0].mxu0
        %v882 = vpop.f32.mrb[0].mxu0
        %v883 = vadd.f32 0.0, %v882
        %v884 = vpop.f32.mrb[0].mxu0
        %885 = vmatprep.mubr.bf16.mxu0 0
        %886 = vmatmul.mubr.bf16.gmra.mrb[0].mxu0 %v827
        %v887 = vpop.f32.mrb[0].mxu0
        %v888 = vadd.f32 0.0, %v887
        %v889 = vpop.f32.mrb[0].mxu0
        %v890 = vpop.f32.mrb[0].mxu0
        %v891 = vpop.f32.mrb[0].mxu0
        %892 = vdwg.mxu0
        %v893 = vmax.f32 %v784, %v864
        %v894 = vmax.f32 %v785, %v867
        %v895 = vmax.f32 %v786, %v872
        %v896 = vmax.f32 %v787, %v875
        %v897 = vmax.f32 %v788, %v880
        %v898 = vmax.f32 %v789, %v883
        %v899 = vmax.f32 %v790, %v888
        %v900 = vld [vmem:[%s2] sm:$0x1]
        %v902 = vlaneseq
        %v903 = vshrl.u32 %v902, 7
        %v904 = vsub.s32 0, %v903
        %v905 = vrot.slane %v900, %v904
        %v907 = vadd.f32 %v893, %v905
        %v908 = vadd.f32 %v894, %v905
        %v909 = vadd.f32 %v895, %v905
        %v910 = vadd.f32 %v896, %v905
        %v911 = vadd.f32 %v897, %v905
        %v912 = vadd.f32 %v898, %v905
        %v913 = vadd.f32 %v899, %v905
        %v914 = vmax.f32 %v907, 0.0
        %v915 = vmax.f32 %v908, 0.0
        %v916 = vmax.f32 %v909, 0.0
        %v917 = vmax.f32 %v910, 0.0
        %v918 = vmax.f32 %v911, 0.0
        %v919 = vmax.f32 %v912, 0.0
        %v920 = vmax.f32 %v913, 0.0
        %v921 = vpack.c.bf16 %v915, %v914
        %v922 = vpack.c.bf16 %v917, %v916
        %v923 = vpack.c.bf16 %v919, %v918
        %v924 = vpack.c.bf16 %v920, %v920
        %v929 = vunpack.c.l.b16 %v921
        %v930 = vunpack.c.h.b16 %v921
        %v931 = vunpack.c.l.b16 %v922
        %v932 = vunpack.c.h.b16 %v922
        %v933 = vunpack.c.l.b16 %v923
        %v934 = vunpack.c.h.b16 %v923
        %v935 = vunpack.c.l.b16 %v924
        %v936 = vpack.c.b16 %v929, %v929
        %v937 = vpack.c.b16 %v930, %v930
        %v938 = vpack.c.b16 %v931, %v931
        %v939 = vpack.c.b16 %v932, %v932
        %v940 = vpack.c.b16 %v933, %v933
        %v941 = vpack.c.b16 %v934, %v934
        %v942 = vpack.c.b16 %v935, %v935
        %950 = vst [vmem:[%s435] sm:$0xf] %v936
        %951 = vst [vmem:[%s435 + $0x4] sm:$0xf] %v937
        %952 = vst [vmem:[%s435 + $0x8] sm:$0xf] %v938
        %953 = vst [vmem:[%s435 + $0xc] sm:$0xf] %v939
        %954 = vst [vmem:[%s435 + $0x10] sm:$0xf] %v940
        %955 = vst [vmem:[%s435 + $0x14] sm:$0xf] %v941
        %956 = vst [vmem:[%s435 + $0x18] sm:$0xf] %v942
        %s957 = sand.u32 %s90, 1
        %s958 = sand.u32 %s90, 1
        %s959 = smul.addr %s958, 28
        %s960 = scalar_lea.vmem [#allocation3], %s959
        // Predicated region
        $region95: #{cnn_forward.3} parent=89 // pred_check
          %p961 = pneg %p100
        $region96: #{cnn_forward.3} parent=89 // pred_check_branch
          %963 = sbr.rel (%p961) target = $region98
        $region97: #{cnn_forward.3} parent=89 // pred_region
          %s964 = smul.u32 7, %s14
          %s965 = ssub.s32 13, %s964
          %p966 = scmp.lt.s32.totalorder %s965, 7
          %s967 = scalar_select %p966, %s965, 7
          %s968 = smul.u32 64, %s967
          %p969 = scmp.ne.s32.totalorder 0, %s968
          %s970 = smul.addr %s964, 4
          %s971 = scalar_lea.vmem %s3, %s970
          // Predicated region
          $region99: #{cnn_forward.3} parent=97 // pred_check
            %p972 = pneg %p969
          $region100: #{cnn_forward.3} parent=97 // pred_check_branch
            %974 = sbr.rel (%p972) target = $region102
          $region101: #{cnn_forward.3} parent=97 // pred_region
            // Predicated region
            $region103: #{cnn_forward.3} parent=101 // pred_check
              _
            $region104: #{cnn_forward.3} parent=101 // pred_check_branch
              %976 = sbr.rel target = $region106
            $region105: #{cnn_forward.3} parent=101 // pred_region
              // Predicated region
              $region125: #{cnn_forward.3} parent=105 // pred_check
                _
              $region126: #{cnn_forward.3} parent=105 // pred_check_branch
                %1038 = sbr.rel (0) target = $region128
              $region127: #{cnn_forward.3} parent=105 // pred_region
                %s1040 = sdiv.u32.pop %s967, 7
                %s1041 = srem.u32.pop %s967, 7
                // While loop
                $region129: #{cnn_forward.3} parent=127 // loop_pre_header
                  _
                $region130: #{cnn_forward.3} parent=127 // loop_header
                  %s1043 = sphi 0, %s1045
                  %p1044 = scmp.ge.s32.totalorder %s1043, %s1040
                  %s1048 = sphi 0, %s1067
                  %s1049 = sphi %s960, %s1070
                  %s1050 = sphi %s971, %s1071
                $region131: #{cnn_forward.3} parent=127 // loop_header_branch
                  %1047 = sbr.rel (%p1044) target = $region135
                $region132: #{cnn_forward.3} parent=127 // loop_body
                  %v1051 = vld [vmem:[%s1049] sm:$0xf]
                  %1052 = vst [vmem:[%s1050] sm:$0xf] %v1051
                  %v1053 = vld [vmem:[%s1049 + $0x4] sm:$0xf]
                  %1054 = vst [vmem:[%s1050 + $0x4] sm:$0xf] %v1053
                  %v1055 = vld [vmem:[%s1049 + $0x8] sm:$0xf]
                  %1056 = vst [vmem:[%s1050 + $0x8] sm:$0xf] %v1055
                  %v1057 = vld [vmem:[%s1049 + $0xc] sm:$0xf]
                  %1058 = vst [vmem:[%s1050 + $0xc] sm:$0xf] %v1057
                  %v1059 = vld [vmem:[%s1049 + $0x10] sm:$0xf]
                  %1060 = vst [vmem:[%s1050 + $0x10] sm:$0xf] %v1059
                  %v1061 = vld [vmem:[%s1049 + $0x14] sm:$0xf]
                  %1062 = vst [vmem:[%s1050 + $0x14] sm:$0xf] %v1061
                  %v1063 = vld [vmem:[%s1049 + $0x18] sm:$0xf]
                  %1064 = vst [vmem:[%s1050 + $0x18] sm:$0xf] %v1063
                  %s1065 = sadd.s32 1, %s1048
                  %p1066 = scmp.ge.s32.totalorder %s1065, %s1040
                  %s1067 = scalar_select %p1066, 0, %s1065
                  %s1068 = smul.u32 %s1067, 28
                  %s1069 = smul.u32 %s1067, 28
                  %s1070 = scalar_lea.vmem %s960, %s1068 [#allocation3]
                  %s1071 = scalar_lea.vmem %s971, %s1069
                $region133: #{cnn_forward.3} parent=127 // loop_footer
                  %s1045 = sadd.s32 %s1043, 1
                $region134: #{cnn_forward.3} parent=127 // loop_footer_branch
                  %1042 = sbr.rel target = $region130
                $region135: #{cnn_forward.3} parent=127 // loop_exit
                  _
                %s1072 = sdiv.u32.pop %s967, 7
                %s1073 = srem.u32.pop %s967, 7
                %s1074 = smul.u32 %s1072, 7
                %s1075 = smul.u32 4, %s1074
                %s1076 = scalar_lea.vmem %s960, %s1075 [#allocation3]
                %s1077 = smul.u32 4, %s1074
                %s1078 = scalar_lea.vmem %s971, %s1077
                // While loop
                $region136: #{cnn_forward.3} parent=127 // loop_pre_header
                  _
                $region137: #{cnn_forward.3} parent=127 // loop_header
                  %s1080 = sphi 0, %s1082
                  %p1081 = scmp.ge.s32.totalorder %s1080, %s1073
                  %s1085 = sphi 0, %s1092
                  %s1086 = sphi %s1076, %s1095
                  %s1087 = sphi %s1078, %s1096
                $region138: #{cnn_forward.3} parent=127 // loop_header_branch
                  %1084 = sbr.rel (%p1081) target = $region142
                $region139: #{cnn_forward.3} parent=127 // loop_body
                  %v1088 = vld [vmem:[%s1086] sm:$0xf]
                  %1089 = vst [vmem:[%s1087] sm:$0xf] %v1088
                  %s1090 = sadd.s32 1, %s1085
                  %p1091 = scmp.ge.s32.totalorder %s1090, %s1073
                  %s1092 = scalar_select %p1091, 0, %s1090
                  %s1093 = smul.u32 %s1092, 4
                  %s1094 = smul.u32 %s1092, 4
                  %s1095 = scalar_lea.vmem %s1076, %s1093 [#allocation3]
                  %s1096 = scalar_lea.vmem %s1078, %s1094
                $region140: #{cnn_forward.3} parent=127 // loop_footer
                  %s1082 = sadd.s32 %s1080, 1
                $region141: #{cnn_forward.3} parent=127 // loop_footer_branch
                  %1079 = sbr.rel target = $region137
                $region142: #{cnn_forward.3} parent=127 // loop_exit
                  _
              $region128: #{cnn_forward.3} parent=105 // pred_fallthru
                _
            $region106: #{cnn_forward.3} parent=101 // pred_fallthru
              _
            // Predicated region
            $region107: #{cnn_forward.3} parent=101 // pred_check
              _
            $region108: #{cnn_forward.3} parent=101 // pred_check_branch
              %978 = sbr.rel (0) target = $region110
            $region109: #{cnn_forward.3} parent=101 // pred_region
              %s980 = sdiv.u32.pop %s967, 7
              %s981 = srem.u32.pop %s967, 7
              // While loop
              $region111: #{cnn_forward.3} parent=109 // loop_pre_header
                _
              $region112: #{cnn_forward.3} parent=109 // loop_header
                %s983 = sphi 0, %s985
                %p984 = scmp.ge.s32.totalorder %s983, %s980
                %s988 = sphi 0, %s1007
                %s989 = sphi %s960, %s1010
                %s990 = sphi %s971, %s1011
              $region113: #{cnn_forward.3} parent=109 // loop_header_branch
                %987 = sbr.rel (%p984) target = $region117
              $region114: #{cnn_forward.3} parent=109 // loop_body
                %v991 = vld [vmem:[%s989] sm:$0xf]
                %992 = vst [vmem:[%s990] sm:$0xf] %v991
                %v993 = vld [vmem:[%s989 + $0x4] sm:$0xf]
                %994 = vst [vmem:[%s990 + $0x4] sm:$0xf] %v993
                %v995 = vld [vmem:[%s989 + $0x8] sm:$0xf]
                %996 = vst [vmem:[%s990 + $0x8] sm:$0xf] %v995
                %v997 = vld [vmem:[%s989 + $0xc] sm:$0xf]
                %998 = vst [vmem:[%s990 + $0xc] sm:$0xf] %v997
                %v999 = vld [vmem:[%s989 + $0x10] sm:$0xf]
                %1000 = vst [vmem:[%s990 + $0x10] sm:$0xf] %v999
                %v1001 = vld [vmem:[%s989 + $0x14] sm:$0xf]
                %1002 = vst [vmem:[%s990 + $0x14] sm:$0xf] %v1001
                %v1003 = vld [vmem:[%s989 + $0x18] sm:$0xf]
                %1004 = vst [vmem:[%s990 + $0x18] sm:$0xf] %v1003
                %s1005 = sadd.s32 1, %s988
                %p1006 = scmp.ge.s32.totalorder %s1005, %s980
                %s1007 = scalar_select %p1006, 0, %s1005
                %s1008 = smul.u32 %s1007, 28
                %s1009 = smul.u32 %s1007, 28
                %s1010 = scalar_lea.vmem %s960, %s1008 [#allocation3]
                %s1011 = scalar_lea.vmem %s971, %s1009
              $region115: #{cnn_forward.3} parent=109 // loop_footer
                %s985 = sadd.s32 %s983, 1
              $region116: #{cnn_forward.3} parent=109 // loop_footer_branch
                %982 = sbr.rel target = $region112
              $region117: #{cnn_forward.3} parent=109 // loop_exit
                _
              %s1012 = sdiv.u32.pop %s967, 7
              %s1013 = srem.u32.pop %s967, 7
              %s1014 = smul.u32 %s1012, 7
              %s1015 = smul.u32 4, %s1014
              %s1016 = scalar_lea.vmem %s960, %s1015 [#allocation3]
              %s1017 = smul.u32 4, %s1014
              %s1018 = scalar_lea.vmem %s971, %s1017
              // While loop
              $region118: #{cnn_forward.3} parent=109 // loop_pre_header
                _
              $region119: #{cnn_forward.3} parent=109 // loop_header
                %s1020 = sphi 0, %s1022
                %p1021 = scmp.ge.s32.totalorder %s1020, %s1013
                %s1025 = sphi 0, %s1032
                %s1026 = sphi %s1016, %s1035
                %s1027 = sphi %s1018, %s1036
              $region120: #{cnn_forward.3} parent=109 // loop_header_branch
                %1024 = sbr.rel (%p1021) target = $region124
              $region121: #{cnn_forward.3} parent=109 // loop_body
                %v1028 = vld [vmem:[%s1026] sm:$0xf]
                %1029 = vst [vmem:[%s1027] sm:$0xf] %v1028
                %s1030 = sadd.s32 1, %s1025
                %p1031 = scmp.ge.s32.totalorder %s1030, %s1013
                %s1032 = scalar_select %p1031, 0, %s1030
                %s1033 = smul.u32 %s1032, 4
                %s1034 = smul.u32 %s1032, 4
                %s1035 = scalar_lea.vmem %s1016, %s1033 [#allocation3]
                %s1036 = scalar_lea.vmem %s1018, %s1034
              $region122: #{cnn_forward.3} parent=109 // loop_footer
                %s1022 = sadd.s32 %s1020, 1
              $region123: #{cnn_forward.3} parent=109 // loop_footer_branch
                %1019 = sbr.rel target = $region119
              $region124: #{cnn_forward.3} parent=109 // loop_exit
                _
            $region110: #{cnn_forward.3} parent=101 // pred_fallthru
              _
          $region102: #{cnn_forward.3} parent=97 // pred_fallthru
            _
          %1097 = vnop
        $region98: #{cnn_forward.3} parent=89 // pred_fallthru
          _
      $region90: #{cnn_forward.3} parent=5 // pred_fallthru
        _
      %p1098 = scmp.le.s32.totalorder 2, %s9
      // Predicated region
      $region143: #{cnn_forward.3} parent=5 // pred_check
        %p1099 = pneg %p1098
      $region144: #{cnn_forward.3} parent=5 // pred_check_branch
        %1101 = sbr.rel (%p1099) target = $region146
      $region145: #{cnn_forward.3} parent=5 // pred_region
        %s1102 = ssub.s32 %s9, 2
        // Predicated region
        $region147: #{cnn_forward.3} parent=145 // pred_check
          %p1103 = pneg %p106
        $region148: #{cnn_forward.3} parent=145 // pred_check_branch
          %1105 = sbr.rel (%p1103) target = $region150
        $region149: #{cnn_forward.3} parent=145 // pred_region
          %s1106 = sand.u32 %s91, 1
          %s1107 = sand.u32 %s91, 1
          %s1108 = smul.addr %s1107, 28
          %s1109 = scalar_lea.vmem [#allocation3], %s1108
        $region150: #{cnn_forward.3} parent=145 // pred_fallthru
          _
      $region146: #{cnn_forward.3} parent=5 // pred_fallthru
        _
    $region6: #{cnn_forward.3} parent=1 // loop_footer
      %s13 = sadd.s32 1, %s9
    $region7: #{cnn_forward.3} parent=1 // loop_footer_branch
      %8 = sbr.rel target = $region3
    $region8: #{cnn_forward.3} parent=1 // loop_exit
      _

// kernel: cnn_forward.4
$region0: #{cnn_forward.4}
  #allocation0 [shape = 'u32[]', space=smem, size = 0x4, offset = 0x4, fixed_abs, tag = 'smem constant byte address 0x4 - core index']
  #allocation1 [shape = 'u32[144,128]{1,0:T(1,128)}', space=vmem, size = 0x12000, scoped, tag = 'internal scratch']
  %s0 = inlined_call_operand.vmem [shape: bf16[4,49,576], index: 0, kind: input, shape index: {}]
  %s1 = inlined_call_operand.vmem [shape: bf16[576,128], index: 1, kind: input, shape index: {}]
  %s2 = inlined_call_operand.vmem [shape: f32[1,128], index: 2, kind: input, shape index: {}]
  %s3 = inlined_call_operand.vmem [shape: bf16[49,128], index: 3, kind: output, shape index: {}]
  %s4 = sld [smem:[#allocation0]]
  $region129: #{cnn_forward.4} parent=0
    _
  %s6 = ssub.s32 1, %s4
  %s7 = scalar_select 0, %s6, %s4
  $region1: #{cnn_forward.4} parent=0
    #allocation2 [shape = 'u8[327680]{0}', space=vmem, size = 0x50000, scoped, tag = 'input window, operand 0']
    #allocation3 [shape = 'u8[16384]{0}', space=vmem, size = 0x4000, scoped, tag = 'output window, operand 0']
    loop: start=0, step=1, limit=4
    $region2: #{cnn_forward.4} parent=1 // loop_pre_header
      _
    $region3: #{cnn_forward.4} parent=1 // loop_header
      %s9 = sphi 0, %s13
      %p10 = scmp.ge.s32.totalorder %s9, 4
      %s19 = sphi 0, %s21
      %s22 = sphi 0, %s19
      %s23 = sphi 0, %s22
      %s39 = sphi 0, %s23
      %s43 = sphi 0, %s43
      %s45 = sphi 0, %s43
      %s46 = sphi 0, %s45
      %s60 = sphi 0, %s46
      %s64 = sphi 0, %s64
      %s66 = sphi 0, %s64
      %s67 = sphi 0, %s66
      %s81 = sphi 0, %s67
      %s87 = sphi 0, %s89
      %s90 = sphi 0, %s87
      %s91 = sphi 0, %s90
      %s107 = sphi 0, %s91
    $region4: #{cnn_forward.4} parent=1 // loop_header_branch
      %12 = sbr.rel (%p10) target = $region8
    $region5: #{cnn_forward.4} parent=1 // loop_body
      %s14 = ssub.s32 %s9, 1
      %s15 = ssub.s32 %s9, 2
      %s16 = sadd.s32 %s9, 1
      %s17 = ssub.s32 %s9, %s16
      %p18 = scmp.eq.s32.totalorder %s17, 0
      %s20 = sadd.s32 %s19, 1
      %s21 = scalar_select %p18, %s19, %s20
      %p24 = pneg %p18
      %p25 = scmp.eq.s32.totalorder %s9, 1
      %p26 = por %p24, %p25
      %p27 = scmp.ne.s32.totalorder %s19, %s22
      %p28 = scmp.eq.s32.totalorder %s9, 0
      %p29 = por %p27, %p28
      %p30 = scmp.ne.s32.totalorder %s19, %s22
      %p31 = scmp.eq.s32.totalorder %s14, 1
      %p32 = por %p30, %p31
      %p33 = scmp.ne.s32.totalorder %s22, %s23
      %p34 = scmp.eq.s32.totalorder %s14, 0
      %p35 = por %p33, %p34
      %p36 = scmp.ne.s32.totalorder %s22, %s23
      %p37 = scmp.eq.s32.totalorder %s15, 1
      %p38 = por %p36, %p37
      %p40 = scmp.ne.s32.totalorder %s23, %s39
      %p41 = scmp.eq.s32.totalorder %s15, 0
      %p42 = por %p40, %p41
      %s44 = sadd.s32 %s43, 1
      %p47 = scmp.eq.s32.totalorder %s9, 1
      %p48 = scmp.ne.s32.totalorder %s43, %s45
      %p49 = scmp.eq.s32.totalorder %s9, 0
      %p50 = por %p48, %p49
      %p51 = scmp.ne.s32.totalorder %s43, %s45
      %p52 = scmp.eq.s32.totalorder %s14, 1
      %p53 = por %p51, %p52
      %p54 = scmp.ne.s32.totalorder %s45, %s46
      %p55 = scmp.eq.s32.totalorder %s14, 0
      %p56 = por %p54, %p55
      %p57 = scmp.ne.s32.totalorder %s45, %s46
      %p58 = scmp.eq.s32.totalorder %s15, 1
      %p59 = por %p57, %p58
      %p61 = scmp.ne.s32.totalorder %s46, %s60
      %p62 = scmp.eq.s32.totalorder %s15, 0
      %p63 = por %p61, %p62
      %s65 = sadd.s32 %s64, 1
      %p68 = scmp.eq.s32.totalorder %s9, 1
      %p69 = scmp.ne.s32.totalorder %s64, %s66
      %p70 = scmp.eq.s32.totalorder %s9, 0
      %p71 = por %p69, %p70
      %p72 = scmp.ne.s32.totalorder %s64, %s66
      %p73 = scmp.eq.s32.totalorder %s14, 1
      %p74 = por %p72, %p73
      %p75 = scmp.ne.s32.totalorder %s66, %s67
      %p76 = scmp.eq.s32.totalorder %s14, 0
      %p77 = por %p75, %p76
      %p78 = scmp.ne.s32.totalorder %s66, %s67
      %p79 = scmp.eq.s32.totalorder %s15, 1
      %p80 = por %p78, %p79
      %p82 = scmp.ne.s32.totalorder %s67, %s81
      %p83 = scmp.eq.s32.totalorder %s15, 0
      %p84 = por %p82, %p83
      %s85 = ssub.s32 %s9, %s16
      %p86 = scmp.eq.s32.totalorder %s85, 0
      %s88 = sadd.s32 %s87, 1
      %s89 = scalar_select %p86, %s87, %s88
      %p92 = pneg %p86
      %p93 = scmp.eq.s32.totalorder %s9, 1
      %p94 = por %p92, %p93
      %p95 = scmp.ne.s32.totalorder %s87, %s90
      %p96 = scmp.eq.s32.totalorder %s9, 0
      %p97 = por %p95, %p96
      %p98 = scmp.ne.s32.totalorder %s87, %s90
      %p99 = scmp.eq.s32.totalorder %s14, 1
      %p100 = por %p98, %p99
      %p101 = scmp.ne.s32.totalorder %s90, %s91
      %p102 = scmp.eq.s32.totalorder %s14, 0
      %p103 = por %p101, %p102
      %p104 = scmp.ne.s32.totalorder %s90, %s91
      %p105 = scmp.eq.s32.totalorder %s15, 1
      %p106 = por %p104, %p105
      %p108 = scmp.ne.s32.totalorder %s91, %s107
      %p109 = scmp.eq.s32.totalorder %s15, 0
      %p110 = por %p108, %p109
      %p111 = scmp.le.s32.totalorder 1, %s9
      %p112 = scmp.lt.s32.totalorder %s9, 3
      %p113 = pnand %p111, %p112
      %p114 = pneg %p113
      // Predicated region
      $region9: #{cnn_forward.4} parent=5 // pred_check
        _
      $region10: #{cnn_forward.4} parent=5 // pred_check_branch
        %116 = sbr.rel (%p113) target = $region12
      $region11: #{cnn_forward.4} parent=5 // pred_region
        %s117 = ssub.s32 %s9, 1
        // Predicated region
        $region13: #{cnn_forward.4} parent=11 // pred_check
          %p118 = pneg %p56
        $region14: #{cnn_forward.4} parent=11 // pred_check_branch
          %120 = sbr.rel (%p118) target = $region16
        $region15: #{cnn_forward.4} parent=11 // pred_region
          _
        $region16: #{cnn_forward.4} parent=11 // pred_fallthru
          _
        // Predicated region
        $region17: #{cnn_forward.4} parent=11 // pred_check
          %p121 = pneg %p77
        $region18: #{cnn_forward.4} parent=11 // pred_check_branch
          %123 = sbr.rel (%p121) target = $region20
        $region19: #{cnn_forward.4} parent=11 // pred_region
          _
        $region20: #{cnn_forward.4} parent=11 // pred_fallthru
          _
      $region12: #{cnn_forward.4} parent=5 // pred_fallthru
        _
      %p124 = scmp.lt.s32.totalorder %s9, 2
      // Predicated region
      $region21: #{cnn_forward.4} parent=5 // pred_check
        %p125 = pneg %p124
      $region22: #{cnn_forward.4} parent=5 // pred_check_branch
        %127 = sbr.rel (%p125) target = $region24
      $region23: #{cnn_forward.4} parent=5 // pred_region
        // Predicated region
        $region25: #{cnn_forward.4} parent=23 // pred_check
          %p128 = pneg %p29
        $region26: #{cnn_forward.4} parent=23 // pred_check_branch
          %130 = sbr.rel (%p128) target = $region28
        $region27: #{cnn_forward.4} parent=23 // pred_region
          %s131 = sand.u32 %s19, 1
          %s132 = sand.u32 %s19, 1
          %s133 = smul.addr %s132, 320
          %s134 = scalar_lea.vmem [#allocation2], %s133
          %s135 = smul.u32 4, %s9
          %s136 = ssub.s32 7, %s135
          %p137 = scmp.lt.s32.totalorder %s136, 4
          %s138 = scalar_select %p137, %s136, 4
          %s139 = smul.u32 256, %s138
          %s140 = smul.u32 %s139, 5
          %p141 = scmp.ne.s32.totalorder 0, %s140
          %s142 = smul.addr %s135, 5
          %s143 = smul.addr %s142, 4
          %s144 = scalar_lea.vmem %s0, %s143
          // Predicated region
          $region29: #{cnn_forward.4} parent=27 // pred_check
            %p145 = pneg %p141
          $region30: #{cnn_forward.4} parent=27 // pred_check_branch
            %147 = sbr.rel (%p145) target = $region32
          $region31: #{cnn_forward.4} parent=27 // pred_region
            // Predicated region
            $region33: #{cnn_forward.4} parent=31 // pred_check
              _
            $region34: #{cnn_forward.4} parent=31 // pred_check_branch
              %149 = sbr.rel (0) target = $region36
            $region35: #{cnn_forward.4} parent=31 // pred_region
              %s150 = scalar_lea.vmem %s144, 16
              %s151 = scalar_lea.vmem %s134, 16 [#allocation2]
              %s152 = sshrl.u32 %s138, 2
              // While loop
              $region37: #{cnn_forward.4} parent=35 // loop_pre_header
                _
              $region38: #{cnn_forward.4} parent=35 // loop_header
                %s154 = sphi 0, %s156
                %p155 = scmp.ge.s32.totalorder %s154, %s152
                %s159 = sphi 0, %s228
                %s160 = sphi %s144, %s231
                %s161 = sphi %s134, %s232
              $region39: #{cnn_forward.4} parent=35 // loop_header_branch
                %158 = sbr.rel (%p155) target = $region43
              $region40: #{cnn_forward.4} parent=35 // loop_body
                %v162 = vld [vmem:[%s160] sm:$0xff]
                %163 = vst [vmem:[%s161] sm:$0xff] %v162
                %v164 = vld [vmem:[%s160 + $0x14] sm:$0xff]
                %165 = vst [vmem:[%s161 + $0x14] sm:$0xff] %v164
                %v166 = vld [vmem:[%s160 + $0x28] sm:$0xff]
                %167 = vst [vmem:[%s161 + $0x28] sm:$0xff] %v166
                %v168 = vld [vmem:[%s160 + $0x3c] sm:$0xff]
                %169 = vst [vmem:[%s161 + $0x3c] sm:$0xff] %v168
                %v170 = vld [vmem:[%s160 + $0x8] sm:$0xff]
                %171 = vst [vmem:[%s161 + $0x8] sm:$0xff] %v170
                %v172 = vld [vmem:[%s160 + $0x1c] sm:$0xff]
                %173 = vst [vmem:[%s161 + $0x1c] sm:$0xff] %v172
                %v174 = vld [vmem:[%s160 + $0x30] sm:$0xff]
                %175 = vst [vmem:[%s161 + $0x30] sm:$0xff] %v174
                %v176 = vld [vmem:[%s160 + $0x44] sm:$0xff]
                %177 = vst [vmem:[%s161 + $0x44] sm:$0xff] %v176
                %v178 = vld [vmem:[%s160 + $0x8c] sm:$0xff]
                %179 = vst [vmem:[%s161 + $0x50] sm:$0xff] %v178
                %v180 = vld [vmem:[%s160 + $0xa0] sm:$0xff]
                %181 = vst [vmem:[%s161 + $0x64] sm:$0xff] %v180
                %v182 = vld [vmem:[%s160 + $0xb4] sm:$0xff]
                %183 = vst [vmem:[%s161 + $0x78] sm:$0xff] %v182
                %v184 = vld [vmem:[%s160 + $0xc8] sm:$0xff]
                %185 = vst [vmem:[%s161 + $0x8c] sm:$0xff] %v184
                %v186 = vld [vmem:[%s160 + $0x94] sm:$0xff]
                %187 = vst [vmem:[%s161 + $0x58] sm:$0xff] %v186
                %v188 = vld [vmem:[%s160 + $0xa8] sm:$0xff]
                %189 = vst [vmem:[%s161 + $0x6c] sm:$0xff] %v188
                %v190 = vld [vmem:[%s160 + $0xbc] sm:$0xff]
                %191 = vst [vmem:[%s161 + $0x80] sm:$0xff] %v190
                %v192 = vld [vmem:[%s160 + $0xd0] sm:$0xff]
                %193 = vst [vmem:[%s161 + $0x94] sm:$0xff] %v192
                %v194 = vld [vmem:[%s160 + $0x118] sm:$0xff]
                %195 = vst [vmem:[%s161 + $0xa0] sm:$0xff] %v194
                %v196 = vld [vmem:[%s160 + $0x12c] sm:$0xff]
                %197 = vst [vmem:[%s161 + $0xb4] sm:$0xff] %v196
                %v198 = vld [vmem:[%s160 + $0x140] sm:$0xff]
                %199 = vst [vmem:[%s161 + $0xc8] sm:$0xff] %v198
                %v200 = vld [vmem:[%s160 + $0x154] sm:$0xff]
                %201 = vst [vmem:[%s161 + $0xdc] sm:$0xff] %v200
                %v202 = vld [vmem:[%s160 + $0x120] sm:$0xff]
                %203 = vst [vmem:[%s161 + $0xa8] sm:$0xff] %v202
                %v204 = vld [vmem:[%s160 + $0x134] sm:$0xff]
                %205 = vst [vmem:[%s161 + $0xbc] sm:$0xff] %v204
                %v206 = vld [vmem:[%s160 + $0x148] sm:$0xff]
                %207 = vst [vmem:[%s161 + $0xd0] sm:$0xff] %v206
                %v208 = vld [vmem:[%s160 + $0x15c] sm:$0xff]
                %209 = vst [vmem:[%s161 + $0xe4] sm:$0xff] %v208
                %v210 = vld [vmem:[%s160 + $0x1a4] sm:$0xff]
                %211 = vst [vmem:[%s161 + $0xf0] sm:$0xff] %v210
                %v212 = vld [vmem:[%s160 + $0x1b8] sm:$0xff]
                %213 = vst [vmem:[%s161 + $0x104] sm:$0xff] %v212
                %v214 = vld [vmem:[%s160 + $0x1cc] sm:$0xff]
                %215 = vst [vmem:[%s161 + $0x118] sm:$0xff] %v214
                %v216 = vld [vmem:[%s160 + $0x1e0] sm:$0xff]
                %217 = vst [vmem:[%s161 + $0x12c] sm:$0xff] %v216
                %v218 = vld [vmem:[%s160 + $0x1ac] sm:$0xff]
                %219 = vst [vmem:[%s161 + $0xf8] sm:$0xff] %v218
                %v220 = vld [vmem:[%s160 + $0x1c0] sm:$0xff]
                %221 = vst [vmem:[%s161 + $0x10c] sm:$0xff] %v220
                %v222 = vld [vmem:[%s160 + $0x1d4] sm:$0xff]
                %223 = vst [vmem:[%s161 + $0x120] sm:$0xff] %v222
                %v224 = vld [vmem:[%s160 + $0x1e8] sm:$0xff]
                %225 = vst [vmem:[%s161 + $0x134] sm:$0xff] %v224
                %s226 = sadd.s32 1, %s159
                %p227 = scmp.ge.s32.totalorder %s226, %s152
                %s228 = scalar_select %p227, 0, %s226
                %s229 = smul.u32 %s228, 80
                %s230 = smul.u32 %s228, 80
                %s231 = scalar_lea.vmem %s144, %s229
                %s232 = scalar_lea.vmem %s134, %s230 [#allocation2]
              $region41: #{cnn_forward.4} parent=35 // loop_footer
                %s156 = sadd.s32 %s154, 1
              $region42: #{cnn_forward.4} parent=35 // loop_footer_branch
                %153 = sbr.rel target = $region38
              $region43: #{cnn_forward.4} parent=35 // loop_exit
                _
              %s233 = sshrl.u32 %s138, 2
              %s234 = sand.u32 %s138, 3
              %s235 = smul.u32 %s233, 4
              %s236 = smul.u32 20, %s235
              %s237 = scalar_lea.vmem %s144, %s236
              %s238 = smul.u32 20, %s235
              %s239 = scalar_lea.vmem %s134, %s238 [#allocation2]
              // While loop
              $region44: #{cnn_forward.4} parent=35 // loop_pre_header
                _
              $region45: #{cnn_forward.4} parent=35 // loop_header
                %s241 = sphi 0, %s243
                %p242 = scmp.ge.s32.totalorder %s241, %s234
                %s246 = sphi 0, %s267
                %s247 = sphi %s237, %s270
                %s248 = sphi %s239, %s271
              $region46: #{cnn_forward.4} parent=35 // loop_header_branch
                %245 = sbr.rel (%p242) target = $region50
              $region47: #{cnn_forward.4} parent=35 // loop_body
                %v249 = vld [vmem:[%s247] sm:$0xff]
                %250 = vst [vmem:[%s248] sm:$0xff] %v249
                %v251 = vld [vmem:[%s247 + $0x8] sm:$0xff]
                %252 = vst [vmem:[%s248 + $0x8] sm:$0xff] %v251
                %v253 = vld [vmem:[%s247 + $0x8c] sm:$0xff]
                %254 = vst [vmem:[%s248 + $0x50] sm:$0xff] %v253
                %v255 = vld [vmem:[%s247 + $0x94] sm:$0xff]
                %256 = vst [vmem:[%s248 + $0x58] sm:$0xff] %v255
                %v257 = vld [vmem:[%s247 + $0x118] sm:$0xff]
                %258 = vst [vmem:[%s248 + $0xa0] sm:$0xff] %v257
                %v259 = vld [vmem:[%s247 + $0x120] sm:$0xff]
                %260 = vst [vmem:[%s248 + $0xa8] sm:$0xff] %v259
                %v261 = vld [vmem:[%s247 + $0x1a4] sm:$0xff]
                %262 = vst [vmem:[%s248 + $0xf0] sm:$0xff] %v261
                %v263 = vld [vmem:[%s247 + $0x1ac] sm:$0xff]
                %264 = vst [vmem:[%s248 + $0xf8] sm:$0xff] %v263
                %s265 = sadd.s32 1, %s246
                %p266 = scmp.ge.s32.totalorder %s265, %s234
                %s267 = scalar_select %p266, 0, %s265
                %s268 = smul.u32 %s267, 20
                %s269 = smul.u32 %s267, 20
                %s270 = scalar_lea.vmem %s237, %s268
                %s271 = scalar_lea.vmem %s239, %s269 [#allocation2]
              $region48: #{cnn_forward.4} parent=35 // loop_footer
                %s243 = sadd.s32 %s241, 1
              $region49: #{cnn_forward.4} parent=35 // loop_footer_branch
                %240 = sbr.rel target = $region45
              $region50: #{cnn_forward.4} parent=35 // loop_exit
                _
              %s273 = sshrl.u32 %s138, 2
              // While loop
              $region51: #{cnn_forward.4} parent=35 // loop_pre_header
                _
              $region52: #{cnn_forward.4} parent=35 // loop_header
                %s275 = sphi 0, %s277
                %p276 = scmp.ge.s32.totalorder %s275, %s273
                %s280 = sphi 0, %s317
                %s281 = sphi %s150, %s320
                %s282 = sphi %s151, %s321
              $region53: #{cnn_forward.4} parent=35 // loop_header_branch
                %279 = sbr.rel (%p276) target = $region57
              $region54: #{cnn_forward.4} parent=35 // loop_body
                %v283 = vld [vmem:[%s281] sm:$0xf]
                %284 = vst [vmem:[%s282] sm:$0xf] %v283
                %v285 = vld [vmem:[%s281 + $0x14] sm:$0xf]
                %286 = vst [vmem:[%s282 + $0x14] sm:$0xf] %v285
                %v287 = vld [vmem:[%s281 + $0x28] sm:$0xf]
                %288 = vst [vmem:[%s282 + $0x28] sm:$0xf] %v287
                %v289 = vld [vmem:[%s281 + $0x3c] sm:$0xf]
                %290 = vst [vmem:[%s282 + $0x3c] sm:$0xf] %v289
                %v291 = vld [vmem:[%s281 + $0x8c] sm:$0xf]
                %292 = vst [vmem:[%s282 + $0x50] sm:$0xf] %v291
                %v293 = vld [vmem:[%s281 + $0xa0] sm:$0xf]
                %294 = vst [vmem:[%s282 + $0x64] sm:$0xf] %v293
                %v295 = vld [vmem:[%s281 + $0xb4] sm:$0xf]
                %296 = vst [vmem:[%s282 + $0x78] sm:$0xf] %v295
                %v297 = vld [vmem:[%s281 + $0xc8] sm:$0xf]
                %298 = vst [vmem:[%s282 + $0x8c] sm:$0xf] %v297
                %v299 = vld [vmem:[%s281 + $0x118] sm:$0xf]
                %300 = vst [vmem:[%s282 + $0xa0] sm:$0xf] %v299
                %v301 = vld [vmem:[%s281 + $0x12c] sm:$0xf]
                %302 = vst [vmem:[%s282 + $0xb4] sm:$0xf] %v301
                %v303 = vld [vmem:[%s281 + $0x140] sm:$0xf]
                %304 = vst [vmem:[%s282 + $0xc8] sm:$0xf] %v303
                %v305 = vld [vmem:[%s281 + $0x154] sm:$0xf]
                %306 = vst [vmem:[%s282 + $0xdc] sm:$0xf] %v305
                %v307 = vld [vmem:[%s281 + $0x1a4] sm:$0xf]
                %308 = vst [vmem:[%s282 + $0xf0] sm:$0xf] %v307
                %v309 = vld [vmem:[%s281 + $0x1b8] sm:$0xf]
                %310 = vst [vmem:[%s282 + $0x104] sm:$0xf] %v309
                %v311 = vld [vmem:[%s281 + $0x1cc] sm:$0xf]
                %312 = vst [vmem:[%s282 + $0x118] sm:$0xf] %v311
                %v313 = vld [vmem:[%s281 + $0x1e0] sm:$0xf]
                %314 = vst [vmem:[%s282 + $0x12c] sm:$0xf] %v313
                %s315 = sadd.s32 1, %s280
                %p316 = scmp.ge.s32.totalorder %s315, %s273
                %s317 = scalar_select %p316, 0, %s315
                %s318 = smul.u32 %s317, 80
                %s319 = smul.u32 %s317, 80
                %s320 = scalar_lea.vmem %s150, %s318
                %s321 = scalar_lea.vmem %s151, %s319 [#allocation2]
              $region55: #{cnn_forward.4} parent=35 // loop_footer
                %s277 = sadd.s32 %s275, 1
              $region56: #{cnn_forward.4} parent=35 // loop_footer_branch
                %274 = sbr.rel target = $region52
              $region57: #{cnn_forward.4} parent=35 // loop_exit
                _
              %s322 = sshrl.u32 %s138, 2
              %s323 = sand.u32 %s138, 3
              %s324 = smul.u32 %s322, 4
              %s325 = smul.u32 20, %s324
              %s326 = scalar_lea.vmem %s150, %s325
              %s327 = smul.u32 20, %s324
              %s328 = scalar_lea.vmem %s151, %s327 [#allocation2]
              // While loop
              $region58: #{cnn_forward.4} parent=35 // loop_pre_header
                _
              $region59: #{cnn_forward.4} parent=35 // loop_header
                %s330 = sphi 0, %s332
                %p331 = scmp.ge.s32.totalorder %s330, %s323
                %s335 = sphi 0, %s348
                %s336 = sphi %s326, %s351
                %s337 = sphi %s328, %s352
              $region60: #{cnn_forward.4} parent=35 // loop_header_branch
                %334 = sbr.rel (%p331) target = $region64
              $region61: #{cnn_forward.4} parent=35 // loop_body
                %v338 = vld [vmem:[%s336] sm:$0xf]
                %339 = vst [vmem:[%s337] sm:$0xf] %v338
                %v340 = vld [vmem:[%s336 + $0x8c] sm:$0xf]
                %341 = vst [vmem:[%s337 + $0x50] sm:$0xf] %v340
                %v342 = vld [vmem:[%s336 + $0x118] sm:$0xf]
                %343 = vst [vmem:[%s337 + $0xa0] sm:$0xf] %v342
                %v344 = vld [vmem:[%s336 + $0x1a4] sm:$0xf]
                %345 = vst [vmem:[%s337 + $0xf0] sm:$0xf] %v344
                %s346 = sadd.s32 1, %s335
                %p347 = scmp.ge.s32.totalorder %s346, %s323
                %s348 = scalar_select %p347, 0, %s346
                %s349 = smul.u32 %s348, 20
                %s350 = smul.u32 %s348, 20
                %s351 = scalar_lea.vmem %s326, %s349
                %s352 = scalar_lea.vmem %s328, %s350 [#allocation2]
              $region62: #{cnn_forward.4} parent=35 // loop_footer
                %s332 = sadd.s32 %s330, 1
              $region63: #{cnn_forward.4} parent=35 // loop_footer_branch
                %329 = sbr.rel target = $region59
              $region64: #{cnn_forward.4} parent=35 // loop_exit
                _
            $region36: #{cnn_forward.4} parent=31 // pred_fallthru
              _
          $region32: #{cnn_forward.4} parent=27 // pred_fallthru
            _
          %353 = vnop
        $region28: #{cnn_forward.4} parent=23 // pred_fallthru
          _
      $region24: #{cnn_forward.4} parent=5 // pred_fallthru
        _
      %p354 = scmp.le.s32.totalorder 1, %s9
      %p355 = scmp.lt.s32.totalorder %s9, 3
      %p356 = pnand %p354, %p355
      %p357 = pneg %p356
      // Predicated region
      $region65: #{cnn_forward.4} parent=5 // pred_check
        _
      $region66: #{cnn_forward.4} parent=5 // pred_check_branch
        %359 = sbr.rel (%p356) target = $region68
      $region67: #{cnn_forward.4} parent=5 // pred_region
        %s360 = ssub.s32 %s9, 1
        %s361 = sand.u32 %s22, 1
        %s362 = sand.u32 %s22, 1
        %s363 = smul.addr %s362, 320
        %s364 = scalar_lea.vmem [#allocation2], %s363
        // Predicated region
        $region69: #{cnn_forward.4} parent=67 // pred_check
          %p365 = pneg %p35
        $region70: #{cnn_forward.4} parent=67 // pred_check_branch
          %367 = sbr.rel (%p365) target = $region72
        $region71: #{cnn_forward.4} parent=67 // pred_region
          _
        $region72: #{cnn_forward.4} parent=67 // pred_fallthru
          _
        %s368 = sand.u32 %s22, 1
        %s369 = sand.u32 %s22, 1
        %s370 = smul.addr %s369, 320
        %s371 = scalar_lea.vmem [#allocation2], %s370
        %p372 = pneg %p35
        %p373 = pneg %p32
        %p374 = pneg %p56
        %p375 = pneg %p53
        %p376 = pneg %p77
        %p377 = pneg %p74
        %p378 = pneg %p103
        %p379 = pneg %p100
        %s380 = sand.u32 %s90, 1
        %s381 = sand.u32 %s90, 1
        %s382 = smul.addr %s381, 16
        %s383 = scalar_lea.vmem [#allocation3], %s382
        %s384 = smul.u32 4, %s14
        %s385 = ssub.s32 7, %s384
        %p386 = scmp.lt.s32.totalorder %s385, 4
        %s387 = scalar_select %p386, %s385, 4
        %s388 = smul.u32 256, %s387
        %s389 = smul.u32 %s388, 5
        %s390 = smul.u32 4, %s14
        %s391 = ssub.s32 7, %s390
        %p392 = scmp.lt.s32.totalorder %s391, 4
        %s393 = scalar_select %p392, %s391, 4
        %s394 = smul.u32 64, %s393
        %v396 = vld [vmem:[%s1] sm:$0xf]
        %v397 = vld [vmem:[%s1 + $0x4] sm:$0xf]
        %v398 = vld [vmem:[%s1 + $0x8] sm:$0xf]
        %v399 = vld [vmem:[%s1 + $0xc] sm:$0xf]
        %v400 = vld [vmem:[%s1 + $0x10] sm:$0xf]
        %v401 = vld [vmem:[%s1 + $0x14] sm:$0xf]
        %v402 = vld [vmem:[%s1 + $0x18] sm:$0xf]
        %v403 = vld [vmem:[%s1 + $0x1c] sm:$0xf]
        %v404 = vld [vmem:[%s1 + $0x20] sm:$0xf]
        %v405 = vld [vmem:[%s1 + $0x24] sm:$0xf]
        %v406 = vld [vmem:[%s1 + $0x28] sm:$0xf]
        %v407 = vld [vmem:[%s1 + $0x2c] sm:$0xf]
        %v408 = vld [vmem:[%s1 + $0x30] sm:$0xf]
        %v409 = vld [vmem:[%s1 + $0x34] sm:$0xf]
        %v410 = vld [vmem:[%s1 + $0x38] sm:$0xf]
        %v411 = vld [vmem:[%s1 + $0x3c] sm:$0xf]
        %v412 = vld [vmem:[%s1 + $0x40] sm:$0xf]
        %v413 = vld [vmem:[%s1 + $0x44] sm:$0xf]
        %v414 = vld [vmem:[%s1 + $0x48] sm:$0xf]
        %v415 = vld [vmem:[%s1 + $0x4c] sm:$0xf]
        %v416 = vld [vmem:[%s1 + $0x50] sm:$0xf]
        %v417 = vld [vmem:[%s1 + $0x54] sm:$0xf]
        %v418 = vld [vmem:[%s1 + $0x58] sm:$0xf]
        %v419 = vld [vmem:[%s1 + $0x5c] sm:$0xf]
        %v420 = vld [vmem:[%s1 + $0x60] sm:$0xf]
        %v421 = vld [vmem:[%s1 + $0x64] sm:$0xf]
        %v422 = vld [vmem:[%s1 + $0x68] sm:$0xf]
        %v423 = vld [vmem:[%s1 + $0x6c] sm:$0xf]
        %v424 = vld [vmem:[%s1 + $0x70] sm:$0xf]
        %v425 = vld [vmem:[%s1 + $0x74] sm:$0xf]
        %v426 = vld [vmem:[%s1 + $0x78] sm:$0xf]
        %v427 = vld [vmem:[%s1 + $0x7c] sm:$0xf]
        %v428 = vld [vmem:[%s1 + $0x80] sm:$0xf]
        %v429 = vld [vmem:[%s1 + $0x84] sm:$0xf]
        %v430 = vld [vmem:[%s1 + $0x88] sm:$0xf]
        %v431 = vld [vmem:[%s1 + $0x8c] sm:$0xf]
        %v432 = vld [vmem:[%s1 + $0x90] sm:$0xf]
        %v433 = vld [vmem:[%s1 + $0x94] sm:$0xf]
        %v434 = vld [vmem:[%s1 + $0x98] sm:$0xf]
        %v435 = vld [vmem:[%s1 + $0x9c] sm:$0xf]
        %v436 = vld [vmem:[%s1 + $0xa0] sm:$0xf]
        %v437 = vld [vmem:[%s1 + $0xa4] sm:$0xf]
        %v438 = vld [vmem:[%s1 + $0xa8] sm:$0xf]
        %v439 = vld [vmem:[%s1 + $0xac] sm:$0xf]
        %v440 = vld [vmem:[%s1 + $0xb0] sm:$0xf]
        %v441 = vld [vmem:[%s1 + $0xb4] sm:$0xf]
        %v442 = vld [vmem:[%s1 + $0xb8] sm:$0xf]
        %v443 = vld [vmem:[%s1 + $0xbc] sm:$0xf]
        %v444 = vld [vmem:[%s1 + $0xc0] sm:$0xf]
        %v445 = vld [vmem:[%s1 + $0xc4] sm:$0xf]
        %v446 = vld [vmem:[%s1 + $0xc8] sm:$0xf]
        %v447 = vld [vmem:[%s1 + $0xcc] sm:$0xf]
        %v448 = vld [vmem:[%s1 + $0xd0] sm:$0xf]
        %v449 = vld [vmem:[%s1 + $0xd4] sm:$0xf]
        %v450 = vld [vmem:[%s1 + $0xd8] sm:$0xf]
        %v451 = vld [vmem:[%s1 + $0xdc] sm:$0xf]
        %v452 = vld [vmem:[%s1 + $0xe0] sm:$0xf]
        %v453 = vld [vmem:[%s1 + $0xe4] sm:$0xf]
        %v454 = vld [vmem:[%s1 + $0xe8] sm:$0xf]
        %v455 = vld [vmem:[%s1 + $0xec] sm:$0xf]
        %v456 = vld [vmem:[%s1 + $0xf0] sm:$0xf]
        %v457 = vld [vmem:[%s1 + $0xf4] sm:$0xf]
        %v458 = vld [vmem:[%s1 + $0xf8] sm:$0xf]
        %v459 = vld [vmem:[%s1 + $0xfc] sm:$0xf]
        %v460 = vld [vmem:[%s1 + $0x100] sm:$0xf]
        %v461 = vld [vmem:[%s1 + $0x104] sm:$0xf]
        %v462 = vld [vmem:[%s1 + $0x108] sm:$0xf]
        %v463 = vld [vmem:[%s1 + $0x10c] sm:$0xf]
        %v464 = vld [vmem:[%s1 + $0x110] sm:$0xf]
        %v465 = vld [vmem:[%s1 + $0x114] sm:$0xf]
        %v466 = vld [vmem:[%s1 + $0x118] sm:$0xf]
        %v467 = vld [vmem:[%s1 + $0x11c] sm:$0xf]
        %v468 = vld [vmem:[%s364] sm:$0xff]
        %v469 = vld [vmem:[%s364 + $0x8] sm:$0xff]
        %v470 = vld [vmem:[%s364 + $0x10] sm:$0xf]
        %v471 = vld [vmem:[%s364 + $0x14] sm:$0xff]
        %v472 = vld [vmem:[%s364 + $0x1c] sm:$0xff]
        %v473 = vld [vmem:[%s364 + $0x24] sm:$0xf]
        %v474 = vld [vmem:[%s364 + $0x28] sm:$0xff]
        %v475 = vld [vmem:[%s364 + $0x30] sm:$0xff]
        %v476 = vld [vmem:[%s364 + $0x38] sm:$0xf]
        %v477 = vld [vmem:[%s364 + $0x3c] sm:$0xff]
        %v478 = vld [vmem:[%s364 + $0x44] sm:$0xff]
        %v479 = vld [vmem:[%s364 + $0x4c] sm:$0xf]
        %v492 = vunpack.c.l.b16 %v468
        %v493 = vunpack.c.h.b16 %v468
        %v494 = vunpack.c.l.b16 %v469
        %v495 = vunpack.c.h.b16 %v469
        %v496 = vunpack.c.l.b16 %v470
        %v497 = vunpack.c.l.b16 %v471
        %v498 = vunpack.c.h.b16 %v471
        %v499 = vunpack.c.l.b16 %v472
        %v500 = vunpack.c.h.b16 %v472
        %v501 = vunpack.c.l.b16 %v473
        %v502 = vunpack.c.l.b16 %v474
        %v503 = vunpack.c.h.b16 %v474
        %v504 = vunpack.c.l.b16 %v475
        %v505 = vunpack.c.h.b16 %v475
        %v506 = vunpack.c.l.b16 %v476
        %v507 = vunpack.c.l.b16 %v477
        %v508 = vunpack.c.h.b16 %v477
        %v509 = vunpack.c.l.b16 %v478
        %v510 = vunpack.c.h.b16 %v478
        %v511 = vunpack.c.l.b16 %v479
        %v512 = vpack.c.b16 %v497, %v492
        %v513 = vpack.c.b16 %v498, %v493
        %v514 = vpack.c.b16 %v499, %v494
        %v515 = vpack.c.b16 %v500, %v495
        %v516 = vpack.c.b16 %v501, %v496
        %v517 = vpack.c.b16 %v507, %v502
        %v518 = vpack.c.b16 %v508, %v503
        %v519 = vpack.c.b16 %v509, %v504
        %v520 = vpack.c.b16 %v510, %v505
        %v521 = vpack.c.b16 %v511, %v506
        %v602 = vunpack.c.l.b16 %v396
        %v603 = vunpack.c.l.b16 %v397
        %v604 = vunpack.c.l.b16 %v398
        %v605 = vunpack.c.l.b16 %v399
        %v606 = vunpack.c.l.b16 %v400
        %v607 = vunpack.c.l.b16 %v401
        %v608 = vunpack.c.l.b16 %v402
        %v609 = vunpack.c.l.b16 %v403
        %v610 = vunpack.c.l.b16 %v404
        %v611 = vunpack.c.l.b16 %v405
        %v612 = vunpack.c.l.b16 %v406
        %v613 = vunpack.c.l.b16 %v407
        %v614 = vunpack.c.l.b16 %v408
        %v615 = vunpack.c.l.b16 %v409
        %v616 = vunpack.c.l.b16 %v410
        %v617 = vunpack.c.l.b16 %v411
        %v618 = vunpack.c.l.b16 %v412
        %v619 = vunpack.c.l.b16 %v413
        %v620 = vunpack.c.l.b16 %v414
        %v621 = vunpack.c.l.b16 %v415
        %v622 = vunpack.c.l.b16 %v416
        %v623 = vunpack.c.l.b16 %v417
        %v624 = vunpack.c.l.b16 %v418
        %v625 = vunpack.c.l.b16 %v419
        %v626 = vunpack.c.l.b16 %v420
        %v627 = vunpack.c.l.b16 %v421
        %v628 = vunpack.c.l.b16 %v422
        %v629 = vunpack.c.l.b16 %v423
        %v630 = vunpack.c.l.b16 %v424
        %v631 = vunpack.c.l.b16 %v425
        %v632 = vunpack.c.l.b16 %v426
        %v633 = vunpack.c.l.b16 %v427
        %v634 = vunpack.c.l.b16 %v428
        %v635 = vunpack.c.l.b16 %v429
        %v636 = vunpack.c.l.b16 %v430
        %v637 = vunpack.c.l.b16 %v431
        %v638 = vunpack.c.l.b16 %v432
        %v639 = vunpack.c.l.b16 %v433
        %v640 = vunpack.c.l.b16 %v434
        %v641 = vunpack.c.l.b16 %v435
        %v642 = vunpack.c.l.b16 %v436
        %v643 = vunpack.c.l.b16 %v437
        %v644 = vunpack.c.l.b16 %v438
        %v645 = vunpack.c.l.b16 %v439
        %v646 = vunpack.c.l.b16 %v440
        %v647 = vunpack.c.l.b16 %v441
        %v648 = vunpack.c.l.b16 %v442
        %v649 = vunpack.c.l.b16 %v443
        %v650 = vunpack.c.l.b16 %v444
        %v651 = vunpack.c.l.b16 %v445
        %v652 = vunpack.c.l.b16 %v446
        %v653 = vunpack.c.l.b16 %v447
        %v654 = vunpack.c.l.b16 %v448
        %v655 = vunpack.c.l.b16 %v449
        %v656 = vunpack.c.l.b16 %v450
        %v657 = vunpack.c.l.b16 %v451
        %v658 = vunpack.c.l.b16 %v452
        %v659 = vunpack.c.l.b16 %v453
        %v660 = vunpack.c.l.b16 %v454
        %v661 = vunpack.c.l.b16 %v455
        %v662 = vunpack.c.l.b16 %v456
        %v663 = vunpack.c.l.b16 %v457
        %v664 = vunpack.c.l.b16 %v458
        %v665 = vunpack.c.l.b16 %v459
        %v666 = vunpack.c.l.b16 %v460
        %v667 = vunpack.c.l.b16 %v461
        %v668 = vunpack.c.l.b16 %v462
        %v669 = vunpack.c.l.b16 %v463
        %v670 = vunpack.c.l.b16 %v464
        %v671 = vunpack.c.l.b16 %v465
        %v672 = vunpack.c.l.b16 %v466
        %v673 = vunpack.c.l.b16 %v467
        %v674 = vpack.c.b16 %v603, %v602
        %v675 = vpack.c.b16 %v605, %v604
        %v676 = vpack.c.b16 %v607, %v606
        %v677 = vpack.c.b16 %v609, %v608
        %v678 = vpack.c.b16 %v611, %v610
        %v679 = vpack.c.b16 %v613, %v612
        %v680 = vpack.c.b16 %v615, %v614
        %v681 = vpack.c.b16 %v617, %v616
        %v682 = vpack.c.b16 %v619, %v618
        %v683 = vpack.c.b16 %v621, %v620
        %v684 = vpack.c.b16 %v623, %v622
        %v685 = vpack.c.b16 %v625, %v624
        %v686 = vpack.c.b16 %v627, %v626
        %v687 = vpack.c.b16 %v629, %v628
        %v688 = vpack.c.b16 %v631, %v630
        %v689 = vpack.c.b16 %v633, %v632
        %v690 = vpack.c.b16 %v635, %v634
        %v691 = vpack.c.b16 %v637, %v636
        %v692 = vpack.c.b16 %v639, %v638
        %v693 = vpack.c.b16 %v641, %v640
        %v694 = vpack.c.b16 %v643, %v642
        %v695 = vpack.c.b16 %v645, %v644
        %v696 = vpack.c.b16 %v647, %v646
        %v697 = vpack.c.b16 %v649, %v648
        %v698 = vpack.c.b16 %v651, %v650
        %v699 = vpack.c.b16 %v653, %v652
        %v700 = vpack.c.b16 %v655, %v654
        %v701 = vpack.c.b16 %v657, %v656
        %v702 = vpack.c.b16 %v659, %v658
        %v703 = vpack.c.b16 %v661, %v660
        %v704 = vpack.c.b16 %v663, %v662
        %v705 = vpack.c.b16 %v665, %v664
        %v706 = vpack.c.b16 %v667, %v666
        %v707 = vpack.c.b16 %v669, %v668
        %v708 = vpack.c.b16 %v671, %v670
        %v709 = vpack.c.b16 %v673, %v672
        %vm746 = vcmask 523264
        %v748 = vsel %vm746, %v516, 0
        %v751 = vsel %vm746, %v521, 0
        %753 = vmatprep.subr.bf16.mxu0 0
        %754 = vmatpush1.bf16.msra.mxu0 %v674
        %755 = vmatprep.subr.bf16.mxu0 0
        %756 = vmatpush1.bf16.msra.mxu0 %v675
        %757 = vmatprep.subr.bf16.mxu0 0
        %758 = vmatpush1.bf16.msra.mxu0 %v676
        %759 = vmatprep.subr.bf16.mxu0 0
        %760 = vmatpush1.bf16.msra.mxu0 %v677
        %761 = vmatprep.subr.bf16.mxu0 0
        %762 = vmatpush1.bf16.msra.mxu0 %v678
        %763 = vmatprep.subr.bf16.mxu0 0
        %764 = vmatpush1.bf16.msra.mxu0 %v679
        %765 = vmatprep.subr.bf16.mxu0 0
        %766 = vmatpush1.bf16.msra.mxu0 %v680
        %767 = vmatprep.subr.bf16.mxu0 0
        %768 = vmatpush1.bf16.msra.mxu0 %v681
        %769 = vmatprep.subr.bf16.mxu0 0
        %770 = vmatpush1.bf16.msra.mxu0 %v682
        %771 = vmatprep.subr.bf16.mxu0 0
        %772 = vmatpush1.bf16.msra.mxu0 %v683
        %773 = vmatprep.subr.bf16.mxu0 0
        %774 = vmatpush1.bf16.msra.mxu0 %v684
        %775 = vmatprep.subr.bf16.mxu0 0
        %776 = vmatpush1.bf16.msra.mxu0 %v685
        %777 = vmatprep.subr.bf16.mxu0 0
        %778 = vmatpush1.bf16.msra.mxu0 %v686
        %779 = vmatprep.subr.bf16.mxu0 0
        %780 = vmatpush1.bf16.msra.mxu0 %v687
        %781 = vmatprep.subr.bf16.mxu0 0
        %782 = vmatpush1.bf16.msra.mxu0 %v688
        %783 = vmatprep.subr.bf16.mxu0 0
        %784 = vmatpush1.bf16.msra.mxu0 %v689
        %785 = vmatprep.mubr.bf16.mxu0 %v513
        %786 = vmatmul.mubr.bf16.gmra.mrb[0].mxu0 %v512
        %v787 = vpop.f32.mrb[0].mxu0
        %v788 = vadd.f32 0.0, %v787
        %v789 = vpop.f32.mrb[0].mxu0
        %v790 = vpop.f32.mrb[0].mxu0
        %v791 = vadd.f32 0.0, %v790
        %v792 = vpop.f32.mrb[0].mxu0
        %793 = vmatprep.mubr.bf16.mxu0 %v518
        %794 = vmatmul.mubr.bf16.gmra.mrb[0].mxu0 %v517
        %v795 = vpop.f32.mrb[0].mxu0
        %v796 = vadd.f32 0.0, %v795
        %v797 = vpop.f32.mrb[0].mxu0
        %v798 = vpop.f32.mrb[0].mxu0
        %v799 = vadd.f32 0.0, %v798
        %v800 = vpop.f32.mrb[0].mxu0
        %801 = vdwg.mxu0
        %802 = vmatprep.subr.bf16.mxu0 0
        %803 = vmatpush1.bf16.msra.mxu0 %v690
        %804 = vmatprep.subr.bf16.mxu0 0
        %805 = vmatpush1.bf16.msra.mxu0 %v691
        %806 = vmatprep.subr.bf16.mxu0 0
        %807 = vmatpush1.bf16.msra.mxu0 %v692
        %808 = vmatprep.subr.bf16.mxu0 0
        %809 = vmatpush1.bf16.msra.mxu0 %v693
        %810 = vmatprep.subr.bf16.mxu0 0
        %811 = vmatpush1.bf16.msra.mxu0 %v694
        %812 = vmatprep.subr.bf16.mxu0 0
        %813 = vmatpush1.bf16.msra.mxu0 %v695
        %814 = vmatprep.subr.bf16.mxu0 0
        %815 = vmatpush1.bf16.msra.mxu0 %v696
        %816 = vmatprep.subr.bf16.mxu0 0
        %817 = vmatpush1.bf16.msra.mxu0 %v697
        %818 = vmatprep.subr.bf16.mxu0 0
        %819 = vmatpush1.bf16.msra.mxu0 %v698
        %820 = vmatprep.subr.bf16.mxu0 0
        %821 = vmatpush1.bf16.msra.mxu0 %v699
        %822 = vmatprep.subr.bf16.mxu0 0
        %823 = vmatpush1.bf16.msra.mxu0 %v700
        %824 = vmatprep.subr.bf16.mxu0 0
        %825 = vmatpush1.bf16.msra.mxu0 %v701
        %826 = vmatprep.subr.bf16.mxu0 0
        %827 = vmatpush1.bf16.msra.mxu0 %v702
        %828 = vmatprep.subr.bf16.mxu0 0
        %829 = vmatpush1.bf16.msra.mxu0 %v703
        %830 = vmatprep.subr.bf16.mxu0 0
        %831 = vmatpush1.bf16.msra.mxu0 %v704
        %832 = vmatprep.subr.bf16.mxu0 0
        %833 = vmatpush1.bf16.msra.mxu0 %v705
        %834 = vmatprep.mubr.bf16.mxu0 %v515
        %835 = vmatmul.mubr.bf16.gmra.mrb[0].mxu0 %v514
        %v836 = vpop.f32.mrb[0].mxu0
        %v837 = vadd.f32 %v788, %v836
        %v838 = vpop.f32.mrb[0].mxu0
        %v839 = vpop.f32.mrb[0].mxu0
        %v840 = vadd.f32 %v791, %v839
        %v841 = vpop.f32.mrb[0].mxu0
        %842 = vmatprep.mubr.bf16.mxu0 %v520
        %843 = vmatmul.mubr.bf16.gmra.mrb[0].mxu0 %v519
        %v844 = vpop.f32.mrb[0].mxu0
        %v845 = vadd.f32 %v796, %v844
        %v846 = vpop.f32.mrb[0].mxu0
        %v847 = vpop.f32.mrb[0].mxu0
        %v848 = vadd.f32 %v799, %v847
        %v849 = vpop.f32.mrb[0].mxu0
        %850 = vdwg.mxu0
        %851 = vmatprep.subr.bf16.mxu0 0
        %852 = vmatpush1.bf16.msra.mxu0 %v706
        %853 = vmatprep.subr.bf16.mxu0 0
        %854 = vmatpush1.bf16.msra.mxu0 %v707
        %855 = vmatprep.subr.bf16.mxu0 0
        %856 = vmatpush1.bf16.msra.mxu0 %v708
        %857 = vmatprep.subr.bf16.mxu0 0
        %858 = vmatpush1.bf16.msra.mxu0 %v709
        %859 = vmatprep.subr.bf16.mxu0 0
        %860 = vmatpush1.bf16.msra.mxu0 0
        %861 = vmatprep.subr.bf16.mxu0 0
        %862 = vmatpush1.bf16.msra.mxu0 0
        %863 = vmatprep.subr.bf16.mxu0 0
        %864 = vmatpush1.bf16.msra.mxu0 0
        %865 = vmatprep.subr.bf16.mxu0 0
        %866 = vmatpush1.bf16.msra.mxu0 0
        %867 = vmatprep.subr.bf16.mxu0 0
        %868 = vmatpush1.bf16.msra.mxu0 0
        %869 = vmatprep.subr.bf16.mxu0 0
        %870 = vmatpush1.bf16.msra.mxu0 0
        %871 = vmatprep.subr.bf16.mxu0 0
        %872 = vmatpush1.bf16.msra.mxu0 0
        %873 = vmatprep.subr.bf16.mxu0 0
        %874 = vmatpush1.bf16.msra.mxu0 0
        %875 = vmatprep.subr.bf16.mxu0 0
        %876 = vmatpush1.bf16.msra.mxu0 0
        %877 = vmatprep.subr.bf16.mxu0 0
        %878 = vmatpush1.bf16.msra.mxu0 0
        %879 = vmatprep.subr.bf16.mxu0 0
        %880 = vmatpush1.bf16.msra.mxu0 0
        %881 = vmatprep.subr.bf16.mxu0 0
        %882 = vmatpush1.bf16.msra.mxu0 0
        %883 = vmatprep.mubr.bf16.mxu0 0
        %884 = vmatmul.mubr.bf16.gmra.mrb[0].mxu0 %v748
        %v885 = vpop.f32.mrb[0].mxu0
        %v886 = vadd.f32 %v837, %v885
        %v887 = vpop.f32.mrb[0].mxu0
        %v888 = vpop.f32.mrb[0].mxu0
        %v889 = vadd.f32 %v840, %v888
        %v890 = vpop.f32.mrb[0].mxu0
        %891 = vmatprep.mubr.bf16.mxu0 0
        %892 = vmatmul.mubr.bf16.gmra.mrb[0].mxu0 %v751
        %v893 = vpop.f32.mrb[0].mxu0
        %v894 = vadd.f32 %v845, %v893
        %v895 = vpop.f32.mrb[0].mxu0
        %v896 = vpop.f32.mrb[0].mxu0
        %v897 = vadd.f32 %v848, %v896
        %v898 = vpop.f32.mrb[0].mxu0
        %899 = vdwg.mxu0
        %s900 = scalar_lea.vmem %s364, 80 [#allocation2]
        %v901 = vld [vmem:[%s900] sm:$0xff]
        %v902 = vld [vmem:[%s900 + $0x8] sm:$0xff]
        %v903 = vld [vmem:[%s900 + $0x10] sm:$0xf]
        %v904 = vld [vmem:[%s900 + $0x14] sm:$0xff]
        %v905 = vld [vmem:[%s900 + $0x1c] sm:$0xff]
        %v906 = vld [vmem:[%s900 + $0x24] sm:$0xf]
        %v907 = vld [vmem:[%s900 + $0x28] sm:$0xff]
        %v908 = vld [vmem:[%s900 + $0x30] sm:$0xff]
        %v909 = vld [vmem:[%s900 + $0x38] sm:$0xf]
        %v910 = vld [vmem:[%s900 + $0x3c] sm:$0xff]
        %v911 = vld [vmem:[%s900 + $0x44] sm:$0xff]
        %v912 = vld [vmem:[%s900 + $0x4c] sm:$0xf]
        %v925 = vunpack.c.l.b16 %v901
        %v926 = vunpack.c.h.b16 %v901
        %v927 = vunpack.c.l.b16 %v902
        %v928 = vunpack.c.h.b16 %v902
        %v929 = vunpack.c.l.b16 %v903
        %v930 = vunpack.c.l.b16 %v904
        %v931 = vunpack.c.h.b16 %v904
        %v932 = vunpack.c.l.b16 %v905
        %v933 = vunpack.c.h.b16 %v905
        %v934 = vunpack.c.l.b16 %v906
        %v935 = vunpack.c.l.b16 %v907
        %v936 = vunpack.c.h.b16 %v907
        %v937 = vunpack.c.l.b16 %v908
        %v938 = vunpack.c.h.b16 %v908
        %v939 = vunpack.c.l.b16 %v909
        %v940 = vunpack.c.l.b16 %v910
        %v941 = vunpack.c.h.b16 %v910
        %v942 = vunpack.c.l.b16 %v911
        %v943 = vunpack.c.h.b16 %v911
        %v944 = vunpack.c.l.b16 %v912
        %v945 = vpack.c.b16 %v930, %v925
        %v946 = vpack.c.b16 %v931, %v926
        %v947 = vpack.c.b16 %v932, %v927
        %v948 = vpack.c.b16 %v933, %v928
        %v949 = vpack.c.b16 %v934, %v929
        %v950 = vpack.c.b16 %v940, %v935
        %v951 = vpack.c.b16 %v941, %v936
        %v952 = vpack.c.b16 %v942, %v937
        %v953 = vpack.c.b16 %v943, %v938
        %v954 = vpack.c.b16 %v944, %v939
        %v964 = vsel %vm746, %v949, 0
        %v967 = vsel %vm746, %v954, 0
        %969 = vmatprep.subr.bf16.mxu0 0
        %970 = vmatpush1.bf16.msra.mxu0 %v674
        %971 = vmatprep.subr.bf16.mxu0 0
        %972 = vmatpush1.bf16.msra.mxu0 %v675
        %973 = vmatprep.subr.bf16.mxu0 0
        %974 = vmatpush1.bf16.msra.mxu0 %v676
        %975 = vmatprep.subr.bf16.mxu0 0
        %976 = vmatpush1.bf16.msra.mxu0 %v677
        %977 = vmatprep.subr.bf16.mxu0 0
        %978 = vmatpush1.bf16.msra.mxu0 %v678
        %979 = vmatprep.subr.bf16.mxu0 0
        %980 = vmatpush1.bf16.msra.mxu0 %v679
        %981 = vmatprep.subr.bf16.mxu0 0
        %982 = vmatpush1.bf16.msra.mxu0 %v680
        %983 = vmatprep.subr.bf16.mxu0 0
        %984 = vmatpush1.bf16.msra.mxu0 %v681
        %985 = vmatprep.subr.bf16.mxu0 0
        %986 = vmatpush1.bf16.msra.mxu0 %v682
        %987 = vmatprep.subr.bf16.mxu0 0
        %988 = vmatpush1.bf16.msra.mxu0 %v683
        %989 = vmatprep.subr.bf16.mxu0 0
        %990 = vmatpush1.bf16.msra.mxu0 %v684
        %991 = vmatprep.subr.bf16.mxu0 0
        %992 = vmatpush1.bf16.msra.mxu0 %v685
        %993 = vmatprep.subr.bf16.mxu0 0
        %994 = vmatpush1.bf16.msra.mxu0 %v686
        %995 = vmatprep.subr.bf16.mxu0 0
        %996 = vmatpush1.bf16.msra.mxu0 %v687
        %997 = vmatprep.subr.bf16.mxu0 0
        %998 = vmatpush1.bf16.msra.mxu0 %v688
        %999 = vmatprep.subr.bf16.mxu0 0
        %1000 = vmatpush1.bf16.msra.mxu0 %v689
        %1001 = vmatprep.mubr.bf16.mxu0 %v946
        %1002 = vmatmul.mubr.bf16.gmra.mrb[0].mxu0 %v945
        %v1003 = vpop.f32.mrb[0].mxu0
        %v1004 = vadd.f32 0.0, %v1003
        %v1005 = vpop.f32.mrb[0].mxu0
        %v1006 = vpop.f32.mrb[0].mxu0
        %v1007 = vadd.f32 0.0, %v1006
        %v1008 = vpop.f32.mrb[0].mxu0
        %1009 = vmatprep.mubr.bf16.mxu0 %v951
        %1010 = vmatmul.mubr.bf16.gmra.mrb[0].mxu0 %v950
        %v1011 = vpop.f32.mrb[0].mxu0
        %v1012 = vadd.f32 0.0, %v1011
        %v1013 = vpop.f32.mrb[0].mxu0
        %v1014 = vpop.f32.mrb[0].mxu0
        %v1015 = vadd.f32 0.0, %v1014
        %v1016 = vpop.f32.mrb[0].mxu0
        %1017 = vdwg.mxu0
        %1018 = vmatprep.subr.bf16.mxu0 0
        %1019 = vmatpush1.bf16.msra.mxu0 %v690
        %1020 = vmatprep.subr.bf16.mxu0 0
        %1021 = vmatpush1.bf16.msra.mxu0 %v691
        %1022 = vmatprep.subr.bf16.mxu0 0
        %1023 = vmatpush1.bf16.msra.mxu0 %v692
        %1024 = vmatprep.subr.bf16.mxu0 0
        %1025 = vmatpush1.bf16.msra.mxu0 %v693
        %1026 = vmatprep.subr.bf16.mxu0 0
        %1027 = vmatpush1.bf16.msra.mxu0 %v694
        %1028 = vmatprep.subr.bf16.mxu0 0
        %1029 = vmatpush1.bf16.msra.mxu0 %v695
        %1030 = vmatprep.subr.bf16.mxu0 0
        %1031 = vmatpush1.bf16.msra.mxu0 %v696
        %1032 = vmatprep.subr.bf16.mxu0 0
        %1033 = vmatpush1.bf16.msra.mxu0 %v697
        %1034 = vmatprep.subr.bf16.mxu0 0
        %1035 = vmatpush1.bf16.msra.mxu0 %v698
        %1036 = vmatprep.subr.bf16.mxu0 0
        %1037 = vmatpush1.bf16.msra.mxu0 %v699
        %1038 = vmatprep.subr.bf16.mxu0 0
        %1039 = vmatpush1.bf16.msra.mxu0 %v700
        %1040 = vmatprep.subr.bf16.mxu0 0
        %1041 = vmatpush1.bf16.msra.mxu0 %v701
        %1042 = vmatprep.subr.bf16.mxu0 0
        %1043 = vmatpush1.bf16.msra.mxu0 %v702
        %1044 = vmatprep.subr.bf16.mxu0 0
        %1045 = vmatpush1.bf16.msra.mxu0 %v703
        %1046 = vmatprep.subr.bf16.mxu0 0
        %1047 = vmatpush1.bf16.msra.mxu0 %v704
        %1048 = vmatprep.subr.bf16.mxu0 0
        %1049 = vmatpush1.bf16.msra.mxu0 %v705
        %1050 = vmatprep.mubr.bf16.mxu0 %v948
        %1051 = vmatmul.mubr.bf16.gmra.mrb[0].mxu0 %v947
        %v1052 = vpop.f32.mrb[0].mxu0
        %v1053 = vadd.f32 %v1004, %v1052
        %v1054 = vpop.f32.mrb[0].mxu0
        %v1055 = vpop.f32.mrb[0].mxu0
        %v1056 = vadd.f32 %v1007, %v1055
        %v1057 = vpop.f32.mrb[0].mxu0
        %1058 = vmatprep.mubr.bf16.mxu0 %v953
        %1059 = vmatmul.mubr.bf16.gmra.mrb[0].mxu0 %v952
        %v1060 = vpop.f32.mrb[0].mxu0
        %v1061 = vadd.f32 %v1012, %v1060
        %v1062 = vpop.f32.mrb[0].mxu0
        %v1063 = vpop.f32.mrb[0].mxu0
        %v1064 = vadd.f32 %v1015, %v1063
        %v1065 = vpop.f32.mrb[0].mxu0
        %1066 = vdwg.mxu0
        %1067 = vmatprep.subr.bf16.mxu0 0
        %1068 = vmatpush1.bf16.msra.mxu0 %v706
        %1069 = vmatprep.subr.bf16.mxu0 0
        %1070 = vmatpush1.bf16.msra.mxu0 %v707
        %1071 = vmatprep.subr.bf16.mxu0 0
        %1072 = vmatpush1.bf16.msra.mxu0 %v708
        %1073 = vmatprep.subr.bf16.mxu0 0
        %1074 = vmatpush1.bf16.msra.mxu0 %v709
        %1075 = vmatprep.subr.bf16.mxu0 0
        %1076 = vmatpush1.bf16.msra.mxu0 0
        %1077 = vmatprep.subr.bf16.mxu0 0
        %1078 = vmatpush1.bf16.msra.mxu0 0
        %1079 = vmatprep.subr.bf16.mxu0 0
        %1080 = vmatpush1.bf16.msra.mxu0 0
        %1081 = vmatprep.subr.bf16.mxu0 0
        %1082 = vmatpush1.bf16.msra.mxu0 0
        %1083 = vmatprep.subr.bf16.mxu0 0
        %1084 = vmatpush1.bf16.msra.mxu0 0
        %1085 = vmatprep.subr.bf16.mxu0 0
        %1086 = vmatpush1.bf16.msra.mxu0 0
        %1087 = vmatprep.subr.bf16.mxu0 0
        %1088 = vmatpush1.bf16.msra.mxu0 0
        %1089 = vmatprep.subr.bf16.mxu0 0
        %1090 = vmatpush1.bf16.msra.mxu0 0
        %1091 = vmatprep.subr.bf16.mxu0 0
        %1092 = vmatpush1.bf16.msra.mxu0 0
        %1093 = vmatprep.subr.bf16.mxu0 0
        %1094 = vmatpush1.bf16.msra.mxu0 0
        %1095 = vmatprep.subr.bf16.mxu0 0
        %1096 = vmatpush1.bf16.msra.mxu0 0
        %1097 = vmatprep.subr.bf16.mxu0 0
        %1098 = vmatpush1.bf16.msra.mxu0 0
        %1099 = vmatprep.mubr.bf16.mxu0 0
        %1100 = vmatmul.mubr.bf16.gmra.mrb[0].mxu0 %v964
        %v1101 = vpop.f32.mrb[0].mxu0
        %v1102 = vadd.f32 %v1053, %v1101
        %v1103 = vpop.f32.mrb[0].mxu0
        %v1104 = vpop.f32.mrb[0].mxu0
        %v1105 = vadd.f32 %v1056, %v1104
        %v1106 = vpop.f32.mrb[0].mxu0
        %1107 = vmatprep.mubr.bf16.mxu0 0
        %1108 = vmatmul.mubr.bf16.gmra.mrb[0].mxu0 %v967
        %v1109 = vpop.f32.mrb[0].mxu0
        %v1110 = vadd.f32 %v1061, %v1109
        %v1111 = vpop.f32.mrb[0].mxu0
        %v1112 = vpop.f32.mrb[0].mxu0
        %v1113 = vadd.f32 %v1064, %v1112
        %v1114 = vpop.f32.mrb[0].mxu0
        %1115 = vdwg.mxu0
        %v1116 = vmax.f32 %v886, %v1102
        %v1117 = vmax.f32 %v889, %v1105
        %v1118 = vmax.f32 %v894, %v1110
        %v1119 = vmax.f32 %v897, %v1113
        %s1120 = scalar_lea.vmem %s364, 160 [#allocation2]
        %v1121 = vld [vmem:[%s1120] sm:$0xff]
        %v1122 = vld [vmem:[%s1120 + $0x8] sm:$0xff]
        %v1123 = vld [vmem:[%s1120 + $0x10] sm:$0xf]
        %v1124 = vld [vmem:[%s1120 + $0x14] sm:$0xff]
        %v1125 = vld [vmem:[%s1120 + $0x1c] sm:$0xff]
        %v1126 = vld [vmem:[%s1120 + $0x24] sm:$0xf]
        %v1127 = vld [vmem:[%s1120 + $0x28] sm:$0xff]
        %v1128 = vld [vmem:[%s1120 + $0x30] sm:$0xff]
        %v1129 = vld [vmem:[%s1120 + $0x38] sm:$0xf]
        %v1130 = vld [vmem:[%s1120 + $0x3c] sm:$0xff]
        %v1131 = vld [vmem:[%s1120 + $0x44] sm:$0xff]
        %v1132 = vld [vmem:[%s1120 + $0x4c] sm:$0xf]
        %v1145 = vunpack.c.l.b16 %v1121
        %v1146 = vunpack.c.h.b16 %v1121
        %v1147 = vunpack.c.l.b16 %v1122
        %v1148 = vunpack.c.h.b16 %v1122
        %v1149 = vunpack.c.l.b16 %v1123
        %v1150 = vunpack.c.l.b16 %v1124
        %v1151 = vunpack.c.h.b16 %v1124
        %v1152 = vunpack.c.l.b16 %v1125
        %v1153 = vunpack.c.h.b16 %v1125
        %v1154 = vunpack.c.l.b16 %v1126
        %v1155 = vunpack.c.l.b16 %v1127
        %v1156 = vunpack.c.h.b16 %v1127
        %v1157 = vunpack.c.l.b16 %v1128
        %v1158 = vunpack.c.h.b16 %v1128
        %v1159 = vunpack.c.l.b16 %v1129
        %v1160 = vunpack.c.l.b16 %v1130
        %v1161 = vunpack.c.h.b16 %v1130
        %v1162 = vunpack.c.l.b16 %v1131
        %v1163 = vunpack.c.h.b16 %v1131
        %v1164 = vunpack.c.l.b16 %v1132
        %v1165 = vpack.c.b16 %v1150, %v1145
        %v1166 = vpack.c.b16 %v1151, %v1146
        %v1167 = vpack.c.b16 %v1152, %v1147
        %v1168 = vpack.c.b16 %v1153, %v1148
        %v1169 = vpack.c.b16 %v1154, %v1149
        %v1170 = vpack.c.b16 %v1160, %v1155
        %v1171 = vpack.c.b16 %v1161, %v1156
        %v1172 = vpack.c.b16 %v1162, %v1157
        %v1173 = vpack.c.b16 %v1163, %v1158
        %v1174 = vpack.c.b16 %v1164, %v1159
        %v1184 = vsel %vm746, %v1169, 0
        %v1187 = vsel %vm746, %v1174, 0
        %1189 = vmatprep.subr.bf16.mxu0 0
        %1190 = vmatpush1.bf16.msra.mxu0 %v674
        %1191 = vmatprep.subr.bf16.mxu0 0
        %1192 = vmatpush1.bf16.msra.mxu0 %v675
        %1193 = vmatprep.subr.bf16.mxu0 0
        %1194 = vmatpush1.bf16.msra.mxu0 %v676
        %1195 = vmatprep.subr.bf16.mxu0 0
        %1196 = vmatpush1.bf16.msra.mxu0 %v677
        %1197 = vmatprep.subr.bf16.mxu0 0
        %1198 = vmatpush1.bf16.msra.mxu0 %v678
        %1199 = vmatprep.subr.bf16.mxu0 0
        %1200 = vmatpush1.bf16.msra.mxu0 %v679
        %1201 = vmatprep.subr.bf16.mxu0 0
        %1202 = vmatpush1.bf16.msra.mxu0 %v680
        %1203 = vmatprep.subr.bf16.mxu0 0
        %1204 = vmatpush1.bf16.msra.mxu0 %v681
        %1205 = vmatprep.subr.bf16.mxu0 0
        %1206 = vmatpush1.bf16.msra.mxu0 %v682
        %1207 = vmatprep.subr.bf16.mxu0 0
        %1208 = vmatpush1.bf16.msra.mxu0 %v683
        %1209 = vmatprep.subr.bf16.mxu0 0
        %1210 = vmatpush1.bf16.msra.mxu0 %v684
        %1211 = vmatprep.subr.bf16.mxu0 0
        %1212 = vmatpush1.bf16.msra.mxu0 %v685
        %1213 = vmatprep.subr.bf16.mxu0 0
        %1214 = vmatpush1.bf16.msra.mxu0 %v686
        %1215 = vmatprep.subr.bf16.mxu0 0
        %1216 = vmatpush1.bf16.msra.mxu0 %v687
        %1217 = vmatprep.subr.bf16.mxu0 0
        %1218 = vmatpush1.bf16.msra.mxu0 %v688
        %1219 = vmatprep.subr.bf16.mxu0 0
        %1220 = vmatpush1.bf16.msra.mxu0 %v689
        %1221 = vmatprep.mubr.bf16.mxu0 %v1166
        %1222 = vmatmul.mubr.bf16.gmra.mrb[0].mxu0 %v1165
        %v1223 = vpop.f32.mrb[0].mxu0
        %v1224 = vadd.f32 0.0, %v1223
        %v1225 = vpop.f32.mrb[0].mxu0
        %v1226 = vpop.f32.mrb[0].mxu0
        %v1227 = vadd.f32 0.0, %v1226
        %v1228 = vpop.f32.mrb[0].mxu0
        %1229 = vmatprep.mubr.bf16.mxu0 %v1171
        %1230 = vmatmul.mubr.bf16.gmra.mrb[0].mxu0 %v1170
        %v1231 = vpop.f32.mrb[0].mxu0
        %v1232 = vadd.f32 0.0, %v1231
        %v1233 = vpop.f32.mrb[0].mxu0
        %v1234 = vpop.f32.mrb[0].mxu0
        %v1235 = vadd.f32 0.0, %v1234
        %v1236 = vpop.f32.mrb[0].mxu0
        %1237 = vdwg.mxu0
        %1238 = vmatprep.subr.bf16.mxu0 0
        %1239 = vmatpush1.bf16.msra.mxu0 %v690
        %1240 = vmatprep.subr.bf16.mxu0 0
        %1241 = vmatpush1.bf16.msra.mxu0 %v691
        %1242 = vmatprep.subr.bf16.mxu0 0
        %1243 = vmatpush1.bf16.msra.mxu0 %v692
        %1244 = vmatprep.subr.bf16.mxu0 0
        %1245 = vmatpush1.bf16.msra.mxu0 %v693
        %1246 = vmatprep.subr.bf16.mxu0 0
        %1247 = vmatpush1.bf16.msra.mxu0 %v694
        %1248 = vmatprep.subr.bf16.mxu0 0
        %1249 = vmatpush1.bf16.msra.mxu0 %v695
        %1250 = vmatprep.subr.bf16.mxu0 0
        %1251 = vmatpush1.bf16.msra.mxu0 %v696
        %1252 = vmatprep.subr.bf16.mxu0 0
        %1253 = vmatpush1.bf16.msra.mxu0 %v697
        %1254 = vmatprep.subr.bf16.mxu0 0
        %1255 = vmatpush1.bf16.msra.mxu0 %v698
        %1256 = vmatprep.subr.bf16.mxu0 0
        %1257 = vmatpush1.bf16.msra.mxu0 %v699
        %1258 = vmatprep.subr.bf16.mxu0 0
        %1259 = vmatpush1.bf16.msra.mxu0 %v700
        %1260 = vmatprep.subr.bf16.mxu0 0
        %1261 = vmatpush1.bf16.msra.mxu0 %v701
        %1262 = vmatprep.subr.bf16.mxu0 0
        %1263 = vmatpush1.bf16.msra.mxu0 %v702
        %1264 = vmatprep.subr.bf16.mxu0 0
        %1265 = vmatpush1.bf16.msra.mxu0 %v703
        %1266 = vmatprep.subr.bf16.mxu0 0
        %1267 = vmatpush1.bf16.msra.mxu0 %v704
        %1268 = vmatprep.subr.bf16.mxu0 0
        %1269 = vmatpush1.bf16.msra.mxu0 %v705
        %1270 = vmatprep.mubr.bf16.mxu0 %v1168
        %1271 = vmatmul.mubr.bf16.gmra.mrb[0].mxu0 %v1167
        %v1272 = vpop.f32.mrb[0].mxu0
        %v1273 = vadd.f32 %v1224, %v1272
        %v1274 = vpop.f32.mrb[0].mxu0
        %v1275 = vpop.f32.mrb[0].mxu0
        %v1276 = vadd.f32 %v1227, %v1275
        %v1277 = vpop.f32.mrb[0].mxu0
        %1278 = vmatprep.mubr.bf16.mxu0 %v1173
        %1279 = vmatmul.mubr.bf16.gmra.mrb[0].mxu0 %v1172
        %v1280 = vpop.f32.mrb[0].mxu0
        %v1281 = vadd.f32 %v1232, %v1280
        %v1282 = vpop.f32.mrb[0].mxu0
        %v1283 = vpop.f32.mrb[0].mxu0
        %v1284 = vadd.f32 %v1235, %v1283
        %v1285 = vpop.f32.mrb[0].mxu0
        %1286 = vdwg.mxu0
        %1287 = vmatprep.subr.bf16.mxu0 0
        %1288 = vmatpush1.bf16.msra.mxu0 %v706
        %1289 = vmatprep.subr.bf16.mxu0 0
        %1290 = vmatpush1.bf16.msra.mxu0 %v707
        %1291 = vmatprep.subr.bf16.mxu0 0
        %1292 = vmatpush1.bf16.msra.mxu0 %v708
        %1293 = vmatprep.subr.bf16.mxu0 0
        %1294 = vmatpush1.bf16.msra.mxu0 %v709
        %1295 = vmatprep.subr.bf16.mxu0 0
        %1296 = vmatpush1.bf16.msra.mxu0 0
        %1297 = vmatprep.subr.bf16.mxu0 0
        %1298 = vmatpush1.bf16.msra.mxu0 0
        %1299 = vmatprep.subr.bf16.mxu0 0
        %1300 = vmatpush1.bf16.msra.mxu0 0
        %1301 = vmatprep.subr.bf16.mxu0 0
        %1302 = vmatpush1.bf16.msra.mxu0 0
        %1303 = vmatprep.subr.bf16.mxu0 0
        %1304 = vmatpush1.bf16.msra.mxu0 0
        %1305 = vmatprep.subr.bf16.mxu0 0
        %1306 = vmatpush1.bf16.msra.mxu0 0
        %1307 = vmatprep.subr.bf16.mxu0 0
        %1308 = vmatpush1.bf16.msra.mxu0 0
        %1309 = vmatprep.subr.bf16.mxu0 0
        %1310 = vmatpush1.bf16.msra.mxu0 0
        %1311 = vmatprep.subr.bf16.mxu0 0
        %1312 = vmatpush1.bf16.msra.mxu0 0
        %1313 = vmatprep.subr.bf16.mxu0 0
        %1314 = vmatpush1.bf16.msra.mxu0 0
        %1315 = vmatprep.subr.bf16.mxu0 0
        %1316 = vmatpush1.bf16.msra.mxu0 0
        %1317 = vmatprep.subr.bf16.mxu0 0
        %1318 = vmatpush1.bf16.msra.mxu0 0
        %1319 = vmatprep.mubr.bf16.mxu0 0
        %1320 = vmatmul.mubr.bf16.gmra.mrb[0].mxu0 %v1184
        %v1321 = vpop.f32.mrb[0].mxu0
        %v1322 = vadd.f32 %v1273, %v1321
        %v1323 = vpop.f32.mrb[0].mxu0
        %v1324 = vpop.f32.mrb[0].mxu0
        %v1325 = vadd.f32 %v1276, %v1324
        %v1326 = vpop.f32.mrb[0].mxu0
        %1327 = vmatprep.mubr.bf16.mxu0 0
        %1328 = vmatmul.mubr.bf16.gmra.mrb[0].mxu0 %v1187
        %v1329 = vpop.f32.mrb[0].mxu0
        %v1330 = vadd.f32 %v1281, %v1329
        %v1331 = vpop.f32.mrb[0].mxu0
        %v1332 = vpop.f32.mrb[0].mxu0
        %v1333 = vadd.f32 %v1284, %v1332
        %v1334 = vpop.f32.mrb[0].mxu0
        %1335 = vdwg.mxu0
        %v1336 = vmax.f32 %v1116, %v1322
        %v1337 = vmax.f32 %v1117, %v1325
        %v1338 = vmax.f32 %v1118, %v1330
        %v1339 = vmax.f32 %v1119, %v1333
        %s1340 = scalar_lea.vmem %s364, 240 [#allocation2]
        %v1341 = vld [vmem:[%s1340] sm:$0xff]
        %v1342 = vld [vmem:[%s1340 + $0x8] sm:$0xff]
        %v1343 = vld [vmem:[%s1340 + $0x10] sm:$0xf]
        %v1344 = vld [vmem:[%s1340 + $0x14] sm:$0xff]
        %v1345 = vld [vmem:[%s1340 + $0x1c] sm:$0xff]
        %v1346 = vld [vmem:[%s1340 + $0x24] sm:$0xf]
        %v1347 = vld [vmem:[%s1340 + $0x28] sm:$0xff]
        %v1348 = vld [vmem:[%s1340 + $0x30] sm:$0xff]
        %v1349 = vld [vmem:[%s1340 + $0x38] sm:$0xf]
        %v1350 = vld [vmem:[%s1340 + $0x3c] sm:$0xff]
        %v1351 = vld [vmem:[%s1340 + $0x44] sm:$0xff]
        %v1352 = vld [vmem:[%s1340 + $0x4c] sm:$0xf]
        %v1365 = vunpack.c.l.b16 %v1341
        %v1366 = vunpack.c.h.b16 %v1341
        %v1367 = vunpack.c.l.b16 %v1342
        %v1368 = vunpack.c.h.b16 %v1342
        %v1369 = vunpack.c.l.b16 %v1343
        %v1370 = vunpack.c.l.b16 %v1344
        %v1371 = vunpack.c.h.b16 %v1344
        %v1372 = vunpack.c.l.b16 %v1345
        %v1373 = vunpack.c.h.b16 %v1345
        %v1374 = vunpack.c.l.b16 %v1346
        %v1375 = vunpack.c.l.b16 %v1347
        %v1376 = vunpack.c.h.b16 %v1347
        %v1377 = vunpack.c.l.b16 %v1348
        %v1378 = vunpack.c.h.b16 %v1348
        %v1379 = vunpack.c.l.b16 %v1349
        %v1380 = vunpack.c.l.b16 %v1350
        %v1381 = vunpack.c.h.b16 %v1350
        %v1382 = vunpack.c.l.b16 %v1351
        %v1383 = vunpack.c.h.b16 %v1351
        %v1384 = vunpack.c.l.b16 %v1352
        %v1385 = vpack.c.b16 %v1370, %v1365
        %v1386 = vpack.c.b16 %v1371, %v1366
        %v1387 = vpack.c.b16 %v1372, %v1367
        %v1388 = vpack.c.b16 %v1373, %v1368
        %v1389 = vpack.c.b16 %v1374, %v1369
        %v1390 = vpack.c.b16 %v1380, %v1375
        %v1391 = vpack.c.b16 %v1381, %v1376
        %v1392 = vpack.c.b16 %v1382, %v1377
        %v1393 = vpack.c.b16 %v1383, %v1378
        %v1394 = vpack.c.b16 %v1384, %v1379
        %v1404 = vsel %vm746, %v1389, 0
        %v1407 = vsel %vm746, %v1394, 0
        %1409 = vmatprep.subr.bf16.mxu0 0
        %1410 = vmatpush1.bf16.msra.mxu0 %v674
        %1411 = vmatprep.subr.bf16.mxu0 0
        %1412 = vmatpush1.bf16.msra.mxu0 %v675
        %1413 = vmatprep.subr.bf16.mxu0 0
        %1414 = vmatpush1.bf16.msra.mxu0 %v676
        %1415 = vmatprep.subr.bf16.mxu0 0
        %1416 = vmatpush1.bf16.msra.mxu0 %v677
        %1417 = vmatprep.subr.bf16.mxu0 0
        %1418 = vmatpush1.bf16.msra.mxu0 %v678
        %1419 = vmatprep.subr.bf16.mxu0 0
        %1420 = vmatpush1.bf16.msra.mxu0 %v679
        %1421 = vmatprep.subr.bf16.mxu0 0
        %1422 = vmatpush1.bf16.msra.mxu0 %v680
        %1423 = vmatprep.subr.bf16.mxu0 0
        %1424 = vmatpush1.bf16.msra.mxu0 %v681
        %1425 = vmatprep.subr.bf16.mxu0 0
        %1426 = vmatpush1.bf16.msra.mxu0 %v682
        %1427 = vmatprep.subr.bf16.mxu0 0
        %1428 = vmatpush1.bf16.msra.mxu0 %v683
        %1429 = vmatprep.subr.bf16.mxu0 0
        %1430 = vmatpush1.bf16.msra.mxu0 %v684
        %1431 = vmatprep.subr.bf16.mxu0 0
        %1432 = vmatpush1.bf16.msra.mxu0 %v685
        %1433 = vmatprep.subr.bf16.mxu0 0
        %1434 = vmatpush1.bf16.msra.mxu0 %v686
        %1435 = vmatprep.subr.bf16.mxu0 0
        %1436 = vmatpush1.bf16.msra.mxu0 %v687
        %1437 = vmatprep.subr.bf16.mxu0 0
        %1438 = vmatpush1.bf16.msra.mxu0 %v688
        %1439 = vmatprep.subr.bf16.mxu0 0
        %1440 = vmatpush1.bf16.msra.mxu0 %v689
        %1441 = vmatprep.mubr.bf16.mxu0 %v1386
        %1442 = vmatmul.mubr.bf16.gmra.mrb[0].mxu0 %v1385
        %v1443 = vpop.f32.mrb[0].mxu0
        %v1444 = vadd.f32 0.0, %v1443
        %v1445 = vpop.f32.mrb[0].mxu0
        %v1446 = vpop.f32.mrb[0].mxu0
        %v1447 = vadd.f32 0.0, %v1446
        %v1448 = vpop.f32.mrb[0].mxu0
        %1449 = vmatprep.mubr.bf16.mxu0 %v1391
        %1450 = vmatmul.mubr.bf16.gmra.mrb[0].mxu0 %v1390
        %v1451 = vpop.f32.mrb[0].mxu0
        %v1452 = vadd.f32 0.0, %v1451
        %v1453 = vpop.f32.mrb[0].mxu0
        %v1454 = vpop.f32.mrb[0].mxu0
        %v1455 = vadd.f32 0.0, %v1454
        %v1456 = vpop.f32.mrb[0].mxu0
        %1457 = vdwg.mxu0
        %1458 = vmatprep.subr.bf16.mxu0 0
        %1459 = vmatpush1.bf16.msra.mxu0 %v690
        %1460 = vmatprep.subr.bf16.mxu0 0
        %1461 = vmatpush1.bf16.msra.mxu0 %v691
        %1462 = vmatprep.subr.bf16.mxu0 0
        %1463 = vmatpush1.bf16.msra.mxu0 %v692
        %1464 = vmatprep.subr.bf16.mxu0 0
        %1465 = vmatpush1.bf16.msra.mxu0 %v693
        %1466 = vmatprep.subr.bf16.mxu0 0
        %1467 = vmatpush1.bf16.msra.mxu0 %v694
        %1468 = vmatprep.subr.bf16.mxu0 0
        %1469 = vmatpush1.bf16.msra.mxu0 %v695
        %1470 = vmatprep.subr.bf16.mxu0 0
        %1471 = vmatpush1.bf16.msra.mxu0 %v696
        %1472 = vmatprep.subr.bf16.mxu0 0
        %1473 = vmatpush1.bf16.msra.mxu0 %v697
        %1474 = vmatprep.subr.bf16.mxu0 0
        %1475 = vmatpush1.bf16.msra.mxu0 %v698
        %1476 = vmatprep.subr.bf16.mxu0 0
        %1477 = vmatpush1.bf16.msra.mxu0 %v699
        %1478 = vmatprep.subr.bf16.mxu0 0
        %1479 = vmatpush1.bf16.msra.mxu0 %v700
        %1480 = vmatprep.subr.bf16.mxu0 0
        %1481 = vmatpush1.bf16.msra.mxu0 %v701
        %1482 = vmatprep.subr.bf16.mxu0 0
        %1483 = vmatpush1.bf16.msra.mxu0 %v702
        %1484 = vmatprep.subr.bf16.mxu0 0
        %1485 = vmatpush1.bf16.msra.mxu0 %v703
        %1486 = vmatprep.subr.bf16.mxu0 0
        %1487 = vmatpush1.bf16.msra.mxu0 %v704
        %1488 = vmatprep.subr.bf16.mxu0 0
        %1489 = vmatpush1.bf16.msra.mxu0 %v705
        %1490 = vmatprep.mubr.bf16.mxu0 %v1388
        %1491 = vmatmul.mubr.bf16.gmra.mrb[0].mxu0 %v1387
        %v1492 = vpop.f32.mrb[0].mxu0
        %v1493 = vadd.f32 %v1444, %v1492
        %v1494 = vpop.f32.mrb[0].mxu0
        %v1495 = vpop.f32.mrb[0].mxu0
        %v1496 = vadd.f32 %v1447, %v1495
        %v1497 = vpop.f32.mrb[0].mxu0
        %1498 = vmatprep.mubr.bf16.mxu0 %v1393
        %1499 = vmatmul.mubr.bf16.gmra.mrb[0].mxu0 %v1392
        %v1500 = vpop.f32.mrb[0].mxu0
        %v1501 = vadd.f32 %v1452, %v1500
        %v1502 = vpop.f32.mrb[0].mxu0
        %v1503 = vpop.f32.mrb[0].mxu0
        %v1504 = vadd.f32 %v1455, %v1503
        %v1505 = vpop.f32.mrb[0].mxu0
        %1506 = vdwg.mxu0
        %1507 = vmatprep.subr.bf16.mxu0 0
        %1508 = vmatpush1.bf16.msra.mxu0 %v706
        %1509 = vmatprep.subr.bf16.mxu0 0
        %1510 = vmatpush1.bf16.msra.mxu0 %v707
        %1511 = vmatprep.subr.bf16.mxu0 0
        %1512 = vmatpush1.bf16.msra.mxu0 %v708
        %1513 = vmatprep.subr.bf16.mxu0 0
        %1514 = vmatpush1.bf16.msra.mxu0 %v709
        %1515 = vmatprep.subr.bf16.mxu0 0
        %1516 = vmatpush1.bf16.msra.mxu0 0
        %1517 = vmatprep.subr.bf16.mxu0 0
        %1518 = vmatpush1.bf16.msra.mxu0 0
        %1519 = vmatprep.subr.bf16.mxu0 0
        %1520 = vmatpush1.bf16.msra.mxu0 0
        %1521 = vmatprep.subr.bf16.mxu0 0
        %1522 = vmatpush1.bf16.msra.mxu0 0
        %1523 = vmatprep.subr.bf16.mxu0 0
        %1524 = vmatpush1.bf16.msra.mxu0 0
        %1525 = vmatprep.subr.bf16.mxu0 0
        %1526 = vmatpush1.bf16.msra.mxu0 0
        %1527 = vmatprep.subr.bf16.mxu0 0
        %1528 = vmatpush1.bf16.msra.mxu0 0
        %1529 = vmatprep.subr.bf16.mxu0 0
        %1530 = vmatpush1.bf16.msra.mxu0 0
        %1531 = vmatprep.subr.bf16.mxu0 0
        %1532 = vmatpush1.bf16.msra.mxu0 0
        %1533 = vmatprep.subr.bf16.mxu0 0
        %1534 = vmatpush1.bf16.msra.mxu0 0
        %1535 = vmatprep.subr.bf16.mxu0 0
        %1536 = vmatpush1.bf16.msra.mxu0 0
        %1537 = vmatprep.subr.bf16.mxu0 0
        %1538 = vmatpush1.bf16.msra.mxu0 0
        %1539 = vmatprep.mubr.bf16.mxu0 0
        %1540 = vmatmul.mubr.bf16.gmra.mrb[0].mxu0 %v1404
        %v1541 = vpop.f32.mrb[0].mxu0
        %v1542 = vadd.f32 %v1493, %v1541
        %v1543 = vpop.f32.mrb[0].mxu0
        %v1544 = vpop.f32.mrb[0].mxu0
        %v1545 = vadd.f32 %v1496, %v1544
        %v1546 = vpop.f32.mrb[0].mxu0
        %1547 = vmatprep.mubr.bf16.mxu0 0
        %1548 = vmatmul.mubr.bf16.gmra.mrb[0].mxu0 %v1407
        %v1549 = vpop.f32.mrb[0].mxu0
        %v1550 = vadd.f32 %v1501, %v1549
        %v1551 = vpop.f32.mrb[0].mxu0
        %v1552 = vpop.f32.mrb[0].mxu0
        %v1553 = vadd.f32 %v1504, %v1552
        %v1554 = vpop.f32.mrb[0].mxu0
        %1555 = vdwg.mxu0
        %v1556 = vmax.f32 %v1336, %v1542
        %v1557 = vmax.f32 %v1337, %v1545
        %v1558 = vmax.f32 %v1338, %v1550
        %v1559 = vmax.f32 %v1339, %v1553
        %v1560 = vld [vmem:[%s2] sm:$0x1]
        %v1562 = vlaneseq
        %v1563 = vshrl.u32 %v1562, 7
        %v1564 = vsub.s32 0, %v1563
        %v1565 = vrot.slane %v1560, %v1564
        %v1567 = vadd.f32 %v1556, %v1565
        %v1568 = vadd.f32 %v1557, %v1565
        %v1569 = vadd.f32 %v1558, %v1565
        %v1570 = vadd.f32 %v1559, %v1565
        %v1571 = vmax.f32 %v1567, 0.0
        %v1572 = vmax.f32 %v1568, 0.0
        %v1573 = vmax.f32 %v1569, 0.0
        %v1574 = vmax.f32 %v1570, 0.0
        %v1575 = vpack.c.bf16 %v1572, %v1571
        %v1576 = vpack.c.bf16 %v1574, %v1573
        %v1579 = vunpack.c.l.b16 %v1575
        %v1580 = vunpack.c.h.b16 %v1575
        %v1581 = vunpack.c.l.b16 %v1576
        %v1582 = vunpack.c.h.b16 %v1576
        %v1583 = vpack.c.b16 %v1579, %v1579
        %v1584 = vpack.c.b16 %v1580, %v1580
        %v1585 = vpack.c.b16 %v1581, %v1581
        %v1586 = vpack.c.b16 %v1582, %v1582
        %1591 = vst [vmem:[%s383] sm:$0xf] %v1583
        %1592 = vst [vmem:[%s383 + $0x4] sm:$0xf] %v1584
        %1593 = vst [vmem:[%s383 + $0x8] sm:$0xf] %v1585
        %1594 = vst [vmem:[%s383 + $0xc] sm:$0xf] %v1586
        %s1595 = sand.u32 %s90, 1
        %s1596 = sand.u32 %s90, 1
        %s1597 = smul.addr %s1596, 16
        %s1598 = scalar_lea.vmem [#allocation3], %s1597
        // Predicated region
        $region73: #{cnn_forward.4} parent=67 // pred_check
          %p1599 = pneg %p100
        $region74: #{cnn_forward.4} parent=67 // pred_check_branch
          %1601 = sbr.rel (%p1599) target = $region76
        $region75: #{cnn_forward.4} parent=67 // pred_region
          %s1602 = smul.u32 4, %s14
          %s1603 = ssub.s32 7, %s1602
          %p1604 = scmp.lt.s32.totalorder %s1603, 4
          %s1605 = scalar_select %p1604, %s1603, 4
          %s1606 = smul.u32 64, %s1605
          %p1607 = scmp.ne.s32.totalorder 0, %s1606
          %s1608 = smul.addr %s1602, 4
          %s1609 = scalar_lea.vmem %s3, %s1608
          // Predicated region
          $region77: #{cnn_forward.4} parent=75 // pred_check
            %p1610 = pneg %p1607
          $region78: #{cnn_forward.4} parent=75 // pred_check_branch
            %1612 = sbr.rel (%p1610) target = $region80
          $region79: #{cnn_forward.4} parent=75 // pred_region
            // Predicated region
            $region81: #{cnn_forward.4} parent=79 // pred_check
              _
            $region82: #{cnn_forward.4} parent=79 // pred_check_branch
              %1614 = sbr.rel target = $region84
            $region83: #{cnn_forward.4} parent=79 // pred_region
              // Predicated region
              $region103: #{cnn_forward.4} parent=83 // pred_check
                _
              $region104: #{cnn_forward.4} parent=83 // pred_check_branch
                %1669 = sbr.rel (0) target = $region106
              $region105: #{cnn_forward.4} parent=83 // pred_region
                %s1671 = sshrl.u32 %s1605, 2
                // While loop
                $region107: #{cnn_forward.4} parent=105 // loop_pre_header
                  _
                $region108: #{cnn_forward.4} parent=105 // loop_header
                  %s1673 = sphi 0, %s1675
                  %p1674 = scmp.ge.s32.totalorder %s1673, %s1671
                  %s1678 = sphi 0, %s1691
                  %s1679 = sphi %s1598, %s1694
                  %s1680 = sphi %s1609, %s1695
                $region109: #{cnn_forward.4} parent=105 // loop_header_branch
                  %1677 = sbr.rel (%p1674) target = $region113
                $region110: #{cnn_forward.4} parent=105 // loop_body
                  %v1681 = vld [vmem:[%s1679] sm:$0xf]
                  %1682 = vst [vmem:[%s1680] sm:$0xf] %v1681
                  %v1683 = vld [vmem:[%s1679 + $0x4] sm:$0xf]
                  %1684 = vst [vmem:[%s1680 + $0x4] sm:$0xf] %v1683
                  %v1685 = vld [vmem:[%s1679 + $0x8] sm:$0xf]
                  %1686 = vst [vmem:[%s1680 + $0x8] sm:$0xf] %v1685
                  %v1687 = vld [vmem:[%s1679 + $0xc] sm:$0xf]
                  %1688 = vst [vmem:[%s1680 + $0xc] sm:$0xf] %v1687
                  %s1689 = sadd.s32 1, %s1678
                  %p1690 = scmp.ge.s32.totalorder %s1689, %s1671
                  %s1691 = scalar_select %p1690, 0, %s1689
                  %s1692 = smul.u32 %s1691, 16
                  %s1693 = smul.u32 %s1691, 16
                  %s1694 = scalar_lea.vmem %s1598, %s1692 [#allocation3]
                  %s1695 = scalar_lea.vmem %s1609, %s1693
                $region111: #{cnn_forward.4} parent=105 // loop_footer
                  %s1675 = sadd.s32 %s1673, 1
                $region112: #{cnn_forward.4} parent=105 // loop_footer_branch
                  %1672 = sbr.rel target = $region108
                $region113: #{cnn_forward.4} parent=105 // loop_exit
                  _
                %s1696 = sshrl.u32 %s1605, 2
                %s1697 = sand.u32 %s1605, 3
                %s1698 = smul.u32 %s1696, 4
                %s1699 = smul.u32 4, %s1698
                %s1700 = scalar_lea.vmem %s1598, %s1699 [#allocation3]
                %s1701 = smul.u32 4, %s1698
                %s1702 = scalar_lea.vmem %s1609, %s1701
                // While loop
                $region114: #{cnn_forward.4} parent=105 // loop_pre_header
                  _
                $region115: #{cnn_forward.4} parent=105 // loop_header
                  %s1704 = sphi 0, %s1706
                  %p1705 = scmp.ge.s32.totalorder %s1704, %s1697
                  %s1709 = sphi 0, %s1716
                  %s1710 = sphi %s1700, %s1719
                  %s1711 = sphi %s1702, %s1720
                $region116: #{cnn_forward.4} parent=105 // loop_header_branch
                  %1708 = sbr.rel (%p1705) target = $region120
                $region117: #{cnn_forward.4} parent=105 // loop_body
                  %v1712 = vld [vmem:[%s1710] sm:$0xf]
                  %1713 = vst [vmem:[%s1711] sm:$0xf] %v1712
                  %s1714 = sadd.s32 1, %s1709
                  %p1715 = scmp.ge.s32.totalorder %s1714, %s1697
                  %s1716 = scalar_select %p1715, 0, %s1714
                  %s1717 = smul.u32 %s1716, 4
                  %s1718 = smul.u32 %s1716, 4
                  %s1719 = scalar_lea.vmem %s1700, %s1717 [#allocation3]
                  %s1720 = scalar_lea.vmem %s1702, %s1718
                $region118: #{cnn_forward.4} parent=105 // loop_footer
                  %s1706 = sadd.s32 %s1704, 1
                $region119: #{cnn_forward.4} parent=105 // loop_footer_branch
                  %1703 = sbr.rel target = $region115
                $region120: #{cnn_forward.4} parent=105 // loop_exit
                  _
              $region106: #{cnn_forward.4} parent=83 // pred_fallthru
                _
            $region84: #{cnn_forward.4} parent=79 // pred_fallthru
              _
            // Predicated region
            $region85: #{cnn_forward.4} parent=79 // pred_check
              _
            $region86: #{cnn_forward.4} parent=79 // pred_check_branch
              %1616 = sbr.rel (0) target = $region88
            $region87: #{cnn_forward.4} parent=79 // pred_region
              %s1618 = sshrl.u32 %s1605, 2
              // While loop
              $region89: #{cnn_forward.4} parent=87 // loop_pre_header
                _
              $region90: #{cnn_forward.4} parent=87 // loop_header
                %s1620 = sphi 0, %s1622
                %p1621 = scmp.ge.s32.totalorder %s1620, %s1618
                %s1625 = sphi 0, %s1638
                %s1626 = sphi %s1598, %s1641
                %s1627 = sphi %s1609, %s1642
              $region91: #{cnn_forward.4} parent=87 // loop_header_branch
                %1624 = sbr.rel (%p1621) target = $region95
              $region92: #{cnn_forward.4} parent=87 // loop_body
                %v1628 = vld [vmem:[%s1626] sm:$0xf]
                %1629 = vst [vmem:[%s1627] sm:$0xf] %v1628
                %v1630 = vld [vmem:[%s1626 + $0x4] sm:$0xf]
                %1631 = vst [vmem:[%s1627 + $0x4] sm:$0xf] %v1630
                %v1632 = vld [vmem:[%s1626 + $0x8] sm:$0xf]
                %1633 = vst [vmem:[%s1627 + $0x8] sm:$0xf] %v1632
                %v1634 = vld [vmem:[%s1626 + $0xc] sm:$0xf]
                %1635 = vst [vmem:[%s1627 + $0xc] sm:$0xf] %v1634
                %s1636 = sadd.s32 1, %s1625
                %p1637 = scmp.ge.s32.totalorder %s1636, %s1618
                %s1638 = scalar_select %p1637, 0, %s1636
                %s1639 = smul.u32 %s1638, 16
                %s1640 = smul.u32 %s1638, 16
                %s1641 = scalar_lea.vmem %s1598, %s1639 [#allocation3]
                %s1642 = scalar_lea.vmem %s1609, %s1640
              $region93: #{cnn_forward.4} parent=87 // loop_footer
                %s1622 = sadd.s32 %s1620, 1
              $region94: #{cnn_forward.4} parent=87 // loop_footer_branch
                %1619 = sbr.rel target = $region90
              $region95: #{cnn_forward.4} parent=87 // loop_exit
                _
              %s1643 = sshrl.u32 %s1605, 2
              %s1644 = sand.u32 %s1605, 3
              %s1645 = smul.u32 %s1643, 4
              %s1646 = smul.u32 4, %s1645
              %s1647 = scalar_lea.vmem %s1598, %s1646 [#allocation3]
              %s1648 = smul.u32 4, %s1645
              %s1649 = scalar_lea.vmem %s1609, %s1648
              // While loop
              $region96: #{cnn_forward.4} parent=87 // loop_pre_header
                _
              $region97: #{cnn_forward.4} parent=87 // loop_header
                %s1651 = sphi 0, %s1653
                %p1652 = scmp.ge.s32.totalorder %s1651, %s1644
                %s1656 = sphi 0, %s1663
                %s1657 = sphi %s1647, %s1666
                %s1658 = sphi %s1649, %s1667
              $region98: #{cnn_forward.4} parent=87 // loop_header_branch
                %1655 = sbr.rel (%p1652) target = $region102
              $region99: #{cnn_forward.4} parent=87 // loop_body
                %v1659 = vld [vmem:[%s1657] sm:$0xf]
                %1660 = vst [vmem:[%s1658] sm:$0xf] %v1659
                %s1661 = sadd.s32 1, %s1656
                %p1662 = scmp.ge.s32.totalorder %s1661, %s1644
                %s1663 = scalar_select %p1662, 0, %s1661
                %s1664 = smul.u32 %s1663, 4
                %s1665 = smul.u32 %s1663, 4
                %s1666 = scalar_lea.vmem %s1647, %s1664 [#allocation3]
                %s1667 = scalar_lea.vmem %s1649, %s1665
              $region100: #{cnn_forward.4} parent=87 // loop_footer
                %s1653 = sadd.s32 %s1651, 1
              $region101: #{cnn_forward.4} parent=87 // loop_footer_branch
                %1650 = sbr.rel target = $region97
              $region102: #{cnn_forward.4} parent=87 // loop_exit
                _
            $region88: #{cnn_forward.4} parent=79 // pred_fallthru
              _
          $region80: #{cnn_forward.4} parent=75 // pred_fallthru
            _
          %1721 = vnop
        $region76: #{cnn_forward.4} parent=67 // pred_fallthru
          _
      $region68: #{cnn_forward.4} parent=5 // pred_fallthru
        _
      %p1722 = scmp.le.s32.totalorder 2, %s9
      // Predicated region
      $region121: #{cnn_forward.4} parent=5 // pred_check
        %p1723 = pneg %p1722
      $region122: #{cnn_forward.4} parent=5 // pred_check_branch
        %1725 = sbr.rel (%p1723) target = $region124
      $region123: #{cnn_forward.4} parent=5 // pred_region
        %s1726 = ssub.s32 %s9, 2
        // Predicated region
        $region125: #{cnn_forward.4} parent=123 // pred_check
          %p1727 = pneg %p106
        $region126: #{cnn_forward.4} parent=123 // pred_check_branch
          %1729 = sbr.rel (%p1727) target = $region128
        $region127: #{cnn_forward.4} parent=123 // pred_region
          %s1730 = sand.u32 %s91, 1
          %s1731 = sand.u32 %s91, 1
          %s1732 = smul.addr %s1731, 16
          %s1733 = scalar_lea.vmem [#allocation3], %s1732
        $region128: #{cnn_forward.4} parent=123 // pred_fallthru
          _
      $region124: #{cnn_forward.4} parent=5 // pred_fallthru
        _
    $region6: #{cnn_forward.4} parent=1 // loop_footer
      %s13 = sadd.s32 1, %s9
    $region7: #{cnn_forward.4} parent=1 // loop_footer_branch
      %8 = sbr.rel target = $region3
    $region8: #{cnn_forward.4} parent=1 // loop_exit
      _

// kernel: cnn_forward.5
$region0: #{cnn_forward.5}
  #allocation0 [shape = 'u32[]', space=smem, size = 0x4, offset = 0x4, fixed_abs, tag = 'smem constant byte address 0x4 - core index']
  #allocation1 [shape = 'u32[144,128]{1,0:T(1,128)}', space=vmem, size = 0x12000, scoped, tag = 'internal scratch']
  %s0 = inlined_call_operand.vmem [shape: bf16[2,3136], index: 0, kind: input, shape index: {}]
  %s1 = inlined_call_operand.vmem [shape: bf16[3136,128], index: 1, kind: input, shape index: {}]
  %s2 = inlined_call_operand.vmem [shape: f32[1,128], index: 2, kind: input, shape index: {}]
  %s3 = inlined_call_operand.vmem [shape: bf16[128,128], index: 3, kind: input, shape index: {}]
  %s4 = inlined_call_operand.vmem [shape: f32[1,128], index: 4, kind: input, shape index: {}]
  %s5 = inlined_call_operand.hbm [shape: f32[2,128], index: 5, kind: output, shape index: {}]
  %s6 = sld [smem:[#allocation0]]
  $region30: #{cnn_forward.5} parent=0
    _
  %s8 = ssub.s32 1, %s6
  %s9 = scalar_select 0, %s8, %s6
  $region1: #{cnn_forward.5} parent=0
    #allocation2 [shape = 'u8[1024]{0}', space=vmem, size = 0x400, scoped, tag = 'output window, operand 0, single buffered']
    #allocation3 [shape = 's32[1]{0}', space=sflag, size = 0x4, scoped, tag = 'scoped memory for cnn_forward.5']
    %10 = vsyncpa [#allocation3], 0
    // Predicated region
    $region2: #{cnn_forward.5} parent=1 // pred_check
      _
    $region3: #{cnn_forward.5} parent=1 // pred_check_branch
      %12 = sbr.rel (0) target = $region5
    $region4: #{cnn_forward.5} parent=1 // pred_region
      _
    $region5: #{cnn_forward.5} parent=1 // pred_fallthru
      _
    // Predicated region
    $region6: #{cnn_forward.5} parent=1 // pred_check
      _
    $region7: #{cnn_forward.5} parent=1 // pred_check_branch
      %14 = sbr.rel (0) target = $region9
    $region8: #{cnn_forward.5} parent=1 // pred_region
      _
    $region9: #{cnn_forward.5} parent=1 // pred_fallthru
      _
    // Predicated region
    $region10: #{cnn_forward.5} parent=1 // pred_check
      _
    $region11: #{cnn_forward.5} parent=1 // pred_check_branch
      %16 = sbr.rel (0) target = $region13
    $region12: #{cnn_forward.5} parent=1 // pred_region
      _
    $region13: #{cnn_forward.5} parent=1 // pred_fallthru
      _
    // Predicated region
    $region14: #{cnn_forward.5} parent=1 // pred_check
      _
    $region15: #{cnn_forward.5} parent=1 // pred_check_branch
      %18 = sbr.rel (0) target = $region17
    $region16: #{cnn_forward.5} parent=1 // pred_region
      _
    $region17: #{cnn_forward.5} parent=1 // pred_fallthru
      _
    // Predicated region
    $region18: #{cnn_forward.5} parent=1 // pred_check
      _
    $region19: #{cnn_forward.5} parent=1 // pred_check_branch
      %20 = sbr.rel (0) target = $region21
    $region20: #{cnn_forward.5} parent=1 // pred_region
      _
    $region21: #{cnn_forward.5} parent=1 // pred_fallthru
      _
    %v22 = vld [vmem:[%s0] sm:$0xff]
    %v23 = vld [vmem:[%s0 + $0x8] sm:$0xff]
    %v24 = vld [vmem:[%s0 + $0x10] sm:$0xff]
    %v25 = vld [vmem:[%s0 + $0x18] sm:$0x1]
    %v26 = vld [vmem:[%s1] sm:$0xf]
    %v27 = vld [vmem:[%s1 + $0x4] sm:$0xf]
    %v28 = vld [vmem:[%s1 + $0x8] sm:$0xf]
    %v29 = vld [vmem:[%s1 + $0xc] sm:$0xf]
    %v30 = vld [vmem:[%s1 + $0x10] sm:$0xf]
    %v31 = vld [vmem:[%s1 + $0x14] sm:$0xf]
    %v32 = vld [vmem:[%s1 + $0x18] sm:$0xf]
    %v33 = vld [vmem:[%s1 + $0x1c] sm:$0xf]
    %v34 = vld [vmem:[%s1 + $0x20] sm:$0xf]
    %v35 = vld [vmem:[%s1 + $0x24] sm:$0xf]
    %v36 = vld [vmem:[%s1 + $0x28] sm:$0xf]
    %v37 = vld [vmem:[%s1 + $0x2c] sm:$0xf]
    %v38 = vld [vmem:[%s1 + $0x30] sm:$0xf]
    %v39 = vld [vmem:[%s1 + $0x34] sm:$0xf]
    %v40 = vld [vmem:[%s1 + $0x38] sm:$0xf]
    %v41 = vld [vmem:[%s1 + $0x3c] sm:$0xf]
    %v42 = vld [vmem:[%s1 + $0x40] sm:$0xf]
    %v43 = vld [vmem:[%s1 + $0x44] sm:$0xf]
    %v44 = vld [vmem:[%s1 + $0x48] sm:$0xf]
    %v45 = vld [vmem:[%s1 + $0x4c] sm:$0xf]
    %v46 = vld [vmem:[%s1 + $0x50] sm:$0xf]
    %v47 = vld [vmem:[%s1 + $0x54] sm:$0xf]
    %v48 = vld [vmem:[%s1 + $0x58] sm:$0xf]
    %v49 = vld [vmem:[%s1 + $0x5c] sm:$0xf]
    %v50 = vld [vmem:[%s1 + $0x60] sm:$0xf]
    %v51 = vld [vmem:[%s1 + $0x64] sm:$0xf]
    %v52 = vld [vmem:[%s1 + $0x68] sm:$0xf]
    %v53 = vld [vmem:[%s1 + $0x6c] sm:$0xf]
    %v54 = vld [vmem:[%s1 + $0x70] sm:$0xf]
    %v55 = vld [vmem:[%s1 + $0x74] sm:$0xf]
    %v56 = vld [vmem:[%s1 + $0x78] sm:$0xf]
    %v57 = vld [vmem:[%s1 + $0x7c] sm:$0xf]
    %v58 = vld [vmem:[%s1 + $0x80] sm:$0xf]
    %v59 = vld [vmem:[%s1 + $0x84] sm:$0xf]
    %v60 = vld [vmem:[%s1 + $0x88] sm:$0xf]
    %v61 = vld [vmem:[%s1 + $0x8c] sm:$0xf]
    %v62 = vld [vmem:[%s1 + $0x90] sm:$0xf]
    %v63 = vld [vmem:[%s1 + $0x94] sm:$0xf]
    %v64 = vld [vmem:[%s1 + $0x98] sm:$0xf]
    %v65 = vld [vmem:[%s1 + $0x9c] sm:$0xf]
    %v66 = vld [vmem:[%s1 + $0xa0] sm:$0xf]
    %v67 = vld [vmem:[%s1 + $0xa4] sm:$0xf]
    %v68 = vld [vmem:[%s1 + $0xa8] sm:$0xf]
    %v69 = vld [vmem:[%s1 + $0xac] sm:$0xf]
    %v70 = vld [vmem:[%s1 + $0xb0] sm:$0xf]
    %v71 = vld [vmem:[%s1 + $0xb4] sm:$0xf]
    %v72 = vld [vmem:[%s1 + $0xb8] sm:$0xf]
    %v73 = vld [vmem:[%s1 + $0xbc] sm:$0xf]
    %v74 = vld [vmem:[%s1 + $0xc0] sm:$0xf]
    %v75 = vld [vmem:[%s1 + $0xc4] sm:$0xf]
    %v76 = vld [vmem:[%s1 + $0xc8] sm:$0xf]
    %v77 = vld [vmem:[%s1 + $0xcc] sm:$0xf]
    %v78 = vld [vmem:[%s1 + $0xd0] sm:$0xf]
    %v79 = vld [vmem:[%s1 + $0xd4] sm:$0xf]
    %v80 = vld [vmem:[%s1 + $0xd8] sm:$0xf]
    %v81 = vld [vmem:[%s1 + $0xdc] sm:$0xf]
    %v82 = vld [vmem:[%s1 + $0xe0] sm:$0xf]
    %v83 = vld [vmem:[%s1 + $0xe4] sm:$0xf]
    %v84 = vld [vmem:[%s1 + $0xe8] sm:$0xf]
    %v85 = vld [vmem:[%s1 + $0xec] sm:$0xf]
    %v86 = vld [vmem:[%s1 + $0xf0] sm:$0xf]
    %v87 = vld [vmem:[%s1 + $0xf4] sm:$0xf]
    %v88 = vld [vmem:[%s1 + $0xf8] sm:$0xf]
    %v89 = vld [vmem:[%s1 + $0xfc] sm:$0xf]
    %v90 = vld [vmem:[%s1 + $0x100] sm:$0xf]
    %v91 = vld [vmem:[%s1 + $0x104] sm:$0xf]
    %v92 = vld [vmem:[%s1 + $0x108] sm:$0xf]
    %v93 = vld [vmem:[%s1 + $0x10c] sm:$0xf]
    %v94 = vld [vmem:[%s1 + $0x110] sm:$0xf]
    %v95 = vld [vmem:[%s1 + $0x114] sm:$0xf]
    %v96 = vld [vmem:[%s1 + $0x118] sm:$0xf]
    %v97 = vld [vmem:[%s1 + $0x11c] sm:$0xf]
    %v98 = vld [vmem:[%s1 + $0x120] sm:$0xf]
    %v99 = vld [vmem:[%s1 + $0x124] sm:$0xf]
    %v100 = vld [vmem:[%s1 + $0x128] sm:$0xf]
    %v101 = vld [vmem:[%s1 + $0x12c] sm:$0xf]
    %v102 = vld [vmem:[%s1 + $0x130] sm:$0xf]
    %v103 = vld [vmem:[%s1 + $0x134] sm:$0xf]
    %v104 = vld [vmem:[%s1 + $0x138] sm:$0xf]
    %v105 = vld [vmem:[%s1 + $0x13c] sm:$0xf]
    %v106 = vld [vmem:[%s1 + $0x140] sm:$0xf]
    %v107 = vld [vmem:[%s1 + $0x144] sm:$0xf]
    %v108 = vld [vmem:[%s1 + $0x148] sm:$0xf]
    %v109 = vld [vmem:[%s1 + $0x14c] sm:$0xf]
    %v110 = vld [vmem:[%s1 + $0x150] sm:$0xf]
    %v111 = vld [vmem:[%s1 + $0x154] sm:$0xf]
    %v112 = vld [vmem:[%s1 + $0x158] sm:$0xf]
    %v113 = vld [vmem:[%s1 + $0x15c] sm:$0xf]
    %v114 = vld [vmem:[%s1 + $0x160] sm:$0xf]
    %v115 = vld [vmem:[%s1 + $0x164] sm:$0xf]
    %v116 = vld [vmem:[%s1 + $0x168] sm:$0xf]
    %v117 = vld [vmem:[%s1 + $0x16c] sm:$0xf]
    %v118 = vld [vmem:[%s1 + $0x170] sm:$0xf]
    %v119 = vld [vmem:[%s1 + $0x174] sm:$0xf]
    %v120 = vld [vmem:[%s1 + $0x178] sm:$0xf]
    %v121 = vld [vmem:[%s1 + $0x17c] sm:$0xf]
    %v122 = vld [vmem:[%s1 + $0x180] sm:$0xf]
    %v123 = vld [vmem:[%s1 + $0x184] sm:$0xf]
    %v124 = vld [vmem:[%s1 + $0x188] sm:$0xf]
    %v125 = vld [vmem:[%s1 + $0x18c] sm:$0xf]
    %v126 = vld [vmem:[%s1 + $0x190] sm:$0xf]
    %v127 = vld [vmem:[%s1 + $0x194] sm:$0xf]
    %v128 = vld [vmem:[%s1 + $0x198] sm:$0xf]
    %v129 = vld [vmem:[%s1 + $0x19c] sm:$0xf]
    %v130 = vld [vmem:[%s1 + $0x1a0] sm:$0xf]
    %v131 = vld [vmem:[%s1 + $0x1a4] sm:$0xf]
    %v132 = vld [vmem:[%s1 + $0x1a8] sm:$0xf]
    %v133 = vld [vmem:[%s1 + $0x1ac] sm:$0xf]
    %v134 = vld [vmem:[%s1 + $0x1b0] sm:$0xf]
    %v135 = vld [vmem:[%s1 + $0x1b4] sm:$0xf]
    %v136 = vld [vmem:[%s1 + $0x1b8] sm:$0xf]
    %v137 = vld [vmem:[%s1 + $0x1bc] sm:$0xf]
    %v138 = vld [vmem:[%s1 + $0x1c0] sm:$0xf]
    %v139 = vld [vmem:[%s1 + $0x1c4] sm:$0xf]
    %v140 = vld [vmem:[%s1 + $0x1c8] sm:$0xf]
    %v141 = vld [vmem:[%s1 + $0x1cc] sm:$0xf]
    %v142 = vld [vmem:[%s1 + $0x1d0] sm:$0xf]
    %v143 = vld [vmem:[%s1 + $0x1d4] sm:$0xf]
    %v144 = vld [vmem:[%s1 + $0x1d8] sm:$0xf]
    %v145 = vld [vmem:[%s1 + $0x1dc] sm:$0xf]
    %v146 = vld [vmem:[%s1 + $0x1e0] sm:$0xf]
    %v147 = vld [vmem:[%s1 + $0x1e4] sm:$0xf]
    %v148 = vld [vmem:[%s1 + $0x1e8] sm:$0xf]
    %v149 = vld [vmem:[%s1 + $0x1ec] sm:$0xf]
    %v150 = vld [vmem:[%s1 + $0x1f0] sm:$0xf]
    %v151 = vld [vmem:[%s1 + $0x1f4] sm:$0xf]
    %v152 = vld [vmem:[%s1 + $0x1f8] sm:$0xf]
    %v153 = vld [vmem:[%s1 + $0x1fc] sm:$0xf]
    %v154 = vld [vmem:[%s1 + $0x200] sm:$0xf]
    %v155 = vld [vmem:[%s1 + $0x204] sm:$0xf]
    %v156 = vld [vmem:[%s1 + $0x208] sm:$0xf]
    %v157 = vld [vmem:[%s1 + $0x20c] sm:$0xf]
    %v158 = vld [vmem:[%s1 + $0x210] sm:$0xf]
    %v159 = vld [vmem:[%s1 + $0x214] sm:$0xf]
    %v160 = vld [vmem:[%s1 + $0x218] sm:$0xf]
    %v161 = vld [vmem:[%s1 + $0x21c] sm:$0xf]
    %v162 = vld [vmem:[%s1 + $0x220] sm:$0xf]
    %v163 = vld [vmem:[%s1 + $0x224] sm:$0xf]
    %v164 = vld [vmem:[%s1 + $0x228] sm:$0xf]
    %v165 = vld [vmem:[%s1 + $0x22c] sm:$0xf]
    %v166 = vld [vmem:[%s1 + $0x230] sm:$0xf]
    %v167 = vld [vmem:[%s1 + $0x234] sm:$0xf]
    %v168 = vld [vmem:[%s1 + $0x238] sm:$0xf]
    %v169 = vld [vmem:[%s1 + $0x23c] sm:$0xf]
    %v170 = vld [vmem:[%s1 + $0x240] sm:$0xf]
    %v171 = vld [vmem:[%s1 + $0x244] sm:$0xf]
    %v172 = vld [vmem:[%s1 + $0x248] sm:$0xf]
    %v173 = vld [vmem:[%s1 + $0x24c] sm:$0xf]
    %v174 = vld [vmem:[%s1 + $0x250] sm:$0xf]
    %v175 = vld [vmem:[%s1 + $0x254] sm:$0xf]
    %v176 = vld [vmem:[%s1 + $0x258] sm:$0xf]
    %v177 = vld [vmem:[%s1 + $0x25c] sm:$0xf]
    %v178 = vld [vmem:[%s1 + $0x260] sm:$0xf]
    %v179 = vld [vmem:[%s1 + $0x264] sm:$0xf]
    %v180 = vld [vmem:[%s1 + $0x268] sm:$0xf]
    %v181 = vld [vmem:[%s1 + $0x26c] sm:$0xf]
    %v182 = vld [vmem:[%s1 + $0x270] sm:$0xf]
    %v183 = vld [vmem:[%s1 + $0x274] sm:$0xf]
    %v184 = vld [vmem:[%s1 + $0x278] sm:$0xf]
    %v185 = vld [vmem:[%s1 + $0x27c] sm:$0xf]
    %v186 = vld [vmem:[%s1 + $0x280] sm:$0xf]
    %v187 = vld [vmem:[%s1 + $0x284] sm:$0xf]
    %v188 = vld [vmem:[%s1 + $0x288] sm:$0xf]
    %v189 = vld [vmem:[%s1 + $0x28c] sm:$0xf]
    %v190 = vld [vmem:[%s1 + $0x290] sm:$0xf]
    %v191 = vld [vmem:[%s1 + $0x294] sm:$0xf]
    %v192 = vld [vmem:[%s1 + $0x298] sm:$0xf]
    %v193 = vld [vmem:[%s1 + $0x29c] sm:$0xf]
    %v194 = vld [vmem:[%s1 + $0x2a0] sm:$0xf]
    %v195 = vld [vmem:[%s1 + $0x2a4] sm:$0xf]
    %v196 = vld [vmem:[%s1 + $0x2a8] sm:$0xf]
    %v197 = vld [vmem:[%s1 + $0x2ac] sm:$0xf]
    %v198 = vld [vmem:[%s1 + $0x2b0] sm:$0xf]
    %v199 = vld [vmem:[%s1 + $0x2b4] sm:$0xf]
    %v200 = vld [vmem:[%s1 + $0x2b8] sm:$0xf]
    %v201 = vld [vmem:[%s1 + $0x2bc] sm:$0xf]
    %v202 = vld [vmem:[%s1 + $0x2c0] sm:$0xf]
    %v203 = vld [vmem:[%s1 + $0x2c4] sm:$0xf]
    %v204 = vld [vmem:[%s1 + $0x2c8] sm:$0xf]
    %v205 = vld [vmem:[%s1 + $0x2cc] sm:$0xf]
    %v206 = vld [vmem:[%s1 + $0x2d0] sm:$0xf]
    %v207 = vld [vmem:[%s1 + $0x2d4] sm:$0xf]
    %v208 = vld [vmem:[%s1 + $0x2d8] sm:$0xf]
    %v209 = vld [vmem:[%s1 + $0x2dc] sm:$0xf]
    %v210 = vld [vmem:[%s1 + $0x2e0] sm:$0xf]
    %v211 = vld [vmem:[%s1 + $0x2e4] sm:$0xf]
    %v212 = vld [vmem:[%s1 + $0x2e8] sm:$0xf]
    %v213 = vld [vmem:[%s1 + $0x2ec] sm:$0xf]
    %v214 = vld [vmem:[%s1 + $0x2f0] sm:$0xf]
    %v215 = vld [vmem:[%s1 + $0x2f4] sm:$0xf]
    %v216 = vld [vmem:[%s1 + $0x2f8] sm:$0xf]
    %v217 = vld [vmem:[%s1 + $0x2fc] sm:$0xf]
    %v218 = vld [vmem:[%s1 + $0x300] sm:$0xf]
    %v219 = vld [vmem:[%s1 + $0x304] sm:$0xf]
    %v220 = vld [vmem:[%s1 + $0x308] sm:$0xf]
    %v221 = vld [vmem:[%s1 + $0x30c] sm:$0xf]
    %v222 = vld [vmem:[%s1 + $0x310] sm:$0xf]
    %v223 = vld [vmem:[%s1 + $0x314] sm:$0xf]
    %v224 = vld [vmem:[%s1 + $0x318] sm:$0xf]
    %v225 = vld [vmem:[%s1 + $0x31c] sm:$0xf]
    %v226 = vld [vmem:[%s1 + $0x320] sm:$0xf]
    %v227 = vld [vmem:[%s1 + $0x324] sm:$0xf]
    %v228 = vld [vmem:[%s1 + $0x328] sm:$0xf]
    %v229 = vld [vmem:[%s1 + $0x32c] sm:$0xf]
    %v230 = vld [vmem:[%s1 + $0x330] sm:$0xf]
    %v231 = vld [vmem:[%s1 + $0x334] sm:$0xf]
    %v232 = vld [vmem:[%s1 + $0x338] sm:$0xf]
    %v233 = vld [vmem:[%s1 + $0x33c] sm:$0xf]
    %v234 = vld [vmem:[%s1 + $0x340] sm:$0xf]
    %v235 = vld [vmem:[%s1 + $0x344] sm:$0xf]
    %v236 = vld [vmem:[%s1 + $0x348] sm:$0xf]
    %v237 = vld [vmem:[%s1 + $0x34c] sm:$0xf]
    %v238 = vld [vmem:[%s1 + $0x350] sm:$0xf]
    %v239 = vld [vmem:[%s1 + $0x354] sm:$0xf]
    %v240 = vld [vmem:[%s1 + $0x358] sm:$0xf]
    %v241 = vld [vmem:[%s1 + $0x35c] sm:$0xf]
    %v242 = vld [vmem:[%s1 + $0x360] sm:$0xf]
    %v243 = vld [vmem:[%s1 + $0x364] sm:$0xf]
    %v244 = vld [vmem:[%s1 + $0x368] sm:$0xf]
    %v245 = vld [vmem:[%s1 + $0x36c] sm:$0xf]
    %v246 = vld [vmem:[%s1 + $0x370] sm:$0xf]
    %v247 = vld [vmem:[%s1 + $0x374] sm:$0xf]
    %v248 = vld [vmem:[%s1 + $0x378] sm:$0xf]
    %v249 = vld [vmem:[%s1 + $0x37c] sm:$0xf]
    %v250 = vld [vmem:[%s1 + $0x380] sm:$0xf]
    %v251 = vld [vmem:[%s1 + $0x384] sm:$0xf]
    %v252 = vld [vmem:[%s1 + $0x388] sm:$0xf]
    %v253 = vld [vmem:[%s1 + $0x38c] sm:$0xf]
    %v254 = vld [vmem:[%s1 + $0x390] sm:$0xf]
    %v255 = vld [vmem:[%s1 + $0x394] sm:$0xf]
    %v256 = vld [vmem:[%s1 + $0x398] sm:$0xf]
    %v257 = vld [vmem:[%s1 + $0x39c] sm:$0xf]
    %v258 = vld [vmem:[%s1 + $0x3a0] sm:$0xf]
    %v259 = vld [vmem:[%s1 + $0x3a4] sm:$0xf]
    %v260 = vld [vmem:[%s1 + $0x3a8] sm:$0xf]
    %v261 = vld [vmem:[%s1 + $0x3ac] sm:$0xf]
    %v262 = vld [vmem:[%s1 + $0x3b0] sm:$0xf]
    %v263 = vld [vmem:[%s1 + $0x3b4] sm:$0xf]
    %v264 = vld [vmem:[%s1 + $0x3b8] sm:$0xf]
    %v265 = vld [vmem:[%s1 + $0x3bc] sm:$0xf]
    %v266 = vld [vmem:[%s1 + $0x3c0] sm:$0xf]
    %v267 = vld [vmem:[%s1 + $0x3c4] sm:$0xf]
    %v268 = vld [vmem:[%s1 + $0x3c8] sm:$0xf]
    %v269 = vld [vmem:[%s1 + $0x3cc] sm:$0xf]
    %v270 = vld [vmem:[%s1 + $0x3d0] sm:$0xf]
    %v271 = vld [vmem:[%s1 + $0x3d4] sm:$0xf]
    %v272 = vld [vmem:[%s1 + $0x3d8] sm:$0xf]
    %v273 = vld [vmem:[%s1 + $0x3dc] sm:$0xf]
    %v274 = vld [vmem:[%s1 + $0x3e0] sm:$0xf]
    %v275 = vld [vmem:[%s1 + $0x3e4] sm:$0xf]
    %v276 = vld [vmem:[%s1 + $0x3e8] sm:$0xf]
    %v277 = vld [vmem:[%s1 + $0x3ec] sm:$0xf]
    %v278 = vld [vmem:[%s1 + $0x3f0] sm:$0xf]
    %v279 = vld [vmem:[%s1 + $0x3f4] sm:$0xf]
    %v280 = vld [vmem:[%s1 + $0x3f8] sm:$0xf]
    %v281 = vld [vmem:[%s1 + $0x3fc] sm:$0xf]
    %v282 = vld [vmem:[%s1 + $0x400] sm:$0xf]
    %v283 = vld [vmem:[%s1 + $0x404] sm:$0xf]
    %v284 = vld [vmem:[%s1 + $0x408] sm:$0xf]
    %v285 = vld [vmem:[%s1 + $0x40c] sm:$0xf]
    %v286 = vld [vmem:[%s1 + $0x410] sm:$0xf]
    %v287 = vld [vmem:[%s1 + $0x414] sm:$0xf]
    %v288 = vld [vmem:[%s1 + $0x418] sm:$0xf]
    %v289 = vld [vmem:[%s1 + $0x41c] sm:$0xf]
    %v290 = vld [vmem:[%s1 + $0x420] sm:$0xf]
    %v291 = vld [vmem:[%s1 + $0x424] sm:$0xf]
    %v292 = vld [vmem:[%s1 + $0x428] sm:$0xf]
    %v293 = vld [vmem:[%s1 + $0x42c] sm:$0xf]
    %v294 = vld [vmem:[%s1 + $0x430] sm:$0xf]
    %v295 = vld [vmem:[%s1 + $0x434] sm:$0xf]
    %v296 = vld [vmem:[%s1 + $0x438] sm:$0xf]
    %v297 = vld [vmem:[%s1 + $0x43c] sm:$0xf]
    %v298 = vld [vmem:[%s1 + $0x440] sm:$0xf]
    %v299 = vld [vmem:[%s1 + $0x444] sm:$0xf]
    %v300 = vld [vmem:[%s1 + $0x448] sm:$0xf]
    %v301 = vld [vmem:[%s1 + $0x44c] sm:$0xf]
    %v302 = vld [vmem:[%s1 + $0x450] sm:$0xf]
    %v303 = vld [vmem:[%s1 + $0x454] sm:$0xf]
    %v304 = vld [vmem:[%s1 + $0x458] sm:$0xf]
    %v305 = vld [vmem:[%s1 + $0x45c] sm:$0xf]
    %v306 = vld [vmem:[%s1 + $0x460] sm:$0xf]
    %v307 = vld [vmem:[%s1 + $0x464] sm:$0xf]
    %v308 = vld [vmem:[%s1 + $0x468] sm:$0xf]
    %v309 = vld [vmem:[%s1 + $0x46c] sm:$0xf]
    %v310 = vld [vmem:[%s1 + $0x470] sm:$0xf]
    %v311 = vld [vmem:[%s1 + $0x474] sm:$0xf]
    %v312 = vld [vmem:[%s1 + $0x478] sm:$0xf]
    %v313 = vld [vmem:[%s1 + $0x47c] sm:$0xf]
    %v314 = vld [vmem:[%s1 + $0x480] sm:$0xf]
    %v315 = vld [vmem:[%s1 + $0x484] sm:$0xf]
    %v316 = vld [vmem:[%s1 + $0x488] sm:$0xf]
    %v317 = vld [vmem:[%s1 + $0x48c] sm:$0xf]
    %v318 = vld [vmem:[%s1 + $0x490] sm:$0xf]
    %v319 = vld [vmem:[%s1 + $0x494] sm:$0xf]
    %v320 = vld [vmem:[%s1 + $0x498] sm:$0xf]
    %v321 = vld [vmem:[%s1 + $0x49c] sm:$0xf]
    %v322 = vld [vmem:[%s1 + $0x4a0] sm:$0xf]
    %v323 = vld [vmem:[%s1 + $0x4a4] sm:$0xf]
    %v324 = vld [vmem:[%s1 + $0x4a8] sm:$0xf]
    %v325 = vld [vmem:[%s1 + $0x4ac] sm:$0xf]
    %v326 = vld [vmem:[%s1 + $0x4b0] sm:$0xf]
    %v327 = vld [vmem:[%s1 + $0x4b4] sm:$0xf]
    %v328 = vld [vmem:[%s1 + $0x4b8] sm:$0xf]
    %v329 = vld [vmem:[%s1 + $0x4bc] sm:$0xf]
    %v330 = vld [vmem:[%s1 + $0x4c0] sm:$0xf]
    %v331 = vld [vmem:[%s1 + $0x4c4] sm:$0xf]
    %v332 = vld [vmem:[%s1 + $0x4c8] sm:$0xf]
    %v333 = vld [vmem:[%s1 + $0x4cc] sm:$0xf]
    %v334 = vld [vmem:[%s1 + $0x4d0] sm:$0xf]
    %v335 = vld [vmem:[%s1 + $0x4d4] sm:$0xf]
    %v336 = vld [vmem:[%s1 + $0x4d8] sm:$0xf]
    %v337 = vld [vmem:[%s1 + $0x4dc] sm:$0xf]
    %v338 = vld [vmem:[%s1 + $0x4e0] sm:$0xf]
    %v339 = vld [vmem:[%s1 + $0x4e4] sm:$0xf]
    %v340 = vld [vmem:[%s1 + $0x4e8] sm:$0xf]
    %v341 = vld [vmem:[%s1 + $0x4ec] sm:$0xf]
    %v342 = vld [vmem:[%s1 + $0x4f0] sm:$0xf]
    %v343 = vld [vmem:[%s1 + $0x4f4] sm:$0xf]
    %v344 = vld [vmem:[%s1 + $0x4f8] sm:$0xf]
    %v345 = vld [vmem:[%s1 + $0x4fc] sm:$0xf]
    %v346 = vld [vmem:[%s1 + $0x500] sm:$0xf]
    %v347 = vld [vmem:[%s1 + $0x504] sm:$0xf]
    %v348 = vld [vmem:[%s1 + $0x508] sm:$0xf]
    %v349 = vld [vmem:[%s1 + $0x50c] sm:$0xf]
    %v350 = vld [vmem:[%s1 + $0x510] sm:$0xf]
    %v351 = vld [vmem:[%s1 + $0x514] sm:$0xf]
    %v352 = vld [vmem:[%s1 + $0x518] sm:$0xf]
    %v353 = vld [vmem:[%s1 + $0x51c] sm:$0xf]
    %v354 = vld [vmem:[%s1 + $0x520] sm:$0xf]
    %v355 = vld [vmem:[%s1 + $0x524] sm:$0xf]
    %v356 = vld [vmem:[%s1 + $0x528] sm:$0xf]
    %v357 = vld [vmem:[%s1 + $0x52c] sm:$0xf]
    %v358 = vld [vmem:[%s1 + $0x530] sm:$0xf]
    %v359 = vld [vmem:[%s1 + $0x534] sm:$0xf]
    %v360 = vld [vmem:[%s1 + $0x538] sm:$0xf]
    %v361 = vld [vmem:[%s1 + $0x53c] sm:$0xf]
    %v362 = vld [vmem:[%s1 + $0x540] sm:$0xf]
    %v363 = vld [vmem:[%s1 + $0x544] sm:$0xf]
    %v364 = vld [vmem:[%s1 + $0x548] sm:$0xf]
    %v365 = vld [vmem:[%s1 + $0x54c] sm:$0xf]
    %v366 = vld [vmem:[%s1 + $0x550] sm:$0xf]
    %v367 = vld [vmem:[%s1 + $0x554] sm:$0xf]
    %v368 = vld [vmem:[%s1 + $0x558] sm:$0xf]
    %v369 = vld [vmem:[%s1 + $0x55c] sm:$0xf]
    %v370 = vld [vmem:[%s1 + $0x560] sm:$0xf]
    %v371 = vld [vmem:[%s1 + $0x564] sm:$0xf]
    %v372 = vld [vmem:[%s1 + $0x568] sm:$0xf]
    %v373 = vld [vmem:[%s1 + $0x56c] sm:$0xf]
    %v374 = vld [vmem:[%s1 + $0x570] sm:$0xf]
    %v375 = vld [vmem:[%s1 + $0x574] sm:$0xf]
    %v376 = vld [vmem:[%s1 + $0x578] sm:$0xf]
    %v377 = vld [vmem:[%s1 + $0x57c] sm:$0xf]
    %v378 = vld [vmem:[%s1 + $0x580] sm:$0xf]
    %v379 = vld [vmem:[%s1 + $0x584] sm:$0xf]
    %v380 = vld [vmem:[%s1 + $0x588] sm:$0xf]
    %v381 = vld [vmem:[%s1 + $0x58c] sm:$0xf]
    %v382 = vld [vmem:[%s1 + $0x590] sm:$0xf]
    %v383 = vld [vmem:[%s1 + $0x594] sm:$0xf]
    %v384 = vld [vmem:[%s1 + $0x598] sm:$0xf]
    %v385 = vld [vmem:[%s1 + $0x59c] sm:$0xf]
    %v386 = vld [vmem:[%s1 + $0x5a0] sm:$0xf]
    %v387 = vld [vmem:[%s1 + $0x5a4] sm:$0xf]
    %v388 = vld [vmem:[%s1 + $0x5a8] sm:$0xf]
    %v389 = vld [vmem:[%s1 + $0x5ac] sm:$0xf]
    %v390 = vld [vmem:[%s1 + $0x5b0] sm:$0xf]
    %v391 = vld [vmem:[%s1 + $0x5b4] sm:$0xf]
    %v392 = vld [vmem:[%s1 + $0x5b8] sm:$0xf]
    %v393 = vld [vmem:[%s1 + $0x5bc] sm:$0xf]
    %v394 = vld [vmem:[%s1 + $0x5c0] sm:$0xf]
    %v395 = vld [vmem:[%s1 + $0x5c4] sm:$0xf]
    %v396 = vld [vmem:[%s1 + $0x5c8] sm:$0xf]
    %v397 = vld [vmem:[%s1 + $0x5cc] sm:$0xf]
    %v398 = vld [vmem:[%s1 + $0x5d0] sm:$0xf]
    %v399 = vld [vmem:[%s1 + $0x5d4] sm:$0xf]
    %v400 = vld [vmem:[%s1 + $0x5d8] sm:$0xf]
    %v401 = vld [vmem:[%s1 + $0x5dc] sm:$0xf]
    %v402 = vld [vmem:[%s1 + $0x5e0] sm:$0xf]
    %v403 = vld [vmem:[%s1 + $0x5e4] sm:$0xf]
    %v404 = vld [vmem:[%s1 + $0x5e8] sm:$0xf]
    %v405 = vld [vmem:[%s1 + $0x5ec] sm:$0xf]
    %v406 = vld [vmem:[%s1 + $0x5f0] sm:$0xf]
    %v407 = vld [vmem:[%s1 + $0x5f4] sm:$0xf]
    %v408 = vld [vmem:[%s1 + $0x5f8] sm:$0xf]
    %v409 = vld [vmem:[%s1 + $0x5fc] sm:$0xf]
    %v410 = vld [vmem:[%s1 + $0x600] sm:$0xf]
    %v411 = vld [vmem:[%s1 + $0x604] sm:$0xf]
    %v412 = vld [vmem:[%s1 + $0x608] sm:$0xf]
    %v413 = vld [vmem:[%s1 + $0x60c] sm:$0xf]
    %v414 = vld [vmem:[%s1 + $0x610] sm:$0xf]
    %v415 = vld [vmem:[%s1 + $0x614] sm:$0xf]
    %v416 = vld [vmem:[%s1 + $0x618] sm:$0xf]
    %v417 = vld [vmem:[%s1 + $0x61c] sm:$0xf]
    %v418 = vld [vmem:[%s2] sm:$0x1]
    %v420 = vlaneseq
    %v421 = vshrl.u32 %v420, 7
    %v422 = vsub.s32 0, %v421
    %v423 = vrot.slane %v418, %v422
    %v429 = vcombine.high %v22, %v22
    %v431 = vunpack.c.l.s4 1966171168
    %v432 = vunpack.c.0.s8 %v431
    %v433 = vlaneseq
    %v434 = vshrl.u32 %v433, 7
    %v435 = vsub.s32 %v432, %v434
    %v436 = vrot.slane %v22, %v435
    %v438 = vunpack.c.l.s4 1966171168
    %v439 = vunpack.c.0.s8 %v438
    %v440 = vlaneseq
    %v441 = vshrl.u32 %v440, 7
    %v442 = vsub.s32 %v439, %v441
    %v443 = vrot.slane %v429, %v442
    %v444 = vcombine.high %v436, %v436
    %v445 = vcombine.high %v443, %v443
    %v447 = vunpack.c.l.s4 1966171168
    %v448 = vunpack.c.0.s8 %v447
    %v449 = vlaneseq
    %v450 = vshrl.u32 %v449, 7
    %v451 = vsub.s32 %v448, %v450
    %v452 = vrot.slane %v436, %v451
    %v454 = vunpack.c.l.s4 1966171168
    %v455 = vunpack.c.0.s8 %v454
    %v456 = vlaneseq
    %v457 = vshrl.u32 %v456, 7
    %v458 = vsub.s32 %v455, %v457
    %v459 = vrot.slane %v443, %v458
    %v461 = vunpack.c.l.s4 1966171168
    %v462 = vunpack.c.0.s8 %v461
    %v463 = vlaneseq
    %v464 = vshrl.u32 %v463, 7
    %v465 = vsub.s32 %v462, %v464
    %v466 = vrot.slane %v444, %v465
    %v468 = vunpack.c.l.s4 1966171168
    %v469 = vunpack.c.0.s8 %v468
    %v470 = vlaneseq
    %v471 = vshrl.u32 %v470, 7
    %v472 = vsub.s32 %v469, %v471
    %v473 = vrot.slane %v445, %v472
    %v474 = vcombine.high %v452, %v452
    %v475 = vcombine.high %v459, %v459
    %v476 = vcombine.high %v466, %v466
    %v477 = vcombine.high %v473, %v473
    %v478 = vcombine.high %v23, %v23
    %v480 = vunpack.c.l.s4 1966171168
    %v481 = vunpack.c.0.s8 %v480
    %v482 = vlaneseq
    %v483 = vshrl.u32 %v482, 7
    %v484 = vsub.s32 %v481, %v483
    %v485 = vrot.slane %v23, %v484
    %v487 = vunpack.c.l.s4 1966171168
    %v488 = vunpack.c.0.s8 %v487
    %v489 = vlaneseq
    %v490 = vshrl.u32 %v489, 7
    %v491 = vsub.s32 %v488, %v490
    %v492 = vrot.slane %v478, %v491
    %v493 = vcombine.high %v485, %v485
    %v494 = vcombine.high %v492, %v492
    %v496 = vunpack.c.l.s4 1966171168
    %v497 = vunpack.c.0.s8 %v496
    %v498 = vlaneseq
    %v499 = vshrl.u32 %v498, 7
    %v500 = vsub.s32 %v497, %v499
    %v501 = vrot.slane %v485, %v500
    %v503 = vunpack.c.l.s4 1966171168
    %v504 = vunpack.c.0.s8 %v503
    %v505 = vlaneseq
    %v506 = vshrl.u32 %v505, 7
    %v507 = vsub.s32 %v504, %v506
    %v508 = vrot.slane %v492, %v507
    %v510 = vunpack.c.l.s4 1966171168
    %v511 = vunpack.c.0.s8 %v510
    %v512 = vlaneseq
    %v513 = vshrl.u32 %v512, 7
    %v514 = vsub.s32 %v511, %v513
    %v515 = vrot.slane %v493, %v514
    %v517 = vunpack.c.l.s4 1966171168
    %v518 = vunpack.c.0.s8 %v517
    %v519 = vlaneseq
    %v520 = vshrl.u32 %v519, 7
    %v521 = vsub.s32 %v518, %v520
    %v522 = vrot.slane %v494, %v521
    %v523 = vcombine.high %v501, %v501
    %v524 = vcombine.high %v508, %v508
    %v525 = vcombine.high %v515, %v515
    %v526 = vcombine.high %v522, %v522
    %v527 = vcombine.high %v24, %v24
    %v529 = vunpack.c.l.s4 1966171168
    %v530 = vunpack.c.0.s8 %v529
    %v531 = vlaneseq
    %v532 = vshrl.u32 %v531, 7
    %v533 = vsub.s32 %v530, %v532
    %v534 = vrot.slane %v24, %v533
    %v536 = vunpack.c.l.s4 1966171168
    %v537 = vunpack.c.0.s8 %v536
    %v538 = vlaneseq
    %v539 = vshrl.u32 %v538, 7
    %v540 = vsub.s32 %v537, %v539
    %v541 = vrot.slane %v527, %v540
    %v542 = vcombine.high %v534, %v534
    %v543 = vcombine.high %v541, %v541
    %v545 = vunpack.c.l.s4 1966171168
    %v546 = vunpack.c.0.s8 %v545
    %v547 = vlaneseq
    %v548 = vshrl.u32 %v547, 7
    %v549 = vsub.s32 %v546, %v548
    %v550 = vrot.slane %v534, %v549
    %v552 = vunpack.c.l.s4 1966171168
    %v553 = vunpack.c.0.s8 %v552
    %v554 = vlaneseq
    %v555 = vshrl.u32 %v554, 7
    %v556 = vsub.s32 %v553, %v555
    %v557 = vrot.slane %v541, %v556
    %v559 = vunpack.c.l.s4 1966171168
    %v560 = vunpack.c.0.s8 %v559
    %v561 = vlaneseq
    %v562 = vshrl.u32 %v561, 7
    %v563 = vsub.s32 %v560, %v562
    %v564 = vrot.slane %v542, %v563
    %v566 = vunpack.c.l.s4 1966171168
    %v567 = vunpack.c.0.s8 %v566
    %v568 = vlaneseq
    %v569 = vshrl.u32 %v568, 7
    %v570 = vsub.s32 %v567, %v569
    %v571 = vrot.slane %v543, %v570
    %v572 = vcombine.high %v550, %v550
    %v573 = vcombine.high %v557, %v557
    %v574 = vcombine.high %v564, %v564
    %v575 = vcombine.high %v571, %v571
    %v577 = vunpack.c.l.s4 1966171168
    %v578 = vunpack.c.0.s8 %v577
    %v579 = vlaneseq
    %v580 = vshrl.u32 %v579, 7
    %v581 = vsub.s32 %v578, %v580
    %v582 = vrot.slane %v25, %v581
    %v584 = vunpack.c.l.s4 1966171168
    %v585 = vunpack.c.0.s8 %v584
    %v586 = vlaneseq
    %v587 = vshrl.u32 %v586, 7
    %v588 = vsub.s32 %v585, %v587
    %v589 = vrot.slane %v582, %v588
    %v1006 = vunpack.c.l.b16 %v26
    %v1007 = vunpack.c.l.b16 %v27
    %v1008 = vunpack.c.l.b16 %v28
    %v1009 = vunpack.c.l.b16 %v29
    %v1010 = vunpack.c.l.b16 %v30
    %v1011 = vunpack.c.l.b16 %v31
    %v1012 = vunpack.c.l.b16 %v32
    %v1013 = vunpack.c.l.b16 %v33
    %v1014 = vunpack.c.l.b16 %v34
    %v1015 = vunpack.c.l.b16 %v35
    %v1016 = vunpack.c.l.b16 %v36
    %v1017 = vunpack.c.l.b16 %v37
    %v1018 = vunpack.c.l.b16 %v38
    %v1019 = vunpack.c.l.b16 %v39
    %v1020 = vunpack.c.l.b16 %v40
    %v1021 = vunpack.c.l.b16 %v41
    %v1022 = vunpack.c.l.b16 %v42
    %v1023 = vunpack.c.l.b16 %v43
    %v1024 = vunpack.c.l.b16 %v44
    %v1025 = vunpack.c.l.b16 %v45
    %v1026 = vunpack.c.l.b16 %v46
    %v1027 = vunpack.c.l.b16 %v47
    %v1028 = vunpack.c.l.b16 %v48
    %v1029 = vunpack.c.l.b16 %v49
    %v1030 = vunpack.c.l.b16 %v50
    %v1031 = vunpack.c.l.b16 %v51
    %v1032 = vunpack.c.l.b16 %v52
    %v1033 = vunpack.c.l.b16 %v53
    %v1034 = vunpack.c.l.b16 %v54
    %v1035 = vunpack.c.l.b16 %v55
    %v1036 = vunpack.c.l.b16 %v56
    %v1037 = vunpack.c.l.b16 %v57
    %v1038 = vunpack.c.l.b16 %v58
    %v1039 = vunpack.c.l.b16 %v59
    %v1040 = vunpack.c.l.b16 %v60
    %v1041 = vunpack.c.l.b16 %v61
    %v1042 = vunpack.c.l.b16 %v62
    %v1043 = vunpack.c.l.b16 %v63
    %v1044 = vunpack.c.l.b16 %v64
    %v1045 = vunpack.c.l.b16 %v65
    %v1046 = vunpack.c.l.b16 %v66
    %v1047 = vunpack.c.l.b16 %v67
    %v1048 = vunpack.c.l.b16 %v68
    %v1049 = vunpack.c.l.b16 %v69
    %v1050 = vunpack.c.l.b16 %v70
    %v1051 = vunpack.c.l.b16 %v71
    %v1052 = vunpack.c.l.b16 %v72
    %v1053 = vunpack.c.l.b16 %v73
    %v1054 = vunpack.c.l.b16 %v74
    %v1055 = vunpack.c.l.b16 %v75
    %v1056 = vunpack.c.l.b16 %v76
    %v1057 = vunpack.c.l.b16 %v77
    %v1058 = vunpack.c.l.b16 %v78
    %v1059 = vunpack.c.l.b16 %v79
    %v1060 = vunpack.c.l.b16 %v80
    %v1061 = vunpack.c.l.b16 %v81
    %v1062 = vunpack.c.l.b16 %v82
    %v1063 = vunpack.c.l.b16 %v83
    %v1064 = vunpack.c.l.b16 %v84
    %v1065 = vunpack.c.l.b16 %v85
    %v1066 = vunpack.c.l.b16 %v86
    %v1067 = vunpack.c.l.b16 %v87
    %v1068 = vunpack.c.l.b16 %v88
    %v1069 = vunpack.c.l.b16 %v89
    %v1070 = vunpack.c.l.b16 %v90
    %v1071 = vunpack.c.l.b16 %v91
    %v1072 = vunpack.c.l.b16 %v92
    %v1073 = vunpack.c.l.b16 %v93
    %v1074 = vunpack.c.l.b16 %v94
    %v1075 = vunpack.c.l.b16 %v95
    %v1076 = vunpack.c.l.b16 %v96
    %v1077 = vunpack.c.l.b16 %v97
    %v1078 = vunpack.c.l.b16 %v98
    %v1079 = vunpack.c.l.b16 %v99
    %v1080 = vunpack.c.l.b16 %v100
    %v1081 = vunpack.c.l.b16 %v101
    %v1082 = vunpack.c.l.b16 %v102
    %v1083 = vunpack.c.l.b16 %v103
    %v1084 = vunpack.c.l.b16 %v104
    %v1085 = vunpack.c.l.b16 %v105
    %v1086 = vunpack.c.l.b16 %v106
    %v1087 = vunpack.c.l.b16 %v107
    %v1088 = vunpack.c.l.b16 %v108
    %v1089 = vunpack.c.l.b16 %v109
    %v1090 = vunpack.c.l.b16 %v110
    %v1091 = vunpack.c.l.b16 %v111
    %v1092 = vunpack.c.l.b16 %v112
    %v1093 = vunpack.c.l.b16 %v113
    %v1094 = vunpack.c.l.b16 %v114
    %v1095 = vunpack.c.l.b16 %v115
    %v1096 = vunpack.c.l.b16 %v116
    %v1097 = vunpack.c.l.b16 %v117
    %v1098 = vunpack.c.l.b16 %v118
    %v1099 = vunpack.c.l.b16 %v119
    %v1100 = vunpack.c.l.b16 %v120
    %v1101 = vunpack.c.l.b16 %v121
    %v1102 = vunpack.c.l.b16 %v122
    %v1103 = vunpack.c.l.b16 %v123
    %v1104 = vunpack.c.l.b16 %v124
    %v1105 = vunpack.c.l.b16 %v125
    %v1106 = vunpack.c.l.b16 %v126
    %v1107 = vunpack.c.l.b16 %v127
    %v1108 = vunpack.c.l.b16 %v128
    %v1109 = vunpack.c.l.b16 %v129
    %v1110 = vunpack.c.l.b16 %v130
    %v1111 = vunpack.c.l.b16 %v131
    %v1112 = vunpack.c.l.b16 %v132
    %v1113 = vunpack.c.l.b16 %v133
    %v1114 = vunpack.c.l.b16 %v134
    %v1115 = vunpack.c.l.b16 %v135
    %v1116 = vunpack.c.l.b16 %v136
    %v1117 = vunpack.c.l.b16 %v137
    %v1118 = vunpack.c.l.b16 %v138
    %v1119 = vunpack.c.l.b16 %v139
    %v1120 = vunpack.c.l.b16 %v140
    %v1121 = vunpack.c.l.b16 %v141
    %v1122 = vunpack.c.l.b16 %v142
    %v1123 = vunpack.c.l.b16 %v143
    %v1124 = vunpack.c.l.b16 %v144
    %v1125 = vunpack.c.l.b16 %v145
    %v1126 = vunpack.c.l.b16 %v146
    %v1127 = vunpack.c.l.b16 %v147
    %v1128 = vunpack.c.l.b16 %v148
    %v1129 = vunpack.c.l.b16 %v149
    %v1130 = vunpack.c.l.b16 %v150
    %v1131 = vunpack.c.l.b16 %v151
    %v1132 = vunpack.c.l.b16 %v152
    %v1133 = vunpack.c.l.b16 %v153
    %v1134 = vunpack.c.l.b16 %v154
    %v1135 = vunpack.c.l.b16 %v155
    %v1136 = vunpack.c.l.b16 %v156
    %v1137 = vunpack.c.l.b16 %v157
    %v1138 = vunpack.c.l.b16 %v158
    %v1139 = vunpack.c.l.b16 %v159
    %v1140 = vunpack.c.l.b16 %v160
    %v1141 = vunpack.c.l.b16 %v161
    %v1142 = vunpack.c.l.b16 %v162
    %v1143 = vunpack.c.l.b16 %v163
    %v1144 = vunpack.c.l.b16 %v164
    %v1145 = vunpack.c.l.b16 %v165
    %v1146 = vunpack.c.l.b16 %v166
    %v1147 = vunpack.c.l.b16 %v167
    %v1148 = vunpack.c.l.b16 %v168
    %v1149 = vunpack.c.l.b16 %v169
    %v1150 = vunpack.c.l.b16 %v170
    %v1151 = vunpack.c.l.b16 %v171
    %v1152 = vunpack.c.l.b16 %v172
    %v1153 = vunpack.c.l.b16 %v173
    %v1154 = vunpack.c.l.b16 %v174
    %v1155 = vunpack.c.l.b16 %v175
    %v1156 = vunpack.c.l.b16 %v176
    %v1157 = vunpack.c.l.b16 %v177
    %v1158 = vunpack.c.l.b16 %v178
    %v1159 = vunpack.c.l.b16 %v179
    %v1160 = vunpack.c.l.b16 %v180
    %v1161 = vunpack.c.l.b16 %v181
    %v1162 = vunpack.c.l.b16 %v182
    %v1163 = vunpack.c.l.b16 %v183
    %v1164 = vunpack.c.l.b16 %v184
    %v1165 = vunpack.c.l.b16 %v185
    %v1166 = vunpack.c.l.b16 %v186
    %v1167 = vunpack.c.l.b16 %v187
    %v1168 = vunpack.c.l.b16 %v188
    %v1169 = vunpack.c.l.b16 %v189
    %v1170 = vunpack.c.l.b16 %v190
    %v1171 = vunpack.c.l.b16 %v191
    %v1172 = vunpack.c.l.b16 %v192
    %v1173 = vunpack.c.l.b16 %v193
    %v1174 = vunpack.c.l.b16 %v194
    %v1175 = vunpack.c.l.b16 %v195
    %v1176 = vunpack.c.l.b16 %v196
    %v1177 = vunpack.c.l.b16 %v197
    %v1178 = vunpack.c.l.b16 %v198
    %v1179 = vunpack.c.l.b16 %v199
    %v1180 = vunpack.c.l.b16 %v200
    %v1181 = vunpack.c.l.b16 %v201
    %v1182 = vunpack.c.l.b16 %v202
    %v1183 = vunpack.c.l.b16 %v203
    %v1184 = vunpack.c.l.b16 %v204
    %v1185 = vunpack.c.l.b16 %v205
    %v1186 = vunpack.c.l.b16 %v206
    %v1187 = vunpack.c.l.b16 %v207
    %v1188 = vunpack.c.l.b16 %v208
    %v1189 = vunpack.c.l.b16 %v209
    %v1190 = vunpack.c.l.b16 %v210
    %v1191 = vunpack.c.l.b16 %v211
    %v1192 = vunpack.c.l.b16 %v212
    %v1193 = vunpack.c.l.b16 %v213
    %v1194 = vunpack.c.l.b16 %v214
    %v1195 = vunpack.c.l.b16 %v215
    %v1196 = vunpack.c.l.b16 %v216
    %v1197 = vunpack.c.l.b16 %v217
    %v1198 = vunpack.c.l.b16 %v218
    %v1199 = vunpack.c.l.b16 %v219
    %v1200 = vunpack.c.l.b16 %v220
    %v1201 = vunpack.c.l.b16 %v221
    %v1202 = vunpack.c.l.b16 %v222
    %v1203 = vunpack.c.l.b16 %v223
    %v1204 = vunpack.c.l.b16 %v224
    %v1205 = vunpack.c.l.b16 %v225
    %v1206 = vunpack.c.l.b16 %v226
    %v1207 = vunpack.c.l.b16 %v227
    %v1208 = vunpack.c.l.b16 %v228
    %v1209 = vunpack.c.l.b16 %v229
    %v1210 = vunpack.c.l.b16 %v230
    %v1211 = vunpack.c.l.b16 %v231
    %v1212 = vunpack.c.l.b16 %v232
    %v1213 = vunpack.c.l.b16 %v233
    %v1214 = vunpack.c.l.b16 %v234
    %v1215 = vunpack.c.l.b16 %v235
    %v1216 = vunpack.c.l.b16 %v236
    %v1217 = vunpack.c.l.b16 %v237
    %v1218 = vunpack.c.l.b16 %v238
    %v1219 = vunpack.c.l.b16 %v239
    %v1220 = vunpack.c.l.b16 %v240
    %v1221 = vunpack.c.l.b16 %v241
    %v1222 = vunpack.c.l.b16 %v242
    %v1223 = vunpack.c.l.b16 %v243
    %v1224 = vunpack.c.l.b16 %v244
    %v1225 = vunpack.c.l.b16 %v245
    %v1226 = vunpack.c.l.b16 %v246
    %v1227 = vunpack.c.l.b16 %v247
    %v1228 = vunpack.c.l.b16 %v248
    %v1229 = vunpack.c.l.b16 %v249
    %v1230 = vunpack.c.l.b16 %v250
    %v1231 = vunpack.c.l.b16 %v251
    %v1232 = vunpack.c.l.b16 %v252
    %v1233 = vunpack.c.l.b16 %v253
    %v1234 = vunpack.c.l.b16 %v254
    %v1235 = vunpack.c.l.b16 %v255
    %v1236 = vunpack.c.l.b16 %v256
    %v1237 = vunpack.c.l.b16 %v257
    %v1238 = vunpack.c.l.b16 %v258
    %v1239 = vunpack.c.l.b16 %v259
    %v1240 = vunpack.c.l.b16 %v260
    %v1241 = vunpack.c.l.b16 %v261
    %v1242 = vunpack.c.l.b16 %v262
    %v1243 = vunpack.c.l.b16 %v263
    %v1244 = vunpack.c.l.b16 %v264
    %v1245 = vunpack.c.l.b16 %v265
    %v1246 = vunpack.c.l.b16 %v266
    %v1247 = vunpack.c.l.b16 %v267
    %v1248 = vunpack.c.l.b16 %v268
    %v1249 = vunpack.c.l.b16 %v269
    %v1250 = vunpack.c.l.b16 %v270
    %v1251 = vunpack.c.l.b16 %v271
    %v1252 = vunpack.c.l.b16 %v272
    %v1253 = vunpack.c.l.b16 %v273
    %v1254 = vunpack.c.l.b16 %v274
    %v1255 = vunpack.c.l.b16 %v275
    %v1256 = vunpack.c.l.b16 %v276
    %v1257 = vunpack.c.l.b16 %v277
    %v1258 = vunpack.c.l.b16 %v278
    %v1259 = vunpack.c.l.b16 %v279
    %v1260 = vunpack.c.l.b16 %v280
    %v1261 = vunpack.c.l.b16 %v281
    %v1262 = vunpack.c.l.b16 %v282
    %v1263 = vunpack.c.l.b16 %v283
    %v1264 = vunpack.c.l.b16 %v284
    %v1265 = vunpack.c.l.b16 %v285
    %v1266 = vunpack.c.l.b16 %v286
    %v1267 = vunpack.c.l.b16 %v287
    %v1268 = vunpack.c.l.b16 %v288
    %v1269 = vunpack.c.l.b16 %v289
    %v1270 = vunpack.c.l.b16 %v290
    %v1271 = vunpack.c.l.b16 %v291
    %v1272 = vunpack.c.l.b16 %v292
    %v1273 = vunpack.c.l.b16 %v293
    %v1274 = vunpack.c.l.b16 %v294
    %v1275 = vunpack.c.l.b16 %v295
    %v1276 = vunpack.c.l.b16 %v296
    %v1277 = vunpack.c.l.b16 %v297
    %v1278 = vunpack.c.l.b16 %v298
    %v1279 = vunpack.c.l.b16 %v299
    %v1280 = vunpack.c.l.b16 %v300
    %v1281 = vunpack.c.l.b16 %v301
    %v1282 = vunpack.c.l.b16 %v302
    %v1283 = vunpack.c.l.b16 %v303
    %v1284 = vunpack.c.l.b16 %v304
    %v1285 = vunpack.c.l.b16 %v305
    %v1286 = vunpack.c.l.b16 %v306
    %v1287 = vunpack.c.l.b16 %v307
    %v1288 = vunpack.c.l.b16 %v308
    %v1289 = vunpack.c.l.b16 %v309
    %v1290 = vunpack.c.l.b16 %v310
    %v1291 = vunpack.c.l.b16 %v311
    %v1292 = vunpack.c.l.b16 %v312
    %v1293 = vunpack.c.l.b16 %v313
    %v1294 = vunpack.c.l.b16 %v314
    %v1295 = vunpack.c.l.b16 %v315
    %v1296 = vunpack.c.l.b16 %v316
    %v1297 = vunpack.c.l.b16 %v317
    %v1298 = vunpack.c.l.b16 %v318
    %v1299 = vunpack.c.l.b16 %v319
    %v1300 = vunpack.c.l.b16 %v320
    %v1301 = vunpack.c.l.b16 %v321
    %v1302 = vunpack.c.l.b16 %v322
    %v1303 = vunpack.c.l.b16 %v323
    %v1304 = vunpack.c.l.b16 %v324
    %v1305 = vunpack.c.l.b16 %v325
    %v1306 = vunpack.c.l.b16 %v326
    %v1307 = vunpack.c.l.b16 %v327
    %v1308 = vunpack.c.l.b16 %v328
    %v1309 = vunpack.c.l.b16 %v329
    %v1310 = vunpack.c.l.b16 %v330
    %v1311 = vunpack.c.l.b16 %v331
    %v1312 = vunpack.c.l.b16 %v332
    %v1313 = vunpack.c.l.b16 %v333
    %v1314 = vunpack.c.l.b16 %v334
    %v1315 = vunpack.c.l.b16 %v335
    %v1316 = vunpack.c.l.b16 %v336
    %v1317 = vunpack.c.l.b16 %v337
    %v1318 = vunpack.c.l.b16 %v338
    %v1319 = vunpack.c.l.b16 %v339
    %v1320 = vunpack.c.l.b16 %v340
    %v1321 = vunpack.c.l.b16 %v341
    %v1322 = vunpack.c.l.b16 %v342
    %v1323 = vunpack.c.l.b16 %v343
    %v1324 = vunpack.c.l.b16 %v344
    %v1325 = vunpack.c.l.b16 %v345
    %v1326 = vunpack.c.l.b16 %v346
    %v1327 = vunpack.c.l.b16 %v347
    %v1328 = vunpack.c.l.b16 %v348
    %v1329 = vunpack.c.l.b16 %v349
    %v1330 = vunpack.c.l.b16 %v350
    %v1331 = vunpack.c.l.b16 %v351
    %v1332 = vunpack.c.l.b16 %v352
    %v1333 = vunpack.c.l.b16 %v353
    %v1334 = vunpack.c.l.b16 %v354
    %v1335 = vunpack.c.l.b16 %v355
    %v1336 = vunpack.c.l.b16 %v356
    %v1337 = vunpack.c.l.b16 %v357
    %v1338 = vunpack.c.l.b16 %v358
    %v1339 = vunpack.c.l.b16 %v359
    %v1340 = vunpack.c.l.b16 %v360
    %v1341 = vunpack.c.l.b16 %v361
    %v1342 = vunpack.c.l.b16 %v362
    %v1343 = vunpack.c.l.b16 %v363
    %v1344 = vunpack.c.l.b16 %v364
    %v1345 = vunpack.c.l.b16 %v365
    %v1346 = vunpack.c.l.b16 %v366
    %v1347 = vunpack.c.l.b16 %v367
    %v1348 = vunpack.c.l.b16 %v368
    %v1349 = vunpack.c.l.b16 %v369
    %v1350 = vunpack.c.l.b16 %v370
    %v1351 = vunpack.c.l.b16 %v371
    %v1352 = vunpack.c.l.b16 %v372
    %v1353 = vunpack.c.l.b16 %v373
    %v1354 = vunpack.c.l.b16 %v374
    %v1355 = vunpack.c.l.b16 %v375
    %v1356 = vunpack.c.l.b16 %v376
    %v1357 = vunpack.c.l.b16 %v377
    %v1358 = vunpack.c.l.b16 %v378
    %v1359 = vunpack.c.l.b16 %v379
    %v1360 = vunpack.c.l.b16 %v380
    %v1361 = vunpack.c.l.b16 %v381
    %v1362 = vunpack.c.l.b16 %v382
    %v1363 = vunpack.c.l.b16 %v383
    %v1364 = vunpack.c.l.b16 %v384
    %v1365 = vunpack.c.l.b16 %v385
    %v1366 = vunpack.c.l.b16 %v386
    %v1367 = vunpack.c.l.b16 %v387
    %v1368 = vunpack.c.l.b16 %v388
    %v1369 = vunpack.c.l.b16 %v389
    %v1370 = vunpack.c.l.b16 %v390
    %v1371 = vunpack.c.l.b16 %v391
    %v1372 = vunpack.c.l.b16 %v392
    %v1373 = vunpack.c.l.b16 %v393
    %v1374 = vunpack.c.l.b16 %v394
    %v1375 = vunpack.c.l.b16 %v395
    %v1376 = vunpack.c.l.b16 %v396
    %v1377 = vunpack.c.l.b16 %v397
    %v1378 = vunpack.c.l.b16 %v398
    %v1379 = vunpack.c.l.b16 %v399
    %v1380 = vunpack.c.l.b16 %v400
    %v1381 = vunpack.c.l.b16 %v401
    %v1382 = vunpack.c.l.b16 %v402
    %v1383 = vunpack.c.l.b16 %v403
    %v1384 = vunpack.c.l.b16 %v404
    %v1385 = vunpack.c.l.b16 %v405
    %v1386 = vunpack.c.l.b16 %v406
    %v1387 = vunpack.c.l.b16 %v407
    %v1388 = vunpack.c.l.b16 %v408
    %v1389 = vunpack.c.l.b16 %v409
    %v1390 = vunpack.c.l.b16 %v410
    %v1391 = vunpack.c.l.b16 %v411
    %v1392 = vunpack.c.l.b16 %v412
    %v1393 = vunpack.c.l.b16 %v413
    %v1394 = vunpack.c.l.b16 %v414
    %v1395 = vunpack.c.l.b16 %v415
    %v1396 = vunpack.c.l.b16 %v416
    %v1397 = vunpack.c.l.b16 %v417
    %v1398 = vpack.c.b16 %v1007, %v1006
    %v1399 = vpack.c.b16 %v1009, %v1008
    %v1400 = vpack.c.b16 %v1011, %v1010
    %v1401 = vpack.c.b16 %v1013, %v1012
    %v1402 = vpack.c.b16 %v1015, %v1014
    %v1403 = vpack.c.b16 %v1017, %v1016
    %v1404 = vpack.c.b16 %v1019, %v1018
    %v1405 = vpack.c.b16 %v1021, %v1020
    %v1406 = vpack.c.b16 %v1023, %v1022
    %v1407 = vpack.c.b16 %v1025, %v1024
    %v1408 = vpack.c.b16 %v1027, %v1026
    %v1409 = vpack.c.b16 %v1029, %v1028
    %v1410 = vpack.c.b16 %v1031, %v1030
    %v1411 = vpack.c.b16 %v1033, %v1032
    %v1412 = vpack.c.b16 %v1035, %v1034
    %v1413 = vpack.c.b16 %v1037, %v1036
    %v1414 = vpack.c.b16 %v1039, %v1038
    %v1415 = vpack.c.b16 %v1041, %v1040
    %v1416 = vpack.c.b16 %v1043, %v1042
    %v1417 = vpack.c.b16 %v1045, %v1044
    %v1418 = vpack.c.b16 %v1047, %v1046
    %v1419 = vpack.c.b16 %v1049, %v1048
    %v1420 = vpack.c.b16 %v1051, %v1050
    %v1421 = vpack.c.b16 %v1053, %v1052
    %v1422 = vpack.c.b16 %v1055, %v1054
    %v1423 = vpack.c.b16 %v1057, %v1056
    %v1424 = vpack.c.b16 %v1059, %v1058
    %v1425 = vpack.c.b16 %v1061, %v1060
    %v1426 = vpack.c.b16 %v1063, %v1062
    %v1427 = vpack.c.b16 %v1065, %v1064
    %v1428 = vpack.c.b16 %v1067, %v1066
    %v1429 = vpack.c.b16 %v1069, %v1068
    %v1430 = vpack.c.b16 %v1071, %v1070
    %v1431 = vpack.c.b16 %v1073, %v1072
    %v1432 = vpack.c.b16 %v1075, %v1074
    %v1433 = vpack.c.b16 %v1077, %v1076
    %v1434 = vpack.c.b16 %v1079, %v1078
    %v1435 = vpack.c.b16 %v1081, %v1080
    %v1436 = vpack.c.b16 %v1083, %v1082
    %v1437 = vpack.c.b16 %v1085, %v1084
    %v1438 = vpack.c.b16 %v1087, %v1086
    %v1439 = vpack.c.b16 %v1089, %v1088
    %v1440 = vpack.c.b16 %v1091, %v1090
    %v1441 = vpack.c.b16 %v1093, %v1092
    %v1442 = vpack.c.b16 %v1095, %v1094
    %v1443 = vpack.c.b16 %v1097, %v1096
    %v1444 = vpack.c.b16 %v1099, %v1098
    %v1445 = vpack.c.b16 %v1101, %v1100
    %v1446 = vpack.c.b16 %v1103, %v1102
    %v1447 = vpack.c.b16 %v1105, %v1104
    %v1448 = vpack.c.b16 %v1107, %v1106
    %v1449 = vpack.c.b16 %v1109, %v1108
    %v1450 = vpack.c.b16 %v1111, %v1110
    %v1451 = vpack.c.b16 %v1113, %v1112
    %v1452 = vpack.c.b16 %v1115, %v1114
    %v1453 = vpack.c.b16 %v1117, %v1116
    %v1454 = vpack.c.b16 %v1119, %v1118
    %v1455 = vpack.c.b16 %v1121, %v1120
    %v1456 = vpack.c.b16 %v1123, %v1122
    %v1457 = vpack.c.b16 %v1125, %v1124
    %v1458 = vpack.c.b16 %v1127, %v1126
    %v1459 = vpack.c.b16 %v1129, %v1128
    %v1460 = vpack.c.b16 %v1131, %v1130
    %v1461 = vpack.c.b16 %v1133, %v1132
    %v1462 = vpack.c.b16 %v1135, %v1134
    %v1463 = vpack.c.b16 %v1137, %v1136
    %v1464 = vpack.c.b16 %v1139, %v1138
    %v1465 = vpack.c.b16 %v1141, %v1140
    %v1466 = vpack.c.b16 %v1143, %v1142
    %v1467 = vpack.c.b16 %v1145, %v1144
    %v1468 = vpack.c.b16 %v1147, %v1146
    %v1469 = vpack.c.b16 %v1149, %v1148
    %v1470 = vpack.c.b16 %v1151, %v1150
    %v1471 = vpack.c.b16 %v1153, %v1152
    %v1472 = vpack.c.b16 %v1155, %v1154
    %v1473 = vpack.c.b16 %v1157, %v1156
    %v1474 = vpack.c.b16 %v1159, %v1158
    %v1475 = vpack.c.b16 %v1161, %v1160
    %v1476 = vpack.c.b16 %v1163, %v1162
    %v1477 = vpack.c.b16 %v1165, %v1164
    %v1478 = vpack.c.b16 %v1167, %v1166
    %v1479 = vpack.c.b16 %v1169, %v1168
    %v1480 = vpack.c.b16 %v1171, %v1170
    %v1481 = vpack.c.b16 %v1173, %v1172
    %v1482 = vpack.c.b16 %v1175, %v1174
    %v1483 = vpack.c.b16 %v1177, %v1176
    %v1484 = vpack.c.b16 %v1179, %v1178
    %v1485 = vpack.c.b16 %v1181, %v1180
    %v1486 = vpack.c.b16 %v1183, %v1182
    %v1487 = vpack.c.b16 %v1185, %v1184
    %v1488 = vpack.c.b16 %v1187, %v1186
    %v1489 = vpack.c.b16 %v1189, %v1188
    %v1490 = vpack.c.b16 %v1191, %v1190
    %v1491 = vpack.c.b16 %v1193, %v1192
    %v1492 = vpack.c.b16 %v1195, %v1194
    %v1493 = vpack.c.b16 %v1197, %v1196
    %v1494 = vpack.c.b16 %v1199, %v1198
    %v1495 = vpack.c.b16 %v1201, %v1200
    %v1496 = vpack.c.b16 %v1203, %v1202
    %v1497 = vpack.c.b16 %v1205, %v1204
    %v1498 = vpack.c.b16 %v1207, %v1206
    %v1499 = vpack.c.b16 %v1209, %v1208
    %v1500 = vpack.c.b16 %v1211, %v1210
    %v1501 = vpack.c.b16 %v1213, %v1212
    %v1502 = vpack.c.b16 %v1215, %v1214
    %v1503 = vpack.c.b16 %v1217, %v1216
    %v1504 = vpack.c.b16 %v1219, %v1218
    %v1505 = vpack.c.b16 %v1221, %v1220
    %v1506 = vpack.c.b16 %v1223, %v1222
    %v1507 = vpack.c.b16 %v1225, %v1224
    %v1508 = vpack.c.b16 %v1227, %v1226
    %v1509 = vpack.c.b16 %v1229, %v1228
    %v1510 = vpack.c.b16 %v1231, %v1230
    %v1511 = vpack.c.b16 %v1233, %v1232
    %v1512 = vpack.c.b16 %v1235, %v1234
    %v1513 = vpack.c.b16 %v1237, %v1236
    %v1514 = vpack.c.b16 %v1239, %v1238
    %v1515 = vpack.c.b16 %v1241, %v1240
    %v1516 = vpack.c.b16 %v1243, %v1242
    %v1517 = vpack.c.b16 %v1245, %v1244
    %v1518 = vpack.c.b16 %v1247, %v1246
    %v1519 = vpack.c.b16 %v1249, %v1248
    %v1520 = vpack.c.b16 %v1251, %v1250
    %v1521 = vpack.c.b16 %v1253, %v1252
    %v1522 = vpack.c.b16 %v1255, %v1254
    %v1523 = vpack.c.b16 %v1257, %v1256
    %v1524 = vpack.c.b16 %v1259, %v1258
    %v1525 = vpack.c.b16 %v1261, %v1260
    %v1526 = vpack.c.b16 %v1263, %v1262
    %v1527 = vpack.c.b16 %v1265, %v1264
    %v1528 = vpack.c.b16 %v1267, %v1266
    %v1529 = vpack.c.b16 %v1269, %v1268
    %v1530 = vpack.c.b16 %v1271, %v1270
    %v1531 = vpack.c.b16 %v1273, %v1272
    %v1532 = vpack.c.b16 %v1275, %v1274
    %v1533 = vpack.c.b16 %v1277, %v1276
    %v1534 = vpack.c.b16 %v1279, %v1278
    %v1535 = vpack.c.b16 %v1281, %v1280
    %v1536 = vpack.c.b16 %v1283, %v1282
    %v1537 = vpack.c.b16 %v1285, %v1284
    %v1538 = vpack.c.b16 %v1287, %v1286
    %v1539 = vpack.c.b16 %v1289, %v1288
    %v1540 = vpack.c.b16 %v1291, %v1290
    %v1541 = vpack.c.b16 %v1293, %v1292
    %v1542 = vpack.c.b16 %v1295, %v1294
    %v1543 = vpack.c.b16 %v1297, %v1296
    %v1544 = vpack.c.b16 %v1299, %v1298
    %v1545 = vpack.c.b16 %v1301, %v1300
    %v1546 = vpack.c.b16 %v1303, %v1302
    %v1547 = vpack.c.b16 %v1305, %v1304
    %v1548 = vpack.c.b16 %v1307, %v1306
    %v1549 = vpack.c.b16 %v1309, %v1308
    %v1550 = vpack.c.b16 %v1311, %v1310
    %v1551 = vpack.c.b16 %v1313, %v1312
    %v1552 = vpack.c.b16 %v1315, %v1314
    %v1553 = vpack.c.b16 %v1317, %v1316
    %v1554 = vpack.c.b16 %v1319, %v1318
    %v1555 = vpack.c.b16 %v1321, %v1320
    %v1556 = vpack.c.b16 %v1323, %v1322
    %v1557 = vpack.c.b16 %v1325, %v1324
    %v1558 = vpack.c.b16 %v1327, %v1326
    %v1559 = vpack.c.b16 %v1329, %v1328
    %v1560 = vpack.c.b16 %v1331, %v1330
    %v1561 = vpack.c.b16 %v1333, %v1332
    %v1562 = vpack.c.b16 %v1335, %v1334
    %v1563 = vpack.c.b16 %v1337, %v1336
    %v1564 = vpack.c.b16 %v1339, %v1338
    %v1565 = vpack.c.b16 %v1341, %v1340
    %v1566 = vpack.c.b16 %v1343, %v1342
    %v1567 = vpack.c.b16 %v1345, %v1344
    %v1568 = vpack.c.b16 %v1347, %v1346
    %v1569 = vpack.c.b16 %v1349, %v1348
    %v1570 = vpack.c.b16 %v1351, %v1350
    %v1571 = vpack.c.b16 %v1353, %v1352
    %v1572 = vpack.c.b16 %v1355, %v1354
    %v1573 = vpack.c.b16 %v1357, %v1356
    %v1574 = vpack.c.b16 %v1359, %v1358
    %v1575 = vpack.c.b16 %v1361, %v1360
    %v1576 = vpack.c.b16 %v1363, %v1362
    %v1577 = vpack.c.b16 %v1365, %v1364
    %v1578 = vpack.c.b16 %v1367, %v1366
    %v1579 = vpack.c.b16 %v1369, %v1368
    %v1580 = vpack.c.b16 %v1371, %v1370
    %v1581 = vpack.c.b16 %v1373, %v1372
    %v1582 = vpack.c.b16 %v1375, %v1374
    %v1583 = vpack.c.b16 %v1377, %v1376
    %v1584 = vpack.c.b16 %v1379, %v1378
    %v1585 = vpack.c.b16 %v1381, %v1380
    %v1586 = vpack.c.b16 %v1383, %v1382
    %v1587 = vpack.c.b16 %v1385, %v1384
    %v1588 = vpack.c.b16 %v1387, %v1386
    %v1589 = vpack.c.b16 %v1389, %v1388
    %v1590 = vpack.c.b16 %v1391, %v1390
    %v1591 = vpack.c.b16 %v1393, %v1392
    %v1592 = vpack.c.b16 %v1395, %v1394
    %v1593 = vpack.c.b16 %v1397, %v1396
    %vm1790 = vcmask 523264
    %v1792 = vsel %vm1790, %v589, 0
    %1794 = vmatprep.subr.bf16.mxu0 0
    %1795 = vmatpush1.bf16.msra.mxu0 %v1398
    %1796 = vmatprep.subr.bf16.mxu0 0
    %1797 = vmatpush1.bf16.msra.mxu0 %v1399
    %1798 = vmatprep.subr.bf16.mxu0 0
    %1799 = vmatpush1.bf16.msra.mxu0 %v1400
    %1800 = vmatprep.subr.bf16.mxu0 0
    %1801 = vmatpush1.bf16.msra.mxu0 %v1401
    %1802 = vmatprep.subr.bf16.mxu0 0
    %1803 = vmatpush1.bf16.msra.mxu0 %v1402
    %1804 = vmatprep.subr.bf16.mxu0 0
    %1805 = vmatpush1.bf16.msra.mxu0 %v1403
    %1806 = vmatprep.subr.bf16.mxu0 0
    %1807 = vmatpush1.bf16.msra.mxu0 %v1404
    %1808 = vmatprep.subr.bf16.mxu0 0
    %1809 = vmatpush1.bf16.msra.mxu0 %v1405
    %1810 = vmatprep.subr.bf16.mxu0 0
    %1811 = vmatpush1.bf16.msra.mxu0 %v1406
    %1812 = vmatprep.subr.bf16.mxu0 0
    %1813 = vmatpush1.bf16.msra.mxu0 %v1407
    %1814 = vmatprep.subr.bf16.mxu0 0
    %1815 = vmatpush1.bf16.msra.mxu0 %v1408
    %1816 = vmatprep.subr.bf16.mxu0 0
    %1817 = vmatpush1.bf16.msra.mxu0 %v1409
    %1818 = vmatprep.subr.bf16.mxu0 0
    %1819 = vmatpush1.bf16.msra.mxu0 %v1410
    %1820 = vmatprep.subr.bf16.mxu0 0
    %1821 = vmatpush1.bf16.msra.mxu0 %v1411
    %1822 = vmatprep.subr.bf16.mxu0 0
    %1823 = vmatpush1.bf16.msra.mxu0 %v1412
    %1824 = vmatprep.subr.bf16.mxu0 0
    %1825 = vmatpush1.bf16.msra.mxu0 %v1413
    %1826 = vmatprep.mubr.bf16.mxu0 %v466
    %1827 = vmatmul.mubr.bf16.gmra.mrb[0].mxu0 %v452
    %v1828 = vpop.f32.mrb[0].mxu0
    %v1829 = vadd.f32 %v423, %v1828
    %v1830 = vpop.f32.mrb[0].mxu0
    %v1831 = vpop.f32.mrb[0].mxu0
    %v1832 = vpop.f32.mrb[0].mxu0
    %1833 = vdwg.mxu0
    %1834 = vmatprep.subr.bf16.mxu0 0
    %1835 = vmatpush1.bf16.msra.mxu0 %v1414
    %1836 = vmatprep.subr.bf16.mxu0 0
    %1837 = vmatpush1.bf16.msra.mxu0 %v1415
    %1838 = vmatprep.subr.bf16.mxu0 0
    %1839 = vmatpush1.bf16.msra.mxu0 %v1416
    %1840 = vmatprep.subr.bf16.mxu0 0
    %1841 = vmatpush1.bf16.msra.mxu0 %v1417
    %1842 = vmatprep.subr.bf16.mxu0 0
    %1843 = vmatpush1.bf16.msra.mxu0 %v1418
    %1844 = vmatprep.subr.bf16.mxu0 0
    %1845 = vmatpush1.bf16.msra.mxu0 %v1419
    %1846 = vmatprep.subr.bf16.mxu0 0
    %1847 = vmatpush1.bf16.msra.mxu0 %v1420
    %1848 = vmatprep.subr.bf16.mxu0 0
    %1849 = vmatpush1.bf16.msra.mxu0 %v1421
    %1850 = vmatprep.subr.bf16.mxu0 0
    %1851 = vmatpush1.bf16.msra.mxu0 %v1422
    %1852 = vmatprep.subr.bf16.mxu0 0
    %1853 = vmatpush1.bf16.msra.mxu0 %v1423
    %1854 = vmatprep.subr.bf16.mxu0 0
    %1855 = vmatpush1.bf16.msra.mxu0 %v1424
    %1856 = vmatprep.subr.bf16.mxu0 0
    %1857 = vmatpush1.bf16.msra.mxu0 %v1425
    %1858 = vmatprep.subr.bf16.mxu0 0
    %1859 = vmatpush1.bf16.msra.mxu0 %v1426
    %1860 = vmatprep.subr.bf16.mxu0 0
    %1861 = vmatpush1.bf16.msra.mxu0 %v1427
    %1862 = vmatprep.subr.bf16.mxu0 0
    %1863 = vmatpush1.bf16.msra.mxu0 %v1428
    %1864 = vmatprep.subr.bf16.mxu0 0
    %1865 = vmatpush1.bf16.msra.mxu0 %v1429
    %1866 = vmatprep.mubr.bf16.mxu0 %v476
    %1867 = vmatmul.mubr.bf16.gmra.mrb[0].mxu0 %v474
    %v1868 = vpop.f32.mrb[0].mxu0
    %v1869 = vadd.f32 %v1829, %v1868
    %v1870 = vpop.f32.mrb[0].mxu0
    %v1871 = vpop.f32.mrb[0].mxu0
    %v1872 = vpop.f32.mrb[0].mxu0
    %1873 = vdwg.mxu0
    %1874 = vmatprep.subr.bf16.mxu0 0
    %1875 = vmatpush1.bf16.msra.mxu0 %v1430
    %1876 = vmatprep.subr.bf16.mxu0 0
    %1877 = vmatpush1.bf16.msra.mxu0 %v1431
    %1878 = vmatprep.subr.bf16.mxu0 0
    %1879 = vmatpush1.bf16.msra.mxu0 %v1432
    %1880 = vmatprep.subr.bf16.mxu0 0
    %1881 = vmatpush1.bf16.msra.mxu0 %v1433
    %1882 = vmatprep.subr.bf16.mxu0 0
    %1883 = vmatpush1.bf16.msra.mxu0 %v1434
    %1884 = vmatprep.subr.bf16.mxu0 0
    %1885 = vmatpush1.bf16.msra.mxu0 %v1435
    %1886 = vmatprep.subr.bf16.mxu0 0
    %1887 = vmatpush1.bf16.msra.mxu0 %v1436
    %1888 = vmatprep.subr.bf16.mxu0 0
    %1889 = vmatpush1.bf16.msra.mxu0 %v1437
    %1890 = vmatprep.subr.bf16.mxu0 0
    %1891 = vmatpush1.bf16.msra.mxu0 %v1438
    %1892 = vmatprep.subr.bf16.mxu0 0
    %1893 = vmatpush1.bf16.msra.mxu0 %v1439
    %1894 = vmatprep.subr.bf16.mxu0 0
    %1895 = vmatpush1.bf16.msra.mxu0 %v1440
    %1896 = vmatprep.subr.bf16.mxu0 0
    %1897 = vmatpush1.bf16.msra.mxu0 %v1441
    %1898 = vmatprep.subr.bf16.mxu0 0
    %1899 = vmatpush1.bf16.msra.mxu0 %v1442
    %1900 = vmatprep.subr.bf16.mxu0 0
    %1901 = vmatpush1.bf16.msra.mxu0 %v1443
    %1902 = vmatprep.subr.bf16.mxu0 0
    %1903 = vmatpush1.bf16.msra.mxu0 %v1444
    %1904 = vmatprep.subr.bf16.mxu0 0
    %1905 = vmatpush1.bf16.msra.mxu0 %v1445
    %1906 = vmatprep.mubr.bf16.mxu0 %v473
    %1907 = vmatmul.mubr.bf16.gmra.mrb[0].mxu0 %v459
    %v1908 = vpop.f32.mrb[0].mxu0
    %v1909 = vadd.f32 %v1869, %v1908
    %v1910 = vpop.f32.mrb[0].mxu0
    %v1911 = vpop.f32.mrb[0].mxu0
    %v1912 = vpop.f32.mrb[0].mxu0
    %1913 = vdwg.mxu0
    %1914 = vmatprep.subr.bf16.mxu0 0
    %1915 = vmatpush1.bf16.msra.mxu0 %v1446
    %1916 = vmatprep.subr.bf16.mxu0 0
    %1917 = vmatpush1.bf16.msra.mxu0 %v1447
    %1918 = vmatprep.subr.bf16.mxu0 0
    %1919 = vmatpush1.bf16.msra.mxu0 %v1448
    %1920 = vmatprep.subr.bf16.mxu0 0
    %1921 = vmatpush1.bf16.msra.mxu0 %v1449
    %1922 = vmatprep.subr.bf16.mxu0 0
    %1923 = vmatpush1.bf16.msra.mxu0 %v1450
    %1924 = vmatprep.subr.bf16.mxu0 0
    %1925 = vmatpush1.bf16.msra.mxu0 %v1451
    %1926 = vmatprep.subr.bf16.mxu0 0
    %1927 = vmatpush1.bf16.msra.mxu0 %v1452
    %1928 = vmatprep.subr.bf16.mxu0 0
    %1929 = vmatpush1.bf16.msra.mxu0 %v1453
    %1930 = vmatprep.subr.bf16.mxu0 0
    %1931 = vmatpush1.bf16.msra.mxu0 %v1454
    %1932 = vmatprep.subr.bf16.mxu0 0
    %1933 = vmatpush1.bf16.msra.mxu0 %v1455
    %1934 = vmatprep.subr.bf16.mxu0 0
    %1935 = vmatpush1.bf16.msra.mxu0 %v1456
    %1936 = vmatprep.subr.bf16.mxu0 0
    %1937 = vmatpush1.bf16.msra.mxu0 %v1457
    %1938 = vmatprep.subr.bf16.mxu0 0
    %1939 = vmatpush1.bf16.msra.mxu0 %v1458
    %1940 = vmatprep.subr.bf16.mxu0 0
    %1941 = vmatpush1.bf16.msra.mxu0 %v1459
    %1942 = vmatprep.subr.bf16.mxu0 0
    %1943 = vmatpush1.bf16.msra.mxu0 %v1460
    %1944 = vmatprep.subr.bf16.mxu0 0
    %1945 = vmatpush1.bf16.msra.mxu0 %v1461
    %1946 = vmatprep.mubr.bf16.mxu0 %v477
    %1947 = vmatmul.mubr.bf16.gmra.mrb[0].mxu0 %v475
    %v1948 = vpop.f32.mrb[0].mxu0
    %v1949 = vadd.f32 %v1909, %v1948
    %v1950 = vpop.f32.mrb[0].mxu0
    %v1951 = vpop.f32.mrb[0].mxu0
    %v1952 = vpop.f32.mrb[0].mxu0
    %1953 = vdwg.mxu0
    %1954 = vmatprep.subr.bf16.mxu0 0
    %1955 = vmatpush1.bf16.msra.mxu0 %v1462
    %1956 = vmatprep.subr.bf16.mxu0 0
    %1957 = vmatpush1.bf16.msra.mxu0 %v1463
    %1958 = vmatprep.subr.bf16.mxu0 0
    %1959 = vmatpush1.bf16.msra.mxu0 %v1464
    %1960 = vmatprep.subr.bf16.mxu0 0
    %1961 = vmatpush1.bf16.msra.mxu0 %v1465
    %1962 = vmatprep.subr.bf16.mxu0 0
    %1963 = vmatpush1.bf16.msra.mxu0 %v1466
    %1964 = vmatprep.subr.bf16.mxu0 0
    %1965 = vmatpush1.bf16.msra.mxu0 %v1467
    %1966 = vmatprep.subr.bf16.mxu0 0
    %1967 = vmatpush1.bf16.msra.mxu0 %v1468
    %1968 = vmatprep.subr.bf16.mxu0 0
    %1969 = vmatpush1.bf16.msra.mxu0 %v1469
    %1970 = vmatprep.subr.bf16.mxu0 0
    %1971 = vmatpush1.bf16.msra.mxu0 %v1470
    %1972 = vmatprep.subr.bf16.mxu0 0
    %1973 = vmatpush1.bf16.msra.mxu0 %v1471
    %1974 = vmatprep.subr.bf16.mxu0 0
    %1975 = vmatpush1.bf16.msra.mxu0 %v1472
    %1976 = vmatprep.subr.bf16.mxu0 0
    %1977 = vmatpush1.bf16.msra.mxu0 %v1473
    %1978 = vmatprep.subr.bf16.mxu0 0
    %1979 = vmatpush1.bf16.msra.mxu0 %v1474
    %1980 = vmatprep.subr.bf16.mxu0 0
    %1981 = vmatpush1.bf16.msra.mxu0 %v1475
    %1982 = vmatprep.subr.bf16.mxu0 0
    %1983 = vmatpush1.bf16.msra.mxu0 %v1476
    %1984 = vmatprep.subr.bf16.mxu0 0
    %1985 = vmatpush1.bf16.msra.mxu0 %v1477
    %1986 = vmatprep.mubr.bf16.mxu0 %v515
    %1987 = vmatmul.mubr.bf16.gmra.mrb[0].mxu0 %v501
    %v1988 = vpop.f32.mrb[0].mxu0
    %v1989 = vadd.f32 %v1949, %v1988
    %v1990 = vpop.f32.mrb[0].mxu0
    %v1991 = vpop.f32.mrb[0].mxu0
    %v1992 = vpop.f32.mrb[0].mxu0
    %1993 = vdwg.mxu0
    %1994 = vmatprep.subr.bf16.mxu0 0
    %1995 = vmatpush1.bf16.msra.mxu0 %v1478
    %1996 = vmatprep.subr.bf16.mxu0 0
    %1997 = vmatpush1.bf16.msra.mxu0 %v1479
    %1998 = vmatprep.subr.bf16.mxu0 0
    %1999 = vmatpush1.bf16.msra.mxu0 %v1480
    %2000 = vmatprep.subr.bf16.mxu0 0
    %2001 = vmatpush1.bf16.msra.mxu0 %v1481
    %2002 = vmatprep.subr.bf16.mxu0 0
    %2003 = vmatpush1.bf16.msra.mxu0 %v1482
    %2004 = vmatprep.subr.bf16.mxu0 0
    %2005 = vmatpush1.bf16.msra.mxu0 %v1483
    %2006 = vmatprep.subr.bf16.mxu0 0
    %2007 = vmatpush1.bf16.msra.mxu0 %v1484
    %2008 = vmatprep.subr.bf16.mxu0 0
    %2009 = vmatpush1.bf16.msra.mxu0 %v1485
    %2010 = vmatprep.subr.bf16.mxu0 0
    %2011 = vmatpush1.bf16.msra.mxu0 %v1486
    %2012 = vmatprep.subr.bf16.mxu0 0
    %2013 = vmatpush1.bf16.msra.mxu0 %v1487
    %2014 = vmatprep.subr.bf16.mxu0 0
    %2015 = vmatpush1.bf16.msra.mxu0 %v1488
    %2016 = vmatprep.subr.bf16.mxu0 0
    %2017 = vmatpush1.bf16.msra.mxu0 %v1489
    %2018 = vmatprep.subr.bf16.mxu0 0
    %2019 = vmatpush1.bf16.msra.mxu0 %v1490
    %2020 = vmatprep.subr.bf16.mxu0 0
    %2021 = vmatpush1.bf16.msra.mxu0 %v1491
    %2022 = vmatprep.subr.bf16.mxu0 0
    %2023 = vmatpush1.bf16.msra.mxu0 %v1492
    %2024 = vmatprep.subr.bf16.mxu0 0
    %2025 = vmatpush1.bf16.msra.mxu0 %v1493
    %2026 = vmatprep.mubr.bf16.mxu0 %v525
    %2027 = vmatmul.mubr.bf16.gmra.mrb[0].mxu0 %v523
    %v2028 = vpop.f32.mrb[0].mxu0
    %v2029 = vadd.f32 %v1989, %v2028
    %v2030 = vpop.f32.mrb[0].mxu0
    %v2031 = vpop.f32.mrb[0].mxu0
    %v2032 = vpop.f32.mrb[0].mxu0
    %2033 = vdwg.mxu0
    %2034 = vmatprep.subr.bf16.mxu0 0
    %2035 = vmatpush1.bf16.msra.mxu0 %v1494
    %2036 = vmatprep.subr.bf16.mxu0 0
    %2037 = vmatpush1.bf16.msra.mxu0 %v1495
    %2038 = vmatprep.subr.bf16.mxu0 0
    %2039 = vmatpush1.bf16.msra.mxu0 %v1496
    %2040 = vmatprep.subr.bf16.mxu0 0
    %2041 = vmatpush1.bf16.msra.mxu0 %v1497
    %2042 = vmatprep.subr.bf16.mxu0 0
    %2043 = vmatpush1.bf16.msra.mxu0 %v1498
    %2044 = vmatprep.subr.bf16.mxu0 0
    %2045 = vmatpush1.bf16.msra.mxu0 %v1499
    %2046 = vmatprep.subr.bf16.mxu0 0
    %2047 = vmatpush1.bf16.msra.mxu0 %v1500
    %2048 = vmatprep.subr.bf16.mxu0 0
    %2049 = vmatpush1.bf16.msra.mxu0 %v1501
    %2050 = vmatprep.subr.bf16.mxu0 0
    %2051 = vmatpush1.bf16.msra.mxu0 %v1502
    %2052 = vmatprep.subr.bf16.mxu0 0
    %2053 = vmatpush1.bf16.msra.mxu0 %v1503
    %2054 = vmatprep.subr.bf16.mxu0 0
    %2055 = vmatpush1.bf16.msra.mxu0 %v1504
    %2056 = vmatprep.subr.bf16.mxu0 0
    %2057 = vmatpush1.bf16.msra.mxu0 %v1505
    %2058 = vmatprep.subr.bf16.mxu0 0
    %2059 = vmatpush1.bf16.msra.mxu0 %v1506
    %2060 = vmatprep.subr.bf16.mxu0 0
    %2061 = vmatpush1.bf16.msra.mxu0 %v1507
    %2062 = vmatprep.subr.bf16.mxu0 0
    %2063 = vmatpush1.bf16.msra.mxu0 %v1508
    %2064 = vmatprep.subr.bf16.mxu0 0
    %2065 = vmatpush1.bf16.msra.mxu0 %v1509
    %2066 = vmatprep.mubr.bf16.mxu0 %v522
    %2067 = vmatmul.mubr.bf16.gmra.mrb[0].mxu0 %v508
    %v2068 = vpop.f32.mrb[0].mxu0
    %v2069 = vadd.f32 %v2029, %v2068
    %v2070 = vpop.f32.mrb[0].mxu0
    %v2071 = vpop.f32.mrb[0].mxu0
    %v2072 = vpop.f32.mrb[0].mxu0
    %2073 = vdwg.mxu0
    %2074 = vmatprep.subr.bf16.mxu0 0
    %2075 = vmatpush1.bf16.msra.mxu0 %v1510
    %2076 = vmatprep.subr.bf16.mxu0 0
    %2077 = vmatpush1.bf16.msra.mxu0 %v1511
    %2078 = vmatprep.subr.bf16.mxu0 0
    %2079 = vmatpush1.bf16.msra.mxu0 %v1512
    %2080 = vmatprep.subr.bf16.mxu0 0
    %2081 = vmatpush1.bf16.msra.mxu0 %v1513
    %2082 = vmatprep.subr.bf16.mxu0 0
    %2083 = vmatpush1.bf16.msra.mxu0 %v1514
    %2084 = vmatprep.subr.bf16.mxu0 0
    %2085 = vmatpush1.bf16.msra.mxu0 %v1515
    %2086 = vmatprep.subr.bf16.mxu0 0
    %2087 = vmatpush1.bf16.msra.mxu0 %v1516
    %2088 = vmatprep.subr.bf16.mxu0 0
    %2089 = vmatpush1.bf16.msra.mxu0 %v1517
    %2090 = vmatprep.subr.bf16.mxu0 0
    %2091 = vmatpush1.bf16.msra.mxu0 %v1518
    %2092 = vmatprep.subr.bf16.mxu0 0
    %2093 = vmatpush1.bf16.msra.mxu0 %v1519
    %2094 = vmatprep.subr.bf16.mxu0 0
    %2095 = vmatpush1.bf16.msra.mxu0 %v1520
    %2096 = vmatprep.subr.bf16.mxu0 0
    %2097 = vmatpush1.bf16.msra.mxu0 %v1521
    %2098 = vmatprep.subr.bf16.mxu0 0
    %2099 = vmatpush1.bf16.msra.mxu0 %v1522
    %2100 = vmatprep.subr.bf16.mxu0 0
    %2101 = vmatpush1.bf16.msra.mxu0 %v1523
    %2102 = vmatprep.subr.bf16.mxu0 0
    %2103 = vmatpush1.bf16.msra.mxu0 %v1524
    %2104 = vmatprep.subr.bf16.mxu0 0
    %2105 = vmatpush1.bf16.msra.mxu0 %v1525
    %2106 = vmatprep.mubr.bf16.mxu0 %v526
    %2107 = vmatmul.mubr.bf16.gmra.mrb[0].mxu0 %v524
    %v2108 = vpop.f32.mrb[0].mxu0
    %v2109 = vadd.f32 %v2069, %v2108
    %v2110 = vpop.f32.mrb[0].mxu0
    %v2111 = vpop.f32.mrb[0].mxu0
    %v2112 = vpop.f32.mrb[0].mxu0
    %2113 = vdwg.mxu0
    %2114 = vmatprep.subr.bf16.mxu0 0
    %2115 = vmatpush1.bf16.msra.mxu0 %v1526
    %2116 = vmatprep.subr.bf16.mxu0 0
    %2117 = vmatpush1.bf16.msra.mxu0 %v1527
    %2118 = vmatprep.subr.bf16.mxu0 0
    %2119 = vmatpush1.bf16.msra.mxu0 %v1528
    %2120 = vmatprep.subr.bf16.mxu0 0
    %2121 = vmatpush1.bf16.msra.mxu0 %v1529
    %2122 = vmatprep.subr.bf16.mxu0 0
    %2123 = vmatpush1.bf16.msra.mxu0 %v1530
    %2124 = vmatprep.subr.bf16.mxu0 0
    %2125 = vmatpush1.bf16.msra.mxu0 %v1531
    %2126 = vmatprep.subr.bf16.mxu0 0
    %2127 = vmatpush1.bf16.msra.mxu0 %v1532
    %2128 = vmatprep.subr.bf16.mxu0 0
    %2129 = vmatpush1.bf16.msra.mxu0 %v1533
    %2130 = vmatprep.subr.bf16.mxu0 0
    %2131 = vmatpush1.bf16.msra.mxu0 %v1534
    %2132 = vmatprep.subr.bf16.mxu0 0
    %2133 = vmatpush1.bf16.msra.mxu0 %v1535
    %2134 = vmatprep.subr.bf16.mxu0 0
    %2135 = vmatpush1.bf16.msra.mxu0 %v1536
    %2136 = vmatprep.subr.bf16.mxu0 0
    %2137 = vmatpush1.bf16.msra.mxu0 %v1537
    %2138 = vmatprep.subr.bf16.mxu0 0
    %2139 = vmatpush1.bf16.msra.mxu0 %v1538
    %2140 = vmatprep.subr.bf16.mxu0 0
    %2141 = vmatpush1.bf16.msra.mxu0 %v1539
    %2142 = vmatprep.subr.bf16.mxu0 0
    %2143 = vmatpush1.bf16.msra.mxu0 %v1540
    %2144 = vmatprep.subr.bf16.mxu0 0
    %2145 = vmatpush1.bf16.msra.mxu0 %v1541
    %2146 = vmatprep.mubr.bf16.mxu0 %v564
    %2147 = vmatmul.mubr.bf16.gmra.mrb[0].mxu0 %v550
    %v2148 = vpop.f32.mrb[0].mxu0
    %v2149 = vadd.f32 %v2109, %v2148
    %v2150 = vpop.f32.mrb[0].mxu0
    %v2151 = vpop.f32.mrb[0].mxu0
    %v2152 = vpop.f32.mrb[0].mxu0
    %2153 = vdwg.mxu0
    %2154 = vmatprep.subr.bf16.mxu0 0
    %2155 = vmatpush1.bf16.msra.mxu0 %v1542
    %2156 = vmatprep.subr.bf16.mxu0 0
    %2157 = vmatpush1.bf16.msra.mxu0 %v1543
    %2158 = vmatprep.subr.bf16.mxu0 0
    %2159 = vmatpush1.bf16.msra.mxu0 %v1544
    %2160 = vmatprep.subr.bf16.mxu0 0
    %2161 = vmatpush1.bf16.msra.mxu0 %v1545
    %2162 = vmatprep.subr.bf16.mxu0 0
    %2163 = vmatpush1.bf16.msra.mxu0 %v1546
    %2164 = vmatprep.subr.bf16.mxu0 0
    %2165 = vmatpush1.bf16.msra.mxu0 %v1547
    %2166 = vmatprep.subr.bf16.mxu0 0
    %2167 = vmatpush1.bf16.msra.mxu0 %v1548
    %2168 = vmatprep.subr.bf16.mxu0 0
    %2169 = vmatpush1.bf16.msra.mxu0 %v1549
    %2170 = vmatprep.subr.bf16.mxu0 0
    %2171 = vmatpush1.bf16.msra.mxu0 %v1550
    %2172 = vmatprep.subr.bf16.mxu0 0
    %2173 = vmatpush1.bf16.msra.mxu0 %v1551
    %2174 = vmatprep.subr.bf16.mxu0 0
    %2175 = vmatpush1.bf16.msra.mxu0 %v1552
    %2176 = vmatprep.subr.bf16.mxu0 0
    %2177 = vmatpush1.bf16.msra.mxu0 %v1553
    %2178 = vmatprep.subr.bf16.mxu0 0
    %2179 = vmatpush1.bf16.msra.mxu0 %v1554
    %2180 = vmatprep.subr.bf16.mxu0 0
    %2181 = vmatpush1.bf16.msra.mxu0 %v1555
    %2182 = vmatprep.subr.bf16.mxu0 0
    %2183 = vmatpush1.bf16.msra.mxu0 %v1556
    %2184 = vmatprep.subr.bf16.mxu0 0
    %2185 = vmatpush1.bf16.msra.mxu0 %v1557
    %2186 = vmatprep.mubr.bf16.mxu0 %v574
    %2187 = vmatmul.mubr.bf16.gmra.mrb[0].mxu0 %v572
    %v2188 = vpop.f32.mrb[0].mxu0
    %v2189 = vadd.f32 %v2149, %v2188
    %v2190 = vpop.f32.mrb[0].mxu0
    %v2191 = vpop.f32.mrb[0].mxu0
    %v2192 = vpop.f32.mrb[0].mxu0
    %2193 = vdwg.mxu0
    %2194 = vmatprep.subr.bf16.mxu0 0
    %2195 = vmatpush1.bf16.msra.mxu0 %v1558
    %2196 = vmatprep.subr.bf16.mxu0 0
    %2197 = vmatpush1.bf16.msra.mxu0 %v1559
    %2198 = vmatprep.subr.bf16.mxu0 0
    %2199 = vmatpush1.bf16.msra.mxu0 %v1560
    %2200 = vmatprep.subr.bf16.mxu0 0
    %2201 = vmatpush1.bf16.msra.mxu0 %v1561
    %2202 = vmatprep.subr.bf16.mxu0 0
    %2203 = vmatpush1.bf16.msra.mxu0 %v1562
    %2204 = vmatprep.subr.bf16.mxu0 0
    %2205 = vmatpush1.bf16.msra.mxu0 %v1563
    %2206 = vmatprep.subr.bf16.mxu0 0
    %2207 = vmatpush1.bf16.msra.mxu0 %v1564
    %2208 = vmatprep.subr.bf16.mxu0 0
    %2209 = vmatpush1.bf16.msra.mxu0 %v1565
    %2210 = vmatprep.subr.bf16.mxu0 0
    %2211 = vmatpush1.bf16.msra.mxu0 %v1566
    %2212 = vmatprep.subr.bf16.mxu0 0
    %2213 = vmatpush1.bf16.msra.mxu0 %v1567
    %2214 = vmatprep.subr.bf16.mxu0 0
    %2215 = vmatpush1.bf16.msra.mxu0 %v1568
    %2216 = vmatprep.subr.bf16.mxu0 0
    %2217 = vmatpush1.bf16.msra.mxu0 %v1569
    %2218 = vmatprep.subr.bf16.mxu0 0
    %2219 = vmatpush1.bf16.msra.mxu0 %v1570
    %2220 = vmatprep.subr.bf16.mxu0 0
    %2221 = vmatpush1.bf16.msra.mxu0 %v1571
    %2222 = vmatprep.subr.bf16.mxu0 0
    %2223 = vmatpush1.bf16.msra.mxu0 %v1572
    %2224 = vmatprep.subr.bf16.mxu0 0
    %2225 = vmatpush1.bf16.msra.mxu0 %v1573
    %2226 = vmatprep.mubr.bf16.mxu0 %v571
    %2227 = vmatmul.mubr.bf16.gmra.mrb[0].mxu0 %v557
    %v2228 = vpop.f32.mrb[0].mxu0
    %v2229 = vadd.f32 %v2189, %v2228
    %v2230 = vpop.f32.mrb[0].mxu0
    %v2231 = vpop.f32.mrb[0].mxu0
    %v2232 = vpop.f32.mrb[0].mxu0
    %2233 = vdwg.mxu0
    %2234 = vmatprep.subr.bf16.mxu0 0
    %2235 = vmatpush1.bf16.msra.mxu0 %v1574
    %2236 = vmatprep.subr.bf16.mxu0 0
    %2237 = vmatpush1.bf16.msra.mxu0 %v1575
    %2238 = vmatprep.subr.bf16.mxu0 0
    %2239 = vmatpush1.bf16.msra.mxu0 %v1576
    %2240 = vmatprep.subr.bf16.mxu0 0
    %2241 = vmatpush1.bf16.msra.mxu0 %v1577
    %2242 = vmatprep.subr.bf16.mxu0 0
    %2243 = vmatpush1.bf16.msra.mxu0 %v1578
    %2244 = vmatprep.subr.bf16.mxu0 0
    %2245 = vmatpush1.bf16.msra.mxu0 %v1579
    %2246 = vmatprep.subr.bf16.mxu0 0
    %2247 = vmatpush1.bf16.msra.mxu0 %v1580
    %2248 = vmatprep.subr.bf16.mxu0 0
    %2249 = vmatpush1.bf16.msra.mxu0 %v1581
    %2250 = vmatprep.subr.bf16.mxu0 0
    %2251 = vmatpush1.bf16.msra.mxu0 %v1582
    %2252 = vmatprep.subr.bf16.mxu0 0
    %2253 = vmatpush1.bf16.msra.mxu0 %v1583
    %2254 = vmatprep.subr.bf16.mxu0 0
    %2255 = vmatpush1.bf16.msra.mxu0 %v1584
    %2256 = vmatprep.subr.bf16.mxu0 0
    %2257 = vmatpush1.bf16.msra.mxu0 %v1585
    %2258 = vmatprep.subr.bf16.mxu0 0
    %2259 = vmatpush1.bf16.msra.mxu0 %v1586
    %2260 = vmatprep.subr.bf16.mxu0 0
    %2261 = vmatpush1.bf16.msra.mxu0 %v1587
    %2262 = vmatprep.subr.bf16.mxu0 0
    %2263 = vmatpush1.bf16.msra.mxu0 %v1588
    %2264 = vmatprep.subr.bf16.mxu0 0
    %2265 = vmatpush1.bf16.msra.mxu0 %v1589
    %2266 = vmatprep.mubr.bf16.mxu0 %v575
    %2267 = vmatmul.mubr.bf16.gmra.mrb[0].mxu0 %v573
    %v2268 = vpop.f32.mrb[0].mxu0
    %v2269 = vadd.f32 %v2229, %v2268
    %v2270 = vpop.f32.mrb[0].mxu0
    %v2271 = vpop.f32.mrb[0].mxu0
    %v2272 = vpop.f32.mrb[0].mxu0
    %2273 = vdwg.mxu0
    %2274 = vmatprep.subr.bf16.mxu0 0
    %2275 = vmatpush1.bf16.msra.mxu0 %v1590
    %2276 = vmatprep.subr.bf16.mxu0 0
    %2277 = vmatpush1.bf16.msra.mxu0 %v1591
    %2278 = vmatprep.subr.bf16.mxu0 0
    %2279 = vmatpush1.bf16.msra.mxu0 %v1592
    %2280 = vmatprep.subr.bf16.mxu0 0
    %2281 = vmatpush1.bf16.msra.mxu0 %v1593
    %2282 = vmatprep.subr.bf16.mxu0 0
    %2283 = vmatpush1.bf16.msra.mxu0 0
    %2284 = vmatprep.subr.bf16.mxu0 0
    %2285 = vmatpush1.bf16.msra.mxu0 0
    %2286 = vmatprep.subr.bf16.mxu0 0
    %2287 = vmatpush1.bf16.msra.mxu0 0
    %2288 = vmatprep.subr.bf16.mxu0 0
    %2289 = vmatpush1.bf16.msra.mxu0 0
    %2290 = vmatprep.subr.bf16.mxu0 0
    %2291 = vmatpush1.bf16.msra.mxu0 0
    %2292 = vmatprep.subr.bf16.mxu0 0
    %2293 = vmatpush1.bf16.msra.mxu0 0
    %2294 = vmatprep.subr.bf16.mxu0 0
    %2295 = vmatpush1.bf16.msra.mxu0 0
    %2296 = vmatprep.subr.bf16.mxu0 0
    %2297 = vmatpush1.bf16.msra.mxu0 0
    %2298 = vmatprep.subr.bf16.mxu0 0
    %2299 = vmatpush1.bf16.msra.mxu0 0
    %2300 = vmatprep.subr.bf16.mxu0 0
    %2301 = vmatpush1.bf16.msra.mxu0 0
    %2302 = vmatprep.subr.bf16.mxu0 0
    %2303 = vmatpush1.bf16.msra.mxu0 0
    %2304 = vmatprep.subr.bf16.mxu0 0
    %2305 = vmatpush1.bf16.msra.mxu0 0
    %2306 = vmatprep.mubr.bf16.mxu0 0
    %2307 = vmatmul.mubr.bf16.gmra.mrb[0].mxu0 %v1792
    %v2308 = vpop.f32.mrb[0].mxu0
    %v2309 = vadd.f32 %v2269, %v2308
    %v2310 = vpop.f32.mrb[0].mxu0
    %v2311 = vpop.f32.mrb[0].mxu0
    %v2312 = vpop.f32.mrb[0].mxu0
    %2313 = vdwg.mxu0
    %v2314 = vmax.f32 %v2309, 0.0
    %v2315 = vpack.c.bf16 %v2314, %v2314
    %v2316 = vld [vmem:[%s3] sm:$0xf]
    %v2317 = vld [vmem:[%s3 + $0x4] sm:$0xf]
    %v2318 = vld [vmem:[%s3 + $0x8] sm:$0xf]
    %v2319 = vld [vmem:[%s3 + $0xc] sm:$0xf]
    %v2320 = vld [vmem:[%s3 + $0x10] sm:$0xf]
    %v2321 = vld [vmem:[%s3 + $0x14] sm:$0xf]
    %v2322 = vld [vmem:[%s3 + $0x18] sm:$0xf]
    %v2323 = vld [vmem:[%s3 + $0x1c] sm:$0xf]
    %v2324 = vld [vmem:[%s3 + $0x20] sm:$0xf]
    %v2325 = vld [vmem:[%s3 + $0x24] sm:$0xf]
    %v2326 = vld [vmem:[%s3 + $0x28] sm:$0xf]
    %v2327 = vld [vmem:[%s3 + $0x2c] sm:$0xf]
    %v2328 = vld [vmem:[%s3 + $0x30] sm:$0xf]
    %v2329 = vld [vmem:[%s3 + $0x34] sm:$0xf]
    %v2330 = vld [vmem:[%s3 + $0x38] sm:$0xf]
    %v2331 = vld [vmem:[%s3 + $0x3c] sm:$0xf]
    %v2332 = vld [vmem:[%s4] sm:$0x1]
    %v2334 = vlaneseq
    %v2335 = vshrl.u32 %v2334, 7
    %v2336 = vsub.s32 0, %v2335
    %v2337 = vrot.slane %v2332, %v2336
    %v2355 = vunpack.c.l.b16 %v2316
    %v2356 = vunpack.c.l.b16 %v2317
    %v2357 = vunpack.c.l.b16 %v2318
    %v2358 = vunpack.c.l.b16 %v2319
    %v2359 = vunpack.c.l.b16 %v2320
    %v2360 = vunpack.c.l.b16 %v2321
    %v2361 = vunpack.c.l.b16 %v2322
    %v2362 = vunpack.c.l.b16 %v2323
    %v2363 = vunpack.c.l.b16 %v2324
    %v2364 = vunpack.c.l.b16 %v2325
    %v2365 = vunpack.c.l.b16 %v2326
    %v2366 = vunpack.c.l.b16 %v2327
    %v2367 = vunpack.c.l.b16 %v2328
    %v2368 = vunpack.c.l.b16 %v2329
    %v2369 = vunpack.c.l.b16 %v2330
    %v2370 = vunpack.c.l.b16 %v2331
    %v2371 = vpack.c.b16 %v2356, %v2355
    %v2372 = vpack.c.b16 %v2358, %v2357
    %v2373 = vpack.c.b16 %v2360, %v2359
    %v2374 = vpack.c.b16 %v2362, %v2361
    %v2375 = vpack.c.b16 %v2364, %v2363
    %v2376 = vpack.c.b16 %v2366, %v2365
    %v2377 = vpack.c.b16 %v2368, %v2367
    %v2378 = vpack.c.b16 %v2370, %v2369
    %2387 = vmatprep.subr.bf16.mxu0 0
    %2388 = vmatpush1.bf16.msra.mxu0 %v2371
    %2389 = vmatprep.subr.bf16.mxu0 0
    %2390 = vmatpush1.bf16.msra.mxu0 %v2372
    %2391 = vmatprep.subr.bf16.mxu0 0
    %2392 = vmatpush1.bf16.msra.mxu0 %v2373
    %2393 = vmatprep.subr.bf16.mxu0 0
    %2394 = vmatpush1.bf16.msra.mxu0 %v2374
    %2395 = vmatprep.subr.bf16.mxu0 0
    %2396 = vmatpush1.bf16.msra.mxu0 %v2375
    %2397 = vmatprep.subr.bf16.mxu0 0
    %2398 = vmatpush1.bf16.msra.mxu0 %v2376
    %2399 = vmatprep.subr.bf16.mxu0 0
    %2400 = vmatpush1.bf16.msra.mxu0 %v2377
    %2401 = vmatprep.subr.bf16.mxu0 0
    %2402 = vmatpush1.bf16.msra.mxu0 %v2378
    %2403 = vmatprep.subr.bf16.mxu0 0
    %2404 = vmatpush1.bf16.msra.mxu0 0
    %2405 = vmatprep.subr.bf16.mxu0 0
    %2406 = vmatpush1.bf16.msra.mxu0 0
    %2407 = vmatprep.subr.bf16.mxu0 0
    %2408 = vmatpush1.bf16.msra.mxu0 0
    %2409 = vmatprep.subr.bf16.mxu0 0
    %2410 = vmatpush1.bf16.msra.mxu0 0
    %2411 = vmatprep.subr.bf16.mxu0 0
    %2412 = vmatpush1.bf16.msra.mxu0 0
    %2413 = vmatprep.subr.bf16.mxu0 0
    %2414 = vmatpush1.bf16.msra.mxu0 0
    %2415 = vmatprep.subr.bf16.mxu0 0
    %2416 = vmatpush1.bf16.msra.mxu0 0
    %2417 = vmatprep.subr.bf16.mxu0 0
    %2418 = vmatpush1.bf16.msra.mxu0 0
    %2419 = vmatprep.mubr.bf16.mxu0 0
    %2420 = vmatmul.mubr.bf16.gmra.mrb[0].mxu0 %v2315
    %v2421 = vpop.f32.mrb[0].mxu0
    %v2422 = vadd.f32 %v2337, %v2421
    %v2423 = vpop.f32.mrb[0].mxu0
    %v2424 = vpop.f32.mrb[0].mxu0
    %v2425 = vpop.f32.mrb[0].mxu0
    %2426 = vdwg.mxu0
    %2427 = vst [vmem:[#allocation2] sm:$0x3] %v2422
    // Predicated region
    $region22: #{cnn_forward.5} parent=1 // pred_check
      _
    $region23: #{cnn_forward.5} parent=1 // pred_check_branch
      %2429 = sbr.rel (0) target = $region25
    $region24: #{cnn_forward.5} parent=1 // pred_region
      %s2431 = ssub.s32 32, 32
      %2432 = vsyncadd [#allocation3], %s2431
      %s2434 = sshll.u32 [#allocation2], 4
      %s2435 = int_to_ptr.vmem [resolvable:$true] %s2434
      %2437 = dma.vmem_to_hbm [thread:$0]  %s2435, 32, %s5, [#allocation3]
    $region25: #{cnn_forward.5} parent=1 // pred_fallthru
      _
    // Predicated region
    $region26: #{cnn_forward.5} parent=1 // pred_check
      _
    $region27: #{cnn_forward.5} parent=1 // pred_check_branch
      %2439 = sbr.rel (0) target = $region29
    $region28: #{cnn_forward.5} parent=1 // pred_region
      %2440 = dma.done [#allocation3], 32
    $region29: #{cnn_forward.5} parent=1 // pred_fallthru
      _
    %2441 = vsyncpa [#allocation3], 1

</llo_original>
